<compile_context>
chip_gen: v7x
topology: tpu7x:2x2x1
jax: 0.10.0
libtpu: 0.0.40
codegen_flags: <defaults>
</compile_context>

<pallas_src>
import functools

import jax
import jax.numpy as jnp
import numpy as np
from jax.experimental import pallas as pl
from jax.experimental.pallas import tpu as pltpu

CP = 16          # conv1 channel padding (10 real channels) per width position
CO = 32          # conv2 channel padding (20 real channels) per width position
N1 = 16 * CP     # conv1 output lanes: framed width (16) x padded channels = 256
N2 = 8 * CO      # conv2 output lanes: pooled width (7 real + 1 junk) x 32 = 256


def _round_up(x, m):
    return (x + m - 1) // m * m


# ----------------------------------------------------------------------------
# Kernel 1: fused conv1(3x3) + maxpool2 + conv2(3x3) + maxpool2
# ----------------------------------------------------------------------------
def conv_stack_kernel(xg_ref, m1_ref, b1f_ref, m2_ref, b2f_ref, o_ref,
                      p1e_ref, p1o_ref):
    """Per batch tile of TB samples.

    xg_ref : (TB, 4, 24, 32)  mod-4 row split of the zero-padded 30x30 image:
                              xg[b, g, m, :] = Xpad[b, 4*(m-1)+g, :] (0 outside).
    m1_ref : (3, 2, 32, N1)   conv1 band matrices, indexed [kh, dw].
    m2_ref : (3, 2, N1, N2)   conv2 band matrices, indexed [kh, dw].
    b1f/b2f: (1, N1)/(1, N2)  biases tiled over width blocks (0 on padding).
    o_ref  : (TB, 8, N2)      pooled conv2 output; rows qh<=6 and lane blocks
                              qw<=6 / co<20 are real, the rest junk/zero.
    p1e/p1o: (TB, 16, N1)     VMEM scratch: even / odd framed rows of pooled1.
    """
    TB = xg_ref.shape[0]

    # Contiguous row slices of the mod-4-split padded image:
    #   A[g][b, r, :]  == Xpad[b, 4*r + g,       :]   (zeros out of range)
    #   Bv[g][b, r, :] == Xpad[b, 4*(r - 1) + g, :]   (row r = 0 reads zeros)
    A = [xg_ref[:, g, 1:17, :].reshape(TB * 16, 32) for g in range(4)]
    Bv = {g: xg_ref[:, g, 0:16, :].reshape(TB * 16, 32) for g in (2, 3)}

    def conv1_pool(lhs_of, out_ref, pad_row):
        # out_ref[b, r, jp*CP + c] = bias-added, 2x2-max-pooled conv1 output
        # for the framed rows this half owns; `pad_row` is forced to zero
        # (it is the spatial zero padding that conv2 reads).
        for dh in (0, 1):                    # pool-window row offset
            for dw in (0, 1):                # pool-window col offset
                acc = None
                for kh in (0, 1, 2):         # conv1 row tap
                    p = jnp.dot(lhs_of(dh, kh), m1_ref[kh, dw],
                                preferred_element_type=jnp.float32)
                    acc = p if acc is None else acc + p
                acc = acc.reshape(TB, 16, N1)
                if dh == 0 and dw == 0:
                    out_ref[...] = acc
                else:
                    out_ref[...] = jnp.maximum(out_ref[...], acc)
        row = jax.lax.broadcasted_iota(jnp.int32, (TB, 16, 1), 1)
        out_ref[...] = jnp.where(row == pad_row, 0.0,
                                 out_ref[...] + b1f_ref[...])

    # Odd framed rows: real pooled rows 0,2,...,12 ; row 7 = bottom zero pad.
    conv1_pool(lambda dh, kh: A[dh + kh], p1o_ref, pad_row=7)
    # Even framed rows: row 0 = top zero pad ; real pooled rows 1,3,...,13.
    conv1_pool(lambda dh, kh: (Bv[dh + kh + 2] if dh + kh <= 1
                               else A[dh + kh - 2]),
               p1e_ref, pad_row=0)

    # conv2 + maxpool2: contraction over the (framed width x channel) lanes.
    # Output row qh needs framed pooled1 rows 2*qh + t2 (t2 = dh+kh in 0..3):
    # even t2 -> p1e, odd t2 -> p1o, always a contiguous 8-row slice.
    def lhs2(t2):
        src = p1e_ref if t2 % 2 == 0 else p1o_ref
        a2 = t2 // 2
        return src[:, a2:a2 + 8, :].reshape(TB * 8, N1)

    L2 = [lhs2(t2) for t2 in range(4)]
    pooled2 = None
    for dh in (0, 1):
        for dw in (0, 1):
            acc = None
            for kh in (0, 1, 2):
                p = jnp.dot(L2[dh + kh], m2_ref[kh, dw],
                            preferred_element_type=jnp.float32)
                acc = p if acc is None else acc + p
            pooled2 = acc if pooled2 is None else jnp.maximum(pooled2, acc)
    pooled2 = pooled2 + b2f_ref[...]
    o_ref[...] = pooled2.reshape(TB, 8, N2).astype(o_ref.dtype)


def conv_stack(xg, m1, b1f, m2, b2f, tile_b=None):
    B = xg.shape[0]
    # >= 2 grid steps whenever B >= 2 (helps v7x's two TensorCores); small
    # tiles keep in-kernel live values / scratch tiny on every generation.
    TB = tile_b if tile_b is not None else max(1, min(4, B // 2))
    Bp = _round_up(B, TB)
    if Bp != B:
        xg = jnp.pad(xg, ((0, Bp - B), (0, 0), (0, 0), (0, 0)))
    return pl.pallas_call(
        conv_stack_kernel,
        out_shape=jax.ShapeDtypeStruct((Bp, 8, N2), jnp.float32),
        grid=(Bp // TB,),
        in_specs=[
            pl.BlockSpec((TB, 4, 24, 32), lambda r: (r, 0, 0, 0)),
            pl.BlockSpec((3, 2, 32, N1), lambda r: (0, 0, 0, 0)),
            pl.BlockSpec((1, N1), lambda r: (0, 0)),
            pl.BlockSpec((3, 2, N1, N2), lambda r: (0, 0, 0, 0)),
            pl.BlockSpec((1, N2), lambda r: (0, 0)),
        ],
        out_specs=pl.BlockSpec((TB, 8, N2), lambda r: (r, 0, 0)),
        scratch_shapes=[
            pltpu.VMEM((TB, 16, N1), jnp.float32),   # pooled1, even framed rows
            pltpu.VMEM((TB, 16, N1), jnp.float32),   # pooled1, odd framed rows
        ],
        compiler_params=pltpu.CompilerParams(
            dimension_semantics=("parallel",)),
    )(xg, m1, b1f, m2, b2f)


# ----------------------------------------------------------------------------
# Kernel 2: fc1 + ReLU + fc2 + log_softmax (compact K = 1024, lane-dense out)
# ----------------------------------------------------------------------------
def head_kernel(x_ref, w1_ref, b1_ref, w2_ref, b2_ref, o_ref):
    h = jnp.dot(x_ref[...], w1_ref[...], preferred_element_type=jnp.float32)
    h = jnp.maximum(h + b1_ref[...], 0.0)                 # activation = ReLU
    y = jnp.dot(h, w2_ref[...], preferred_element_type=jnp.float32)
    y = y + b2_ref[...]                                   # padded classes -> -1e30
    z = y - jnp.max(y, axis=1, keepdims=True)
    lse = jnp.log(jnp.sum(jnp.exp(z), axis=1, keepdims=True))
    o_ref[...] = (z - lse).astype(o_ref.dtype)


def head(feat, w1, b1, w2, b2, n_classes=10, tile_b=256):
    B, K = feat.shape
    TB = min(tile_b, _round_up(B, 8))
    Bp = _round_up(B, TB)
    if Bp != B:
        feat = jnp.pad(feat, ((0, Bp - B), (0, 0)))
    out = pl.pallas_call(
        head_kernel,
        out_shape=jax.ShapeDtypeStruct((Bp, 128), jnp.float32),
        grid=(Bp // TB,),
        in_specs=[
            pl.BlockSpec((TB, K), lambda r: (r, 0)),
            pl.BlockSpec((K, 128), lambda r: (0, 0)),
            pl.BlockSpec((1, 128), lambda r: (0, 0)),
            pl.BlockSpec((128, 128), lambda r: (0, 0)),
            pl.BlockSpec((1, 128), lambda r: (0, 0)),
        ],
        out_specs=pl.BlockSpec((TB, 128), lambda r: (r, 0)),
        compiler_params=pltpu.CompilerParams(
            dimension_semantics=("parallel",)),
    )(feat, w1, b1, w2, b2)
    return out[:B, :n_classes]


# ----------------------------------------------------------------------------
# Tiny XLA-side input prep: zero-pad + mod-4 row split (~12 KB / sample)
# ----------------------------------------------------------------------------
def _prep_input(x_nchw):
    B = x_nchw.shape[0]
    x = x_nchw[:, 0].astype(jnp.float32)                   # (B, 28, 28)
    xp = jnp.pad(x, ((0, 0), (1, 1), (1, 1)))              # SAME pad -> (B,30,30)
    xp = jnp.pad(xp, ((0, 0), (0, 2), (0, 2)))             # (B, 32, 32)
    xg = xp.reshape(B, 8, 4, 32).transpose(0, 2, 1, 3)     # (B,4,8,32): [b,g,m]=row 4m+g
    xg = jnp.pad(xg, ((0, 0), (0, 0), (1, 15), (0, 0)))    # (B, 4, 24, 32)
    return xg


# ----------------------------------------------------------------------------
# Offline parameter preparation (band matrices, fc1 row permutation, padding)
# ----------------------------------------------------------------------------
def prepare_params(params):
    w1, b1, w2, b2, fw1, fb1, fw2, fb2 = [np.asarray(p, np.float32) for p in params]

    # conv1 band matrices: contract the 32 padded-width lanes of an input row,
    # emit (framed width jp in 0..15) x (padded channel c in 0..15) lanes.
    m1 = np.zeros((3, 2, 32, N1), np.float32)
    b1f = np.zeros((1, N1), np.float32)
    for jp in range(1, 15):                 # jp = pooled width + 1 (frame)
        b1f[0, jp * CP:jp * CP + 10] = b1
        for kh in range(3):
            for dw in range(2):
                for kw in range(3):
                    p = 2 * (jp - 1) + dw + kw
                    m1[kh, dw, p, jp * CP:jp * CP + 10] = w1[kh, kw, 0, :]

    # conv2 band matrices: contract (framed width jp x cin) lanes of pooled1,
    # emit (pooled width qw in 0..6) x (padded channel co in 0..31) lanes.
    m2 = np.zeros((3, 2, N1, N2), np.float32)
    b2f = np.zeros((1, N2), np.float32)
    for qw in range(7):
        b2f[0, qw * CO:qw * CO + 20] = b2
        for kh in range(3):
            for dw in range(2):
                for kw in range(3):
                    jp = 2 * qw + dw + kw
                    m2[kh, dw, jp * CP:jp * CP + 10,
                       qw * CO:qw * CO + 20] = w2[kh, kw]

    # fc1: permute rows from torch order (c*49 + qh*7 + qw) to the conv-kernel
    # feature order ((qh*7 + qw)*20 + c); pad K 980 -> 1024 (lane-dense).
    fw1p = fw1.reshape(20, 7, 7, 128).transpose(1, 2, 0, 3).reshape(980, 128)
    fw1p = np.concatenate([fw1p, np.zeros((44, 128), np.float32)], axis=0)
    fb1r = fb1.reshape(1, 128)
    fw2p = np.zeros((128, 128), np.float32)
    fw2p[:, :10] = fw2
    fb2p = np.full((1, 128), -1e30, np.float32)    # padded classes -> ~-inf
    fb2p[0, :10] = fb2
    return tuple(jnp.asarray(a)
                 for a in (m1, b1f, m2, b2f, fw1p, fb1r, fw2p, fb2p))


# ----------------------------------------------------------------------------
# Full forward pass
# ----------------------------------------------------------------------------
def deep_forward(x_nchw, prepared):
    m1, b1f, m2, b2f, fw1p, fb1r, fw2p, fb2p = prepared
    B = x_nchw.shape[0]

    xg = _prep_input(x_nchw)                               # (B, 4, 24, 32)
    # Fused conv1 -> pool -> conv2 -> pool (Dropout2d identity in eval).
    y2 = conv_stack(xg, m1, b1f, m2, b2f)                  # (Bp, 8, 256)
    y2 = y2[:B]
    # Compact the lane-dense conv output to the 980 real features (+pad to 1024).
    feat = y2.reshape(B, 8, 8, CO)[:, :7, :7, :20].reshape(B, 980)
    feat = jnp.pad(feat, ((0, 0), (0, 44)))                # (B, 1024)
    # fc1 + ReLU + Dropout(identity) + fc2 + log_softmax.
    return head(feat, fw1p, fb1r, fw2p, fb2p)              # (B, 10)


# ----------------------------------------------------------------------------
# Pure-JAX reference (for correctness checking only)
# ----------------------------------------------------------------------------
def deep_forward_ref(x_nchw, params):
    (w1, b1, w2, b2, fw1, fb1, fw2, fb2) = params
    B = x_nchw.shape[0]
    x = jnp.transpose(x_nchw, (0, 2, 3, 1)).astype(jnp.float32)

    def conv(x, w, b):  # NHWC, HWIO
        y = jax.lax.conv_general_dilated(
            x, w, window_strides=(1, 1), padding="SAME",
            dimension_numbers=("NHWC", "HWIO", "NHWC"))
        return y + b

    def pool(x):
        return jax.lax.reduce_window(
            x, -jnp.inf, jax.lax.max, (1, 2, 2, 1), (1, 2, 2, 1), "VALID")

    y = pool(conv(x, w1, b1))
    y = pool(conv(y, w2, b2))
    feat = jnp.transpose(y, (0, 3, 1, 2)).reshape(B, 7 * 7 * 20)
    h = jnp.maximum(feat @ fw1 + fb1, 0.0)
    logits = h @ fw2 + fb2
    return jax.nn.log_softmax(logits, axis=1)


# ----------------------------------------------------------------------------
# Deterministic synthetic parameters (shapes from Deep.__init__)
# ----------------------------------------------------------------------------
def init_params(key):
    ks = jax.random.split(key, 8)

    def u(k, shape, fan_in):
        bound = 1.0 / jnp.sqrt(float(fan_in))
        return jax.random.uniform(k, shape, jnp.float32, -bound, bound)

    w1 = u(ks[0], (3, 3, 1, 10), 1 * 9)      # conv1 weight (HWIO)
    b1 = u(ks[1], (10,), 1 * 9)
    w2 = u(ks[2], (3, 3, 10, 20), 10 * 9)    # conv2 weight (HWIO)
    b2 = u(ks[3], (20,), 10 * 9)
    fw1 = u(ks[4], (980, 128), 980)          # fc1 (torch feature-row order)
    fb1 = u(ks[5], (128,), 980)
    fw2 = u(ks[6], (128, 10), 128)           # fc2
    fb2 = u(ks[7], (10,), 128)
    return (w1, b1, w2, b2, fw1, fb1, fw2, fb2)


if __name__ == "__main__":
    key = jax.random.PRNGKey(0)
    k_x, k_p = jax.random.split(key)

    B = 2
    x = jax.random.normal(k_x, (B, 1, 28, 28), jnp.float32)  # NCHW like PyTorch
    params = init_params(k_p)
    prepared = prepare_params(params)

    fwd = jax.jit(functools.partial(deep_forward, prepared=prepared))
    out = jax.block_until_ready(fwd(x))

    ref = jax.block_until_ready(deep_forward_ref(x, params))
    assert out.shape == (B, 10)
    err = jnp.max(jnp.abs(out - ref))
    assert jnp.allclose(out, ref, atol=5e-4, rtol=5e-4), (
        f"mismatch: max abs err = {err}")

    print("KERNEL_OK")
</pallas_src>

<mosaic_0001>
module attributes {stable_mosaic.version = 11 : i64} {
  func.func @conv_stack_kernel(%arg0: i32, %arg1: memref<1x4x24x32xf32, #tpu.memory_space<vmem>>, %arg2: memref<3x2x32x256xf32, #tpu.memory_space<vmem>>, %arg3: memref<1x256xf32, #tpu.memory_space<vmem>>, %arg4: memref<3x2x256x256xf32, #tpu.memory_space<vmem>>, %arg5: memref<1x256xf32, #tpu.memory_space<vmem>>, %arg6: memref<1x8x256xf32, #tpu.memory_space<vmem>>, %arg7: memref<1x16x256xf32, #tpu.memory_space<vmem>>, %arg8: memref<1x16x256xf32, #tpu.memory_space<vmem>>) attributes {dimension_semantics = [#tpu.dimension_semantics<parallel>], iteration_bounds = array<i64: 2>, scalar_prefetch = 0 : i64, scratch_operands = 2 : i64, tpu.core_type = #tpu.core_type<tc>, window_params = [{transform_indices = @transform_0, window_bounds = array<i64: 1, 4, 24, 32>}, {pipeline_mode = #tpu.pipeline_mode<synchronous>, transform_indices = @transform_1, window_bounds = array<i64: 3, 2, 32, 256>}, {pipeline_mode = #tpu.pipeline_mode<synchronous>, transform_indices = @transform_2, window_bounds = array<i64: 1, 256>}, {pipeline_mode = #tpu.pipeline_mode<synchronous>, transform_indices = @transform_3, window_bounds = array<i64: 3, 2, 256, 256>}, {pipeline_mode = #tpu.pipeline_mode<synchronous>, transform_indices = @transform_4, window_bounds = array<i64: 1, 256>}, {transform_indices = @transform_5, window_bounds = array<i64: 1, 8, 256>}]} {
    %c0 = arith.constant 0 : index
    %c0_0 = arith.constant 0 : index
    %c1 = arith.constant 1 : index
    %c0_1 = arith.constant 0 : index
    %0 = vector.load %arg1[%c0, %c0_0, %c1, %c0_1] : memref<1x4x24x32xf32, #tpu.memory_space<vmem>>, vector<1x1x16x32xf32>
    %1 = vector.shape_cast %0 : vector<1x1x16x32xf32> to vector<1x16x32xf32>
    %2 = vector.shape_cast %1 : vector<1x16x32xf32> to vector<16x32xf32>
    %c0_2 = arith.constant 0 : index
    %c1_3 = arith.constant 1 : index
    %c1_4 = arith.constant 1 : index
    %c0_5 = arith.constant 0 : index
    %3 = vector.load %arg1[%c0_2, %c1_3, %c1_4, %c0_5] : memref<1x4x24x32xf32, #tpu.memory_space<vmem>>, vector<1x1x16x32xf32>
    %4 = vector.shape_cast %3 : vector<1x1x16x32xf32> to vector<1x16x32xf32>
    %5 = vector.shape_cast %4 : vector<1x16x32xf32> to vector<16x32xf32>
    %c0_6 = arith.constant 0 : index
    %c2 = arith.constant 2 : index
    %c1_7 = arith.constant 1 : index
    %c0_8 = arith.constant 0 : index
    %6 = vector.load %arg1[%c0_6, %c2, %c1_7, %c0_8] : memref<1x4x24x32xf32, #tpu.memory_space<vmem>>, vector<1x1x16x32xf32>
    %7 = vector.shape_cast %6 : vector<1x1x16x32xf32> to vector<1x16x32xf32>
    %8 = vector.shape_cast %7 : vector<1x16x32xf32> to vector<16x32xf32>
    %c0_9 = arith.constant 0 : index
    %c3 = arith.constant 3 : index
    %c1_10 = arith.constant 1 : index
    %c0_11 = arith.constant 0 : index
    %9 = vector.load %arg1[%c0_9, %c3, %c1_10, %c0_11] : memref<1x4x24x32xf32, #tpu.memory_space<vmem>>, vector<1x1x16x32xf32>
    %10 = vector.shape_cast %9 : vector<1x1x16x32xf32> to vector<1x16x32xf32>
    %11 = vector.shape_cast %10 : vector<1x16x32xf32> to vector<16x32xf32>
    %c0_12 = arith.constant 0 : index
    %c2_13 = arith.constant 2 : index
    %c0_14 = arith.constant 0 : index
    %c0_15 = arith.constant 0 : index
    %12 = vector.load %arg1[%c0_12, %c2_13, %c0_14, %c0_15] : memref<1x4x24x32xf32, #tpu.memory_space<vmem>>, vector<1x1x16x32xf32>
    %13 = vector.shape_cast %12 : vector<1x1x16x32xf32> to vector<1x16x32xf32>
    %14 = vector.shape_cast %13 : vector<1x16x32xf32> to vector<16x32xf32>
    %c0_16 = arith.constant 0 : index
    %c3_17 = arith.constant 3 : index
    %c0_18 = arith.constant 0 : index
    %c0_19 = arith.constant 0 : index
    %15 = vector.load %arg1[%c0_16, %c3_17, %c0_18, %c0_19] : memref<1x4x24x32xf32, #tpu.memory_space<vmem>>, vector<1x1x16x32xf32>
    %16 = vector.shape_cast %15 : vector<1x1x16x32xf32> to vector<1x16x32xf32>
    %17 = vector.shape_cast %16 : vector<1x16x32xf32> to vector<16x32xf32>
    %c0_20 = arith.constant 0 : index
    %c0_21 = arith.constant 0 : index
    %c0_22 = arith.constant 0 : index
    %c0_23 = arith.constant 0 : index
    %18 = vector.load %arg2[%c0_20, %c0_21, %c0_22, %c0_23] : memref<3x2x32x256xf32, #tpu.memory_space<vmem>>, vector<1x1x32x256xf32>
    %19 = vector.shape_cast %18 : vector<1x1x32x256xf32> to vector<32x256xf32>
    %cst = arith.constant dense<0.000000e+00> : vector<16x256xf32>
    %20 = tpu.matmul %2, %19, %cst {dimension_numbers = #tpu.dot_dimension_numbers<[1], [0], [0], [1], [0, 0, 1, 1], [], []>} : vector<16x32xf32>, vector<32x256xf32>, vector<16x256xf32> -> vector<16x256xf32>
    %c1_24 = arith.constant 1 : index
    %c0_25 = arith.constant 0 : index
    %c0_26 = arith.constant 0 : index
    %c0_27 = arith.constant 0 : index
    %21 = vector.load %arg2[%c1_24, %c0_25, %c0_26, %c0_27] : memref<3x2x32x256xf32, #tpu.memory_space<vmem>>, vector<1x1x32x256xf32>
    %22 = vector.shape_cast %21 : vector<1x1x32x256xf32> to vector<32x256xf32>
    %cst_28 = arith.constant dense<0.000000e+00> : vector<16x256xf32>
    %23 = tpu.matmul %5, %22, %cst_28 {dimension_numbers = #tpu.dot_dimension_numbers<[1], [0], [0], [1], [0, 0, 1, 1], [], []>} : vector<16x32xf32>, vector<32x256xf32>, vector<16x256xf32> -> vector<16x256xf32>
    %24 = arith.addf %20, %23 : vector<16x256xf32>
    %c2_29 = arith.constant 2 : index
    %c0_30 = arith.constant 0 : index
    %c0_31 = arith.constant 0 : index
    %c0_32 = arith.constant 0 : index
    %25 = vector.load %arg2[%c2_29, %c0_30, %c0_31, %c0_32] : memref<3x2x32x256xf32, #tpu.memory_space<vmem>>, vector<1x1x32x256xf32>
    %26 = vector.shape_cast %25 : vector<1x1x32x256xf32> to vector<32x256xf32>
    %cst_33 = arith.constant dense<0.000000e+00> : vector<16x256xf32>
    %27 = tpu.matmul %8, %26, %cst_33 {dimension_numbers = #tpu.dot_dimension_numbers<[1], [0], [0], [1], [0, 0, 1, 1], [], []>} : vector<16x32xf32>, vector<32x256xf32>, vector<16x256xf32> -> vector<16x256xf32>
    %28 = arith.addf %24, %27 : vector<16x256xf32>
    %29 = vector.shape_cast %28 : vector<16x256xf32> to vector<1x16x256xf32>
    %c0_34 = arith.constant 0 : index
    %c0_35 = arith.constant 0 : index
    %c0_36 = arith.constant 0 : index
    %30 = vector.load %arg8[%c0_34, %c0_35, %c0_36] : memref<1x16x256xf32, #tpu.memory_space<vmem>>, vector<1x16x256xf32>
    tpu.vector_store %arg8[%c0_34, %c0_35, %c0_36], %29 {strides = array<i32>} : memref<1x16x256xf32, #tpu.memory_space<vmem>>, vector<1x16x256xf32>,
    %c0_37 = arith.constant 0 : index
    %c1_38 = arith.constant 1 : index
    %c0_39 = arith.constant 0 : index
    %c0_40 = arith.constant 0 : index
    %31 = vector.load %arg2[%c0_37, %c1_38, %c0_39, %c0_40] : memref<3x2x32x256xf32, #tpu.memory_space<vmem>>, vector<1x1x32x256xf32>
    %32 = vector.shape_cast %31 : vector<1x1x32x256xf32> to vector<32x256xf32>
    %cst_41 = arith.constant dense<0.000000e+00> : vector<16x256xf32>
    %33 = tpu.matmul %2, %32, %cst_41 {dimension_numbers = #tpu.dot_dimension_numbers<[1], [0], [0], [1], [0, 0, 1, 1], [], []>} : vector<16x32xf32>, vector<32x256xf32>, vector<16x256xf32> -> vector<16x256xf32>
    %c1_42 = arith.constant 1 : index
    %c1_43 = arith.constant 1 : index
    %c0_44 = arith.constant 0 : index
    %c0_45 = arith.constant 0 : index
    %34 = vector.load %arg2[%c1_42, %c1_43, %c0_44, %c0_45] : memref<3x2x32x256xf32, #tpu.memory_space<vmem>>, vector<1x1x32x256xf32>
    %35 = vector.shape_cast %34 : vector<1x1x32x256xf32> to vector<32x256xf32>
    %cst_46 = arith.constant dense<0.000000e+00> : vector<16x256xf32>
    %36 = tpu.matmul %5, %35, %cst_46 {dimension_numbers = #tpu.dot_dimension_numbers<[1], [0], [0], [1], [0, 0, 1, 1], [], []>} : vector<16x32xf32>, vector<32x256xf32>, vector<16x256xf32> -> vector<16x256xf32>
    %37 = arith.addf %33, %36 : vector<16x256xf32>
    %c2_47 = arith.constant 2 : index
    %c1_48 = arith.constant 1 : index
    %c0_49 = arith.constant 0 : index
    %c0_50 = arith.constant 0 : index
    %38 = vector.load %arg2[%c2_47, %c1_48, %c0_49, %c0_50] : memref<3x2x32x256xf32, #tpu.memory_space<vmem>>, vector<1x1x32x256xf32>
    %39 = vector.shape_cast %38 : vector<1x1x32x256xf32> to vector<32x256xf32>
    %cst_51 = arith.constant dense<0.000000e+00> : vector<16x256xf32>
    %40 = tpu.matmul %8, %39, %cst_51 {dimension_numbers = #tpu.dot_dimension_numbers<[1], [0], [0], [1], [0, 0, 1, 1], [], []>} : vector<16x32xf32>, vector<32x256xf32>, vector<16x256xf32> -> vector<16x256xf32>
    %41 = arith.addf %37, %40 : vector<16x256xf32>
    %42 = vector.shape_cast %41 : vector<16x256xf32> to vector<1x16x256xf32>
    %c0_52 = arith.constant 0 : index
    %c0_53 = arith.constant 0 : index
    %c0_54 = arith.constant 0 : index
    %43 = vector.load %arg8[%c0_52, %c0_53, %c0_54] : memref<1x16x256xf32, #tpu.memory_space<vmem>>, vector<1x16x256xf32>
    %44 = arith.maximumf %43, %42 : vector<1x16x256xf32>
    %c0_55 = arith.constant 0 : index
    %c0_56 = arith.constant 0 : index
    %c0_57 = arith.constant 0 : index
    %45 = vector.load %arg8[%c0_55, %c0_56, %c0_57] : memref<1x16x256xf32, #tpu.memory_space<vmem>>, vector<1x16x256xf32>
    tpu.vector_store %arg8[%c0_55, %c0_56, %c0_57], %44 {strides = array<i32>} : memref<1x16x256xf32, #tpu.memory_space<vmem>>, vector<1x16x256xf32>,
    %c0_58 = arith.constant 0 : index
    %c0_59 = arith.constant 0 : index
    %c0_60 = arith.constant 0 : index
    %c0_61 = arith.constant 0 : index
    %46 = vector.load %arg2[%c0_58, %c0_59, %c0_60, %c0_61] : memref<3x2x32x256xf32, #tpu.memory_space<vmem>>, vector<1x1x32x256xf32>
    %47 = vector.shape_cast %46 : vector<1x1x32x256xf32> to vector<32x256xf32>
    %cst_62 = arith.constant dense<0.000000e+00> : vector<16x256xf32>
    %48 = tpu.matmul %5, %47, %cst_62 {dimension_numbers = #tpu.dot_dimension_numbers<[1], [0], [0], [1], [0, 0, 1, 1], [], []>} : vector<16x32xf32>, vector<32x256xf32>, vector<16x256xf32> -> vector<16x256xf32>
    %c1_63 = arith.constant 1 : index
    %c0_64 = arith.constant 0 : index
    %c0_65 = arith.constant 0 : index
    %c0_66 = arith.constant 0 : index
    %49 = vector.load %arg2[%c1_63, %c0_64, %c0_65, %c0_66] : memref<3x2x32x256xf32, #tpu.memory_space<vmem>>, vector<1x1x32x256xf32>
    %50 = vector.shape_cast %49 : vector<1x1x32x256xf32> to vector<32x256xf32>
    %cst_67 = arith.constant dense<0.000000e+00> : vector<16x256xf32>
    %51 = tpu.matmul %8, %50, %cst_67 {dimension_numbers = #tpu.dot_dimension_numbers<[1], [0], [0], [1], [0, 0, 1, 1], [], []>} : vector<16x32xf32>, vector<32x256xf32>, vector<16x256xf32> -> vector<16x256xf32>
    %52 = arith.addf %48, %51 : vector<16x256xf32>
    %c2_68 = arith.constant 2 : index
    %c0_69 = arith.constant 0 : index
    %c0_70 = arith.constant 0 : index
    %c0_71 = arith.constant 0 : index
    %53 = vector.load %arg2[%c2_68, %c0_69, %c0_70, %c0_71] : memref<3x2x32x256xf32, #tpu.memory_space<vmem>>, vector<1x1x32x256xf32>
    %54 = vector.shape_cast %53 : vector<1x1x32x256xf32> to vector<32x256xf32>
    %cst_72 = arith.constant dense<0.000000e+00> : vector<16x256xf32>
    %55 = tpu.matmul %11, %54, %cst_72 {dimension_numbers = #tpu.dot_dimension_numbers<[1], [0], [0], [1], [0, 0, 1, 1], [], []>} : vector<16x32xf32>, vector<32x256xf32>, vector<16x256xf32> -> vector<16x256xf32>
    %56 = arith.addf %52, %55 : vector<16x256xf32>
    %57 = vector.shape_cast %56 : vector<16x256xf32> to vector<1x16x256xf32>
    %c0_73 = arith.constant 0 : index
    %c0_74 = arith.constant 0 : index
    %c0_75 = arith.constant 0 : index
    %58 = vector.load %arg8[%c0_73, %c0_74, %c0_75] : memref<1x16x256xf32, #tpu.memory_space<vmem>>, vector<1x16x256xf32>
    %59 = arith.maximumf %58, %57 : vector<1x16x256xf32>
    %c0_76 = arith.constant 0 : index
    %c0_77 = arith.constant 0 : index
    %c0_78 = arith.constant 0 : index
    %60 = vector.load %arg8[%c0_76, %c0_77, %c0_78] : memref<1x16x256xf32, #tpu.memory_space<vmem>>, vector<1x16x256xf32>
    tpu.vector_store %arg8[%c0_76, %c0_77, %c0_78], %59 {strides = array<i32>} : memref<1x16x256xf32, #tpu.memory_space<vmem>>, vector<1x16x256xf32>,
    %c0_79 = arith.constant 0 : index
    %c1_80 = arith.constant 1 : index
    %c0_81 = arith.constant 0 : index
    %c0_82 = arith.constant 0 : index
    %61 = vector.load %arg2[%c0_79, %c1_80, %c0_81, %c0_82] : memref<3x2x32x256xf32, #tpu.memory_space<vmem>>, vector<1x1x32x256xf32>
    %62 = vector.shape_cast %61 : vector<1x1x32x256xf32> to vector<32x256xf32>
    %cst_83 = arith.constant dense<0.000000e+00> : vector<16x256xf32>
    %63 = tpu.matmul %5, %62, %cst_83 {dimension_numbers = #tpu.dot_dimension_numbers<[1], [0], [0], [1], [0, 0, 1, 1], [], []>} : vector<16x32xf32>, vector<32x256xf32>, vector<16x256xf32> -> vector<16x256xf32>
    %c1_84 = arith.constant 1 : index
    %c1_85 = arith.constant 1 : index
    %c0_86 = arith.constant 0 : index
    %c0_87 = arith.constant 0 : index
    %64 = vector.load %arg2[%c1_84, %c1_85, %c0_86, %c0_87] : memref<3x2x32x256xf32, #tpu.memory_space<vmem>>, vector<1x1x32x256xf32>
    %65 = vector.shape_cast %64 : vector<1x1x32x256xf32> to vector<32x256xf32>
    %cst_88 = arith.constant dense<0.000000e+00> : vector<16x256xf32>
    %66 = tpu.matmul %8, %65, %cst_88 {dimension_numbers = #tpu.dot_dimension_numbers<[1], [0], [0], [1], [0, 0, 1, 1], [], []>} : vector<16x32xf32>, vector<32x256xf32>, vector<16x256xf32> -> vector<16x256xf32>
    %67 = arith.addf %63, %66 : vector<16x256xf32>
    %c2_89 = arith.constant 2 : index
    %c1_90 = arith.constant 1 : index
    %c0_91 = arith.constant 0 : index
    %c0_92 = arith.constant 0 : index
    %68 = vector.load %arg2[%c2_89, %c1_90, %c0_91, %c0_92] : memref<3x2x32x256xf32, #tpu.memory_space<vmem>>, vector<1x1x32x256xf32>
    %69 = vector.shape_cast %68 : vector<1x1x32x256xf32> to vector<32x256xf32>
    %cst_93 = arith.constant dense<0.000000e+00> : vector<16x256xf32>
    %70 = tpu.matmul %11, %69, %cst_93 {dimension_numbers = #tpu.dot_dimension_numbers<[1], [0], [0], [1], [0, 0, 1, 1], [], []>} : vector<16x32xf32>, vector<32x256xf32>, vector<16x256xf32> -> vector<16x256xf32>
    %71 = arith.addf %67, %70 : vector<16x256xf32>
    %72 = vector.shape_cast %71 : vector<16x256xf32> to vector<1x16x256xf32>
    %c0_94 = arith.constant 0 : index
    %c0_95 = arith.constant 0 : index
    %c0_96 = arith.constant 0 : index
    %73 = vector.load %arg8[%c0_94, %c0_95, %c0_96] : memref<1x16x256xf32, #tpu.memory_space<vmem>>, vector<1x16x256xf32>
    %74 = arith.maximumf %73, %72 : vector<1x16x256xf32>
    %c0_97 = arith.constant 0 : index
    %c0_98 = arith.constant 0 : index
    %c0_99 = arith.constant 0 : index
    %75 = vector.load %arg8[%c0_97, %c0_98, %c0_99] : memref<1x16x256xf32, #tpu.memory_space<vmem>>, vector<1x16x256xf32>
    tpu.vector_store %arg8[%c0_97, %c0_98, %c0_99], %74 {strides = array<i32>} : memref<1x16x256xf32, #tpu.memory_space<vmem>>, vector<1x16x256xf32>,
    %76 = tpu.iota {dimensions = array<i32: 1>} : vector<1x16x1xi32>
    %c7_i32 = arith.constant 7 : i32
    %77 = vector.broadcast %c7_i32 : i32 to vector<1x16x1xi32>
    %78 = arith.cmpi eq, %76, %77 : vector<1x16x1xi32>
    %c0_100 = arith.constant 0 : index
    %c0_101 = arith.constant 0 : index
    %c0_102 = arith.constant 0 : index
    %79 = vector.load %arg8[%c0_100, %c0_101, %c0_102] : memref<1x16x256xf32, #tpu.memory_space<vmem>>, vector<1x16x256xf32>
    %c0_103 = arith.constant 0 : index
    %c0_104 = arith.constant 0 : index
    %80 = vector.load %arg3[%c0_103, %c0_104] : memref<1x256xf32, #tpu.memory_space<vmem>>, vector<1x256xf32>
    %81 = vector.shape_cast %80 : vector<1x256xf32> to vector<1x1x256xf32>
    %82 = vector.broadcast %81 : vector<1x1x256xf32> to vector<1x16x256xf32>
    %83 = arith.addf %79, %82 : vector<1x16x256xf32>
    %cst_105 = arith.constant 0.000000e+00 : f32
    %84 = vector.shape_cast %78 : vector<1x16x1xi1> to vector<1x16x1xi1>
    %85 = vector.broadcast %84 : vector<1x16x1xi1> to vector<1x16x256xi1>
    %86 = vector.broadcast %cst_105 : f32 to vector<1x16x256xf32>
    %87 = arith.select %85, %86, %83 : vector<1x16x256xi1>, vector<1x16x256xf32>
    %c0_106 = arith.constant 0 : index
    %c0_107 = arith.constant 0 : index
    %c0_108 = arith.constant 0 : index
    %88 = vector.load %arg8[%c0_106, %c0_107, %c0_108] : memref<1x16x256xf32, #tpu.memory_space<vmem>>, vector<1x16x256xf32>
    tpu.vector_store %arg8[%c0_106, %c0_107, %c0_108], %87 {strides = array<i32>} : memref<1x16x256xf32, #tpu.memory_space<vmem>>, vector<1x16x256xf32>,
    %c0_109 = arith.constant 0 : index
    %c0_110 = arith.constant 0 : index
    %c0_111 = arith.constant 0 : index
    %c0_112 = arith.constant 0 : index
    %89 = vector.load %arg2[%c0_109, %c0_110, %c0_111, %c0_112] : memref<3x2x32x256xf32, #tpu.memory_space<vmem>>, vector<1x1x32x256xf32>
    %90 = vector.shape_cast %89 : vector<1x1x32x256xf32> to vector<32x256xf32>
    %cst_113 = arith.constant dense<0.000000e+00> : vector<16x256xf32>
    %91 = tpu.matmul %14, %90, %cst_113 {dimension_numbers = #tpu.dot_dimension_numbers<[1], [0], [0], [1], [0, 0, 1, 1], [], []>} : vector<16x32xf32>, vector<32x256xf32>, vector<16x256xf32> -> vector<16x256xf32>
    %c1_114 = arith.constant 1 : index
    %c0_115 = arith.constant 0 : index
    %c0_116 = arith.constant 0 : index
    %c0_117 = arith.constant 0 : index
    %92 = vector.load %arg2[%c1_114, %c0_115, %c0_116, %c0_117] : memref<3x2x32x256xf32, #tpu.memory_space<vmem>>, vector<1x1x32x256xf32>
    %93 = vector.shape_cast %92 : vector<1x1x32x256xf32> to vector<32x256xf32>
    %cst_118 = arith.constant dense<0.000000e+00> : vector<16x256xf32>
    %94 = tpu.matmul %17, %93, %cst_118 {dimension_numbers = #tpu.dot_dimension_numbers<[1], [0], [0], [1], [0, 0, 1, 1], [], []>} : vector<16x32xf32>, vector<32x256xf32>, vector<16x256xf32> -> vector<16x256xf32>
    %95 = arith.addf %91, %94 : vector<16x256xf32>
    %c2_119 = arith.constant 2 : index
    %c0_120 = arith.constant 0 : index
    %c0_121 = arith.constant 0 : index
    %c0_122 = arith.constant 0 : index
    %96 = vector.load %arg2[%c2_119, %c0_120, %c0_121, %c0_122] : memref<3x2x32x256xf32, #tpu.memory_space<vmem>>, vector<1x1x32x256xf32>
    %97 = vector.shape_cast %96 : vector<1x1x32x256xf32> to vector<32x256xf32>
    %cst_123 = arith.constant dense<0.000000e+00> : vector<16x256xf32>
    %98 = tpu.matmul %2, %97, %cst_123 {dimension_numbers = #tpu.dot_dimension_numbers<[1], [0], [0], [1], [0, 0, 1, 1], [], []>} : vector<16x32xf32>, vector<32x256xf32>, vector<16x256xf32> -> vector<16x256xf32>
    %99 = arith.addf %95, %98 : vector<16x256xf32>
    %100 = vector.shape_cast %99 : vector<16x256xf32> to vector<1x16x256xf32>
    %c0_124 = arith.constant 0 : index
    %c0_125 = arith.constant 0 : index
    %c0_126 = arith.constant 0 : index
    %101 = vector.load %arg7[%c0_124, %c0_125, %c0_126] : memref<1x16x256xf32, #tpu.memory_space<vmem>>, vector<1x16x256xf32>
    tpu.vector_store %arg7[%c0_124, %c0_125, %c0_126], %100 {strides = array<i32>} : memref<1x16x256xf32, #tpu.memory_space<vmem>>, vector<1x16x256xf32>,
    %c0_127 = arith.constant 0 : index
    %c1_128 = arith.constant 1 : index
    %c0_129 = arith.constant 0 : index
    %c0_130 = arith.constant 0 : index
    %102 = vector.load %arg2[%c0_127, %c1_128, %c0_129, %c0_130] : memref<3x2x32x256xf32, #tpu.memory_space<vmem>>, vector<1x1x32x256xf32>
    %103 = vector.shape_cast %102 : vector<1x1x32x256xf32> to vector<32x256xf32>
    %cst_131 = arith.constant dense<0.000000e+00> : vector<16x256xf32>
    %104 = tpu.matmul %14, %103, %cst_131 {dimension_numbers = #tpu.dot_dimension_numbers<[1], [0], [0], [1], [0, 0, 1, 1], [], []>} : vector<16x32xf32>, vector<32x256xf32>, vector<16x256xf32> -> vector<16x256xf32>
    %c1_132 = arith.constant 1 : index
    %c1_133 = arith.constant 1 : index
    %c0_134 = arith.constant 0 : index
    %c0_135 = arith.constant 0 : index
    %105 = vector.load %arg2[%c1_132, %c1_133, %c0_134, %c0_135] : memref<3x2x32x256xf32, #tpu.memory_space<vmem>>, vector<1x1x32x256xf32>
    %106 = vector.shape_cast %105 : vector<1x1x32x256xf32> to vector<32x256xf32>
    %cst_136 = arith.constant dense<0.000000e+00> : vector<16x256xf32>
    %107 = tpu.matmul %17, %106, %cst_136 {dimension_numbers = #tpu.dot_dimension_numbers<[1], [0], [0], [1], [0, 0, 1, 1], [], []>} : vector<16x32xf32>, vector<32x256xf32>, vector<16x256xf32> -> vector<16x256xf32>
    %108 = arith.addf %104, %107 : vector<16x256xf32>
    %c2_137 = arith.constant 2 : index
    %c1_138 = arith.constant 1 : index
    %c0_139 = arith.constant 0 : index
    %c0_140 = arith.constant 0 : index
    %109 = vector.load %arg2[%c2_137, %c1_138, %c0_139, %c0_140] : memref<3x2x32x256xf32, #tpu.memory_space<vmem>>, vector<1x1x32x256xf32>
    %110 = vector.shape_cast %109 : vector<1x1x32x256xf32> to vector<32x256xf32>
    %cst_141 = arith.constant dense<0.000000e+00> : vector<16x256xf32>
    %111 = tpu.matmul %2, %110, %cst_141 {dimension_numbers = #tpu.dot_dimension_numbers<[1], [0], [0], [1], [0, 0, 1, 1], [], []>} : vector<16x32xf32>, vector<32x256xf32>, vector<16x256xf32> -> vector<16x256xf32>
    %112 = arith.addf %108, %111 : vector<16x256xf32>
    %113 = vector.shape_cast %112 : vector<16x256xf32> to vector<1x16x256xf32>
    %c0_142 = arith.constant 0 : index
    %c0_143 = arith.constant 0 : index
    %c0_144 = arith.constant 0 : index
    %114 = vector.load %arg7[%c0_142, %c0_143, %c0_144] : memref<1x16x256xf32, #tpu.memory_space<vmem>>, vector<1x16x256xf32>
    %115 = arith.maximumf %114, %113 : vector<1x16x256xf32>
    %c0_145 = arith.constant 0 : index
    %c0_146 = arith.constant 0 : index
    %c0_147 = arith.constant 0 : index
    %116 = vector.load %arg7[%c0_145, %c0_146, %c0_147] : memref<1x16x256xf32, #tpu.memory_space<vmem>>, vector<1x16x256xf32>
    tpu.vector_store %arg7[%c0_145, %c0_146, %c0_147], %115 {strides = array<i32>} : memref<1x16x256xf32, #tpu.memory_space<vmem>>, vector<1x16x256xf32>,
    %c0_148 = arith.constant 0 : index
    %c0_149 = arith.constant 0 : index
    %c0_150 = arith.constant 0 : index
    %c0_151 = arith.constant 0 : index
    %117 = vector.load %arg2[%c0_148, %c0_149, %c0_150, %c0_151] : memref<3x2x32x256xf32, #tpu.memory_space<vmem>>, vector<1x1x32x256xf32>
    %118 = vector.shape_cast %117 : vector<1x1x32x256xf32> to vector<32x256xf32>
    %cst_152 = arith.constant dense<0.000000e+00> : vector<16x256xf32>
    %119 = tpu.matmul %17, %118, %cst_152 {dimension_numbers = #tpu.dot_dimension_numbers<[1], [0], [0], [1], [0, 0, 1, 1], [], []>} : vector<16x32xf32>, vector<32x256xf32>, vector<16x256xf32> -> vector<16x256xf32>
    %c1_153 = arith.constant 1 : index
    %c0_154 = arith.constant 0 : index
    %c0_155 = arith.constant 0 : index
    %c0_156 = arith.constant 0 : index
    %120 = vector.load %arg2[%c1_153, %c0_154, %c0_155, %c0_156] : memref<3x2x32x256xf32, #tpu.memory_space<vmem>>, vector<1x1x32x256xf32>
    %121 = vector.shape_cast %120 : vector<1x1x32x256xf32> to vector<32x256xf32>
    %cst_157 = arith.constant dense<0.000000e+00> : vector<16x256xf32>
    %122 = tpu.matmul %2, %121, %cst_157 {dimension_numbers = #tpu.dot_dimension_numbers<[1], [0], [0], [1], [0, 0, 1, 1], [], []>} : vector<16x32xf32>, vector<32x256xf32>, vector<16x256xf32> -> vector<16x256xf32>
    %123 = arith.addf %119, %122 : vector<16x256xf32>
    %c2_158 = arith.constant 2 : index
    %c0_159 = arith.constant 0 : index
    %c0_160 = arith.constant 0 : index
    %c0_161 = arith.constant 0 : index
    %124 = vector.load %arg2[%c2_158, %c0_159, %c0_160, %c0_161] : memref<3x2x32x256xf32, #tpu.memory_space<vmem>>, vector<1x1x32x256xf32>
    %125 = vector.shape_cast %124 : vector<1x1x32x256xf32> to vector<32x256xf32>
    %cst_162 = arith.constant dense<0.000000e+00> : vector<16x256xf32>
    %126 = tpu.matmul %5, %125, %cst_162 {dimension_numbers = #tpu.dot_dimension_numbers<[1], [0], [0], [1], [0, 0, 1, 1], [], []>} : vector<16x32xf32>, vector<32x256xf32>, vector<16x256xf32> -> vector<16x256xf32>
    %127 = arith.addf %123, %126 : vector<16x256xf32>
    %128 = vector.shape_cast %127 : vector<16x256xf32> to vector<1x16x256xf32>
    %c0_163 = arith.constant 0 : index
    %c0_164 = arith.constant 0 : index
    %c0_165 = arith.constant 0 : index
    %129 = vector.load %arg7[%c0_163, %c0_164, %c0_165] : memref<1x16x256xf32, #tpu.memory_space<vmem>>, vector<1x16x256xf32>
    %130 = arith.maximumf %129, %128 : vector<1x16x256xf32>
    %c0_166 = arith.constant 0 : index
    %c0_167 = arith.constant 0 : index
    %c0_168 = arith.constant 0 : index
    %131 = vector.load %arg7[%c0_166, %c0_167, %c0_168] : memref<1x16x256xf32, #tpu.memory_space<vmem>>, vector<1x16x256xf32>
    tpu.vector_store %arg7[%c0_166, %c0_167, %c0_168], %130 {strides = array<i32>} : memref<1x16x256xf32, #tpu.memory_space<vmem>>, vector<1x16x256xf32>,
    %c0_169 = arith.constant 0 : index
    %c1_170 = arith.constant 1 : index
    %c0_171 = arith.constant 0 : index
    %c0_172 = arith.constant 0 : index
    %132 = vector.load %arg2[%c0_169, %c1_170, %c0_171, %c0_172] : memref<3x2x32x256xf32, #tpu.memory_space<vmem>>, vector<1x1x32x256xf32>
    %133 = vector.shape_cast %132 : vector<1x1x32x256xf32> to vector<32x256xf32>
    %cst_173 = arith.constant dense<0.000000e+00> : vector<16x256xf32>
    %134 = tpu.matmul %17, %133, %cst_173 {dimension_numbers = #tpu.dot_dimension_numbers<[1], [0], [0], [1], [0, 0, 1, 1], [], []>} : vector<16x32xf32>, vector<32x256xf32>, vector<16x256xf32> -> vector<16x256xf32>
    %c1_174 = arith.constant 1 : index
    %c1_175 = arith.constant 1 : index
    %c0_176 = arith.constant 0 : index
    %c0_177 = arith.constant 0 : index
    %135 = vector.load %arg2[%c1_174, %c1_175, %c0_176, %c0_177] : memref<3x2x32x256xf32, #tpu.memory_space<vmem>>, vector<1x1x32x256xf32>
    %136 = vector.shape_cast %135 : vector<1x1x32x256xf32> to vector<32x256xf32>
    %cst_178 = arith.constant dense<0.000000e+00> : vector<16x256xf32>
    %137 = tpu.matmul %2, %136, %cst_178 {dimension_numbers = #tpu.dot_dimension_numbers<[1], [0], [0], [1], [0, 0, 1, 1], [], []>} : vector<16x32xf32>, vector<32x256xf32>, vector<16x256xf32> -> vector<16x256xf32>
    %138 = arith.addf %134, %137 : vector<16x256xf32>
    %c2_179 = arith.constant 2 : index
    %c1_180 = arith.constant 1 : index
    %c0_181 = arith.constant 0 : index
    %c0_182 = arith.constant 0 : index
    %139 = vector.load %arg2[%c2_179, %c1_180, %c0_181, %c0_182] : memref<3x2x32x256xf32, #tpu.memory_space<vmem>>, vector<1x1x32x256xf32>
    %140 = vector.shape_cast %139 : vector<1x1x32x256xf32> to vector<32x256xf32>
    %cst_183 = arith.constant dense<0.000000e+00> : vector<16x256xf32>
    %141 = tpu.matmul %5, %140, %cst_183 {dimension_numbers = #tpu.dot_dimension_numbers<[1], [0], [0], [1], [0, 0, 1, 1], [], []>} : vector<16x32xf32>, vector<32x256xf32>, vector<16x256xf32> -> vector<16x256xf32>
    %142 = arith.addf %138, %141 : vector<16x256xf32>
    %143 = vector.shape_cast %142 : vector<16x256xf32> to vector<1x16x256xf32>
    %c0_184 = arith.constant 0 : index
    %c0_185 = arith.constant 0 : index
    %c0_186 = arith.constant 0 : index
    %144 = vector.load %arg7[%c0_184, %c0_185, %c0_186] : memref<1x16x256xf32, #tpu.memory_space<vmem>>, vector<1x16x256xf32>
    %145 = arith.maximumf %144, %143 : vector<1x16x256xf32>
    %c0_187 = arith.constant 0 : index
    %c0_188 = arith.constant 0 : index
    %c0_189 = arith.constant 0 : index
    %146 = vector.load %arg7[%c0_187, %c0_188, %c0_189] : memref<1x16x256xf32, #tpu.memory_space<vmem>>, vector<1x16x256xf32>
    tpu.vector_store %arg7[%c0_187, %c0_188, %c0_189], %145 {strides = array<i32>} : memref<1x16x256xf32, #tpu.memory_space<vmem>>, vector<1x16x256xf32>,
    %147 = tpu.iota {dimensions = array<i32: 1>} : vector<1x16x1xi32>
    %c0_i32 = arith.constant 0 : i32
    %148 = vector.broadcast %c0_i32 : i32 to vector<1x16x1xi32>
    %149 = arith.cmpi eq, %147, %148 : vector<1x16x1xi32>
    %c0_190 = arith.constant 0 : index
    %c0_191 = arith.constant 0 : index
    %c0_192 = arith.constant 0 : index
    %150 = vector.load %arg7[%c0_190, %c0_191, %c0_192] : memref<1x16x256xf32, #tpu.memory_space<vmem>>, vector<1x16x256xf32>
    %c0_193 = arith.constant 0 : index
    %c0_194 = arith.constant 0 : index
    %151 = vector.load %arg3[%c0_193, %c0_194] : memref<1x256xf32, #tpu.memory_space<vmem>>, vector<1x256xf32>
    %152 = vector.shape_cast %151 : vector<1x256xf32> to vector<1x1x256xf32>
    %153 = vector.broadcast %152 : vector<1x1x256xf32> to vector<1x16x256xf32>
    %154 = arith.addf %150, %153 : vector<1x16x256xf32>
    %cst_195 = arith.constant 0.000000e+00 : f32
    %155 = vector.shape_cast %149 : vector<1x16x1xi1> to vector<1x16x1xi1>
    %156 = vector.broadcast %155 : vector<1x16x1xi1> to vector<1x16x256xi1>
    %157 = vector.broadcast %cst_195 : f32 to vector<1x16x256xf32>
    %158 = arith.select %156, %157, %154 : vector<1x16x256xi1>, vector<1x16x256xf32>
    %c0_196 = arith.constant 0 : index
    %c0_197 = arith.constant 0 : index
    %c0_198 = arith.constant 0 : index
    %159 = vector.load %arg7[%c0_196, %c0_197, %c0_198] : memref<1x16x256xf32, #tpu.memory_space<vmem>>, vector<1x16x256xf32>
    tpu.vector_store %arg7[%c0_196, %c0_197, %c0_198], %158 {strides = array<i32>} : memref<1x16x256xf32, #tpu.memory_space<vmem>>, vector<1x16x256xf32>,
    %c0_199 = arith.constant 0 : index
    %c0_200 = arith.constant 0 : index
    %c0_201 = arith.constant 0 : index
    %160 = vector.load %arg7[%c0_199, %c0_200, %c0_201] : memref<1x16x256xf32, #tpu.memory_space<vmem>>, vector<1x8x256xf32>
    %161 = vector.shape_cast %160 : vector<1x8x256xf32> to vector<8x256xf32>
    %c0_202 = arith.constant 0 : index
    %c0_203 = arith.constant 0 : index
    %c0_204 = arith.constant 0 : index
    %162 = vector.load %arg8[%c0_202, %c0_203, %c0_204] : memref<1x16x256xf32, #tpu.memory_space<vmem>>, vector<1x8x256xf32>
    %163 = vector.shape_cast %162 : vector<1x8x256xf32> to vector<8x256xf32>
    %c0_205 = arith.constant 0 : index
    %c1_206 = arith.constant 1 : index
    %c0_207 = arith.constant 0 : index
    %164 = vector.load %arg7[%c0_205, %c1_206, %c0_207] : memref<1x16x256xf32, #tpu.memory_space<vmem>>, vector<1x8x256xf32>
    %165 = vector.shape_cast %164 : vector<1x8x256xf32> to vector<8x256xf32>
    %c0_208 = arith.constant 0 : index
    %c1_209 = arith.constant 1 : index
    %c0_210 = arith.constant 0 : index
    %166 = vector.load %arg8[%c0_208, %c1_209, %c0_210] : memref<1x16x256xf32, #tpu.memory_space<vmem>>, vector<1x8x256xf32>
    %167 = vector.shape_cast %166 : vector<1x8x256xf32> to vector<8x256xf32>
    %c0_211 = arith.constant 0 : index
    %c0_212 = arith.constant 0 : index
    %c0_213 = arith.constant 0 : index
    %c0_214 = arith.constant 0 : index
    %168 = vector.load %arg4[%c0_211, %c0_212, %c0_213, %c0_214] : memref<3x2x256x256xf32, #tpu.memory_space<vmem>>, vector<1x1x256x256xf32>
    %169 = vector.shape_cast %168 : vector<1x1x256x256xf32> to vector<256x256xf32>
    %cst_215 = arith.constant dense<0.000000e+00> : vector<8x256xf32>
    %170 = tpu.matmul %161, %169, %cst_215 {dimension_numbers = #tpu.dot_dimension_numbers<[1], [0], [0], [1], [0, 0, 1, 1], [], []>} : vector<8x256xf32>, vector<256x256xf32>, vector<8x256xf32> -> vector<8x256xf32>
    %c1_216 = arith.constant 1 : index
    %c0_217 = arith.constant 0 : index
    %c0_218 = arith.constant 0 : index
    %c0_219 = arith.constant 0 : index
    %171 = vector.load %arg4[%c1_216, %c0_217, %c0_218, %c0_219] : memref<3x2x256x256xf32, #tpu.memory_space<vmem>>, vector<1x1x256x256xf32>
    %172 = vector.shape_cast %171 : vector<1x1x256x256xf32> to vector<256x256xf32>
    %cst_220 = arith.constant dense<0.000000e+00> : vector<8x256xf32>
    %173 = tpu.matmul %163, %172, %cst_220 {dimension_numbers = #tpu.dot_dimension_numbers<[1], [0], [0], [1], [0, 0, 1, 1], [], []>} : vector<8x256xf32>, vector<256x256xf32>, vector<8x256xf32> -> vector<8x256xf32>
    %174 = arith.addf %170, %173 : vector<8x256xf32>
    %c2_221 = arith.constant 2 : index
    %c0_222 = arith.constant 0 : index
    %c0_223 = arith.constant 0 : index
    %c0_224 = arith.constant 0 : index
    %175 = vector.load %arg4[%c2_221, %c0_222, %c0_223, %c0_224] : memref<3x2x256x256xf32, #tpu.memory_space<vmem>>, vector<1x1x256x256xf32>
    %176 = vector.shape_cast %175 : vector<1x1x256x256xf32> to vector<256x256xf32>
    %cst_225 = arith.constant dense<0.000000e+00> : vector<8x256xf32>
    %177 = tpu.matmul %165, %176, %cst_225 {dimension_numbers = #tpu.dot_dimension_numbers<[1], [0], [0], [1], [0, 0, 1, 1], [], []>} : vector<8x256xf32>, vector<256x256xf32>, vector<8x256xf32> -> vector<8x256xf32>
    %178 = arith.addf %174, %177 : vector<8x256xf32>
    %c0_226 = arith.constant 0 : index
    %c1_227 = arith.constant 1 : index
    %c0_228 = arith.constant 0 : index
    %c0_229 = arith.constant 0 : index
    %179 = vector.load %arg4[%c0_226, %c1_227, %c0_228, %c0_229] : memref<3x2x256x256xf32, #tpu.memory_space<vmem>>, vector<1x1x256x256xf32>
    %180 = vector.shape_cast %179 : vector<1x1x256x256xf32> to vector<256x256xf32>
    %cst_230 = arith.constant dense<0.000000e+00> : vector<8x256xf32>
    %181 = tpu.matmul %161, %180, %cst_230 {dimension_numbers = #tpu.dot_dimension_numbers<[1], [0], [0], [1], [0, 0, 1, 1], [], []>} : vector<8x256xf32>, vector<256x256xf32>, vector<8x256xf32> -> vector<8x256xf32>
    %c1_231 = arith.constant 1 : index
    %c1_232 = arith.constant 1 : index
    %c0_233 = arith.constant 0 : index
    %c0_234 = arith.constant 0 : index
    %182 = vector.load %arg4[%c1_231, %c1_232, %c0_233, %c0_234] : memref<3x2x256x256xf32, #tpu.memory_space<vmem>>, vector<1x1x256x256xf32>
    %183 = vector.shape_cast %182 : vector<1x1x256x256xf32> to vector<256x256xf32>
    %cst_235 = arith.constant dense<0.000000e+00> : vector<8x256xf32>
    %184 = tpu.matmul %163, %183, %cst_235 {dimension_numbers = #tpu.dot_dimension_numbers<[1], [0], [0], [1], [0, 0, 1, 1], [], []>} : vector<8x256xf32>, vector<256x256xf32>, vector<8x256xf32> -> vector<8x256xf32>
    %185 = arith.addf %181, %184 : vector<8x256xf32>
    %c2_236 = arith.constant 2 : index
    %c1_237 = arith.constant 1 : index
    %c0_238 = arith.constant 0 : index
    %c0_239 = arith.constant 0 : index
    %186 = vector.load %arg4[%c2_236, %c1_237, %c0_238, %c0_239] : memref<3x2x256x256xf32, #tpu.memory_space<vmem>>, vector<1x1x256x256xf32>
    %187 = vector.shape_cast %186 : vector<1x1x256x256xf32> to vector<256x256xf32>
    %cst_240 = arith.constant dense<0.000000e+00> : vector<8x256xf32>
    %188 = tpu.matmul %165, %187, %cst_240 {dimension_numbers = #tpu.dot_dimension_numbers<[1], [0], [0], [1], [0, 0, 1, 1], [], []>} : vector<8x256xf32>, vector<256x256xf32>, vector<8x256xf32> -> vector<8x256xf32>
    %189 = arith.addf %185, %188 : vector<8x256xf32>
    %190 = arith.maximumf %178, %189 : vector<8x256xf32>
    %c0_241 = arith.constant 0 : index
    %c0_242 = arith.constant 0 : index
    %c0_243 = arith.constant 0 : index
    %c0_244 = arith.constant 0 : index
    %191 = vector.load %arg4[%c0_241, %c0_242, %c0_243, %c0_244] : memref<3x2x256x256xf32, #tpu.memory_space<vmem>>, vector<1x1x256x256xf32>
    %192 = vector.shape_cast %191 : vector<1x1x256x256xf32> to vector<256x256xf32>
    %cst_245 = arith.constant dense<0.000000e+00> : vector<8x256xf32>
    %193 = tpu.matmul %163, %192, %cst_245 {dimension_numbers = #tpu.dot_dimension_numbers<[1], [0], [0], [1], [0, 0, 1, 1], [], []>} : vector<8x256xf32>, vector<256x256xf32>, vector<8x256xf32> -> vector<8x256xf32>
    %c1_246 = arith.constant 1 : index
    %c0_247 = arith.constant 0 : index
    %c0_248 = arith.constant 0 : index
    %c0_249 = arith.constant 0 : index
    %194 = vector.load %arg4[%c1_246, %c0_247, %c0_248, %c0_249] : memref<3x2x256x256xf32, #tpu.memory_space<vmem>>, vector<1x1x256x256xf32>
    %195 = vector.shape_cast %194 : vector<1x1x256x256xf32> to vector<256x256xf32>
    %cst_250 = arith.constant dense<0.000000e+00> : vector<8x256xf32>
    %196 = tpu.matmul %165, %195, %cst_250 {dimension_numbers = #tpu.dot_dimension_numbers<[1], [0], [0], [1], [0, 0, 1, 1], [], []>} : vector<8x256xf32>, vector<256x256xf32>, vector<8x256xf32> -> vector<8x256xf32>
    %197 = arith.addf %193, %196 : vector<8x256xf32>
    %c2_251 = arith.constant 2 : index
    %c0_252 = arith.constant 0 : index
    %c0_253 = arith.constant 0 : index
    %c0_254 = arith.constant 0 : index
    %198 = vector.load %arg4[%c2_251, %c0_252, %c0_253, %c0_254] : memref<3x2x256x256xf32, #tpu.memory_space<vmem>>, vector<1x1x256x256xf32>
    %199 = vector.shape_cast %198 : vector<1x1x256x256xf32> to vector<256x256xf32>
    %cst_255 = arith.constant dense<0.000000e+00> : vector<8x256xf32>
    %200 = tpu.matmul %167, %199, %cst_255 {dimension_numbers = #tpu.dot_dimension_numbers<[1], [0], [0], [1], [0, 0, 1, 1], [], []>} : vector<8x256xf32>, vector<256x256xf32>, vector<8x256xf32> -> vector<8x256xf32>
    %201 = arith.addf %197, %200 : vector<8x256xf32>
    %202 = arith.maximumf %190, %201 : vector<8x256xf32>
    %c0_256 = arith.constant 0 : index
    %c1_257 = arith.constant 1 : index
    %c0_258 = arith.constant 0 : index
    %c0_259 = arith.constant 0 : index
    %203 = vector.load %arg4[%c0_256, %c1_257, %c0_258, %c0_259] : memref<3x2x256x256xf32, #tpu.memory_space<vmem>>, vector<1x1x256x256xf32>
    %204 = vector.shape_cast %203 : vector<1x1x256x256xf32> to vector<256x256xf32>
    %cst_260 = arith.constant dense<0.000000e+00> : vector<8x256xf32>
    %205 = tpu.matmul %163, %204, %cst_260 {dimension_numbers = #tpu.dot_dimension_numbers<[1], [0], [0], [1], [0, 0, 1, 1], [], []>} : vector<8x256xf32>, vector<256x256xf32>, vector<8x256xf32> -> vector<8x256xf32>
    %c1_261 = arith.constant 1 : index
    %c1_262 = arith.constant 1 : index
    %c0_263 = arith.constant 0 : index
    %c0_264 = arith.constant 0 : index
    %206 = vector.load %arg4[%c1_261, %c1_262, %c0_263, %c0_264] : memref<3x2x256x256xf32, #tpu.memory_space<vmem>>, vector<1x1x256x256xf32>
    %207 = vector.shape_cast %206 : vector<1x1x256x256xf32> to vector<256x256xf32>
    %cst_265 = arith.constant dense<0.000000e+00> : vector<8x256xf32>
    %208 = tpu.matmul %165, %207, %cst_265 {dimension_numbers = #tpu.dot_dimension_numbers<[1], [0], [0], [1], [0, 0, 1, 1], [], []>} : vector<8x256xf32>, vector<256x256xf32>, vector<8x256xf32> -> vector<8x256xf32>
    %209 = arith.addf %205, %208 : vector<8x256xf32>
    %c2_266 = arith.constant 2 : index
    %c1_267 = arith.constant 1 : index
    %c0_268 = arith.constant 0 : index
    %c0_269 = arith.constant 0 : index
    %210 = vector.load %arg4[%c2_266, %c1_267, %c0_268, %c0_269] : memref<3x2x256x256xf32, #tpu.memory_space<vmem>>, vector<1x1x256x256xf32>
    %211 = vector.shape_cast %210 : vector<1x1x256x256xf32> to vector<256x256xf32>
    %cst_270 = arith.constant dense<0.000000e+00> : vector<8x256xf32>
    %212 = tpu.matmul %167, %211, %cst_270 {dimension_numbers = #tpu.dot_dimension_numbers<[1], [0], [0], [1], [0, 0, 1, 1], [], []>} : vector<8x256xf32>, vector<256x256xf32>, vector<8x256xf32> -> vector<8x256xf32>
    %213 = arith.addf %209, %212 : vector<8x256xf32>
    %214 = arith.maximumf %202, %213 : vector<8x256xf32>
    %c0_271 = arith.constant 0 : index
    %c0_272 = arith.constant 0 : index
    %215 = vector.load %arg5[%c0_271, %c0_272] : memref<1x256xf32, #tpu.memory_space<vmem>>, vector<1x256xf32>
    %216 = vector.broadcast %215 : vector<1x256xf32> to vector<8x256xf32>
    %217 = arith.addf %214, %216 : vector<8x256xf32>
    %218 = vector.shape_cast %217 : vector<8x256xf32> to vector<1x8x256xf32>
    %c0_273 = arith.constant 0 : index
    %c0_274 = arith.constant 0 : index
    %c0_275 = arith.constant 0 : index
    %219 = vector.load %arg6[%c0_273, %c0_274, %c0_275] : memref<1x8x256xf32, #tpu.memory_space<vmem>>, vector<1x8x256xf32>
    tpu.vector_store %arg6[%c0_273, %c0_274, %c0_275], %218 {strides = array<i32>} : memref<1x8x256xf32, #tpu.memory_space<vmem>>, vector<1x8x256xf32>,
    return
  }
  func.func @transform_0(%arg0: i32) -> (i32, i32, i32, i32) {
    %c0_i32 = arith.constant 0 : i32
    %c0_i32_0 = arith.constant 0 : i32
    %c0_i32_1 = arith.constant 0 : i32
    %c0_i32_2 = arith.constant 0 : i32
    return %arg0, %c0_i32, %c0_i32_0, %c0_i32_1 : i32, i32, i32, i32
  }
  func.func @transform_1(%arg0: i32) -> (i32, i32, i32, i32) {
    %c0_i32 = arith.constant 0 : i32
    %c0_i32_0 = arith.constant 0 : i32
    %c0_i32_1 = arith.constant 0 : i32
    %c0_i32_2 = arith.constant 0 : i32
    %c0_i32_3 = arith.constant 0 : i32
    return %c0_i32, %c0_i32_0, %c0_i32_1, %c0_i32_2 : i32, i32, i32, i32
  }
  func.func @transform_2(%arg0: i32) -> (i32, i32) {
    %c0_i32 = arith.constant 0 : i32
    %c0_i32_0 = arith.constant 0 : i32
    %c0_i32_1 = arith.constant 0 : i32
    return %c0_i32, %c0_i32_0 : i32, i32
  }
  func.func @transform_3(%arg0: i32) -> (i32, i32, i32, i32) {
    %c0_i32 = arith.constant 0 : i32
    %c0_i32_0 = arith.constant 0 : i32
    %c0_i32_1 = arith.constant 0 : i32
    %c0_i32_2 = arith.constant 0 : i32
    %c0_i32_3 = arith.constant 0 : i32
    return %c0_i32, %c0_i32_0, %c0_i32_1, %c0_i32_2 : i32, i32, i32, i32
  }
  func.func @transform_4(%arg0: i32) -> (i32, i32) {
    %c0_i32 = arith.constant 0 : i32
    %c0_i32_0 = arith.constant 0 : i32
    %c0_i32_1 = arith.constant 0 : i32
    return %c0_i32, %c0_i32_0 : i32, i32
  }
  func.func @transform_5(%arg0: i32) -> (i32, i32, i32) {
    %c0_i32 = arith.constant 0 : i32
    %c0_i32_0 = arith.constant 0 : i32
    %c0_i32_1 = arith.constant 0 : i32
    return %arg0, %c0_i32, %c0_i32_0 : i32, i32, i32
  }
}

module attributes {stable_mosaic.version = 11 : i64} {
  func.func @head_kernel(%arg0: i32, %arg1: memref<8x1024xf32, #tpu.memory_space<vmem>>, %arg2: memref<1024x128xf32, #tpu.memory_space<vmem>>, %arg3: memref<1x128xf32, #tpu.memory_space<vmem>>, %arg4: memref<128x128xf32, #tpu.memory_space<vmem>>, %arg5: memref<1x128xf32, #tpu.memory_space<vmem>>, %arg6: memref<8x128xf32, #tpu.memory_space<vmem>>) attributes {dimension_semantics = [#tpu.dimension_semantics<parallel>], iteration_bounds = array<i64: 1>, scalar_prefetch = 0 : i64, scratch_operands = 0 : i64, tpu.core_type = #tpu.core_type<tc>, window_params = [{transform_indices = @transform_0, window_bounds = array<i64: 8, 1024>}, {pipeline_mode = #tpu.pipeline_mode<synchronous>, transform_indices = @transform_1, window_bounds = array<i64: 1024, 128>}, {pipeline_mode = #tpu.pipeline_mode<synchronous>, transform_indices = @transform_2, window_bounds = array<i64: 1, 128>}, {pipeline_mode = #tpu.pipeline_mode<synchronous>, transform_indices = @transform_3, window_bounds = array<i64: 128, 128>}, {pipeline_mode = #tpu.pipeline_mode<synchronous>, transform_indices = @transform_4, window_bounds = array<i64: 1, 128>}, {transform_indices = @transform_5, window_bounds = array<i64: 8, 128>}]} {
    %c0 = arith.constant 0 : index
    %c0_0 = arith.constant 0 : index
    %0 = vector.load %arg1[%c0, %c0_0] : memref<8x1024xf32, #tpu.memory_space<vmem>>, vector<8x1024xf32>
    %c0_1 = arith.constant 0 : index
    %c0_2 = arith.constant 0 : index
    %1 = vector.load %arg2[%c0_1, %c0_2] : memref<1024x128xf32, #tpu.memory_space<vmem>>, vector<1024x128xf32>
    %cst = arith.constant dense<0.000000e+00> : vector<8x128xf32>
    %2 = tpu.matmul %0, %1, %cst {dimension_numbers = #tpu.dot_dimension_numbers<[1], [0], [0], [1], [0, 0, 1, 1], [], []>} : vector<8x1024xf32>, vector<1024x128xf32>, vector<8x128xf32> -> vector<8x128xf32>
    %c0_3 = arith.constant 0 : index
    %c0_4 = arith.constant 0 : index
    %3 = vector.load %arg3[%c0_3, %c0_4] : memref<1x128xf32, #tpu.memory_space<vmem>>, vector<1x128xf32>
    %4 = vector.broadcast %3 : vector<1x128xf32> to vector<8x128xf32>
    %5 = arith.addf %2, %4 : vector<8x128xf32>
    %cst_5 = arith.constant 0.000000e+00 : f32
    %6 = vector.broadcast %cst_5 : f32 to vector<8x128xf32>
    %7 = arith.maximumf %5, %6 : vector<8x128xf32>
    %c0_6 = arith.constant 0 : index
    %c0_7 = arith.constant 0 : index
    %8 = vector.load %arg4[%c0_6, %c0_7] : memref<128x128xf32, #tpu.memory_space<vmem>>, vector<128x128xf32>
    %cst_8 = arith.constant dense<0.000000e+00> : vector<8x128xf32>
    %9 = tpu.matmul %7, %8, %cst_8 {dimension_numbers = #tpu.dot_dimension_numbers<[1], [0], [0], [1], [0, 0, 1, 1], [], []>} : vector<8x128xf32>, vector<128x128xf32>, vector<8x128xf32> -> vector<8x128xf32>
    %c0_9 = arith.constant 0 : index
    %c0_10 = arith.constant 0 : index
    %10 = vector.load %arg5[%c0_9, %c0_10] : memref<1x128xf32, #tpu.memory_space<vmem>>, vector<1x128xf32>
    %11 = vector.broadcast %10 : vector<1x128xf32> to vector<8x128xf32>
    %12 = arith.addf %9, %11 : vector<8x128xf32>
    %cst_11 = arith.constant dense<0xFF800000> : vector<8xf32>
    %13 = vector.multi_reduction <maximumf>, %12, %cst_11 [1] : vector<8x128xf32> to vector<8xf32>
    %14 = vector.shape_cast %13 : vector<8xf32> to vector<8x1xf32>
    %15 = vector.broadcast %14 : vector<8x1xf32> to vector<8x128xf32>
    %16 = arith.subf %12, %15 : vector<8x128xf32>
    %17 = math.exp %16 : vector<8x128xf32>
    %cst_12 = arith.constant dense<0.000000e+00> : vector<8xf32>
    %18 = vector.multi_reduction <add>, %17, %cst_12 [1] : vector<8x128xf32> to vector<8xf32>
    %19 = vector.shape_cast %18 : vector<8xf32> to vector<8x1xf32>
    %20 = math.log %19 : vector<8x1xf32>
    %21 = vector.broadcast %20 : vector<8x1xf32> to vector<8x128xf32>
    %22 = arith.subf %16, %21 : vector<8x128xf32>
    %c0_13 = arith.constant 0 : index
    %c0_14 = arith.constant 0 : index
    %23 = vector.load %arg6[%c0_13, %c0_14] : memref<8x128xf32, #tpu.memory_space<vmem>>, vector<8x128xf32>
    tpu.vector_store %arg6[%c0_13, %c0_14], %22 {strides = array<i32>} : memref<8x128xf32, #tpu.memory_space<vmem>>, vector<8x128xf32>,
    return
  }
  func.func @transform_0(%arg0: i32) -> (i32, i32) {
    %c0_i32 = arith.constant 0 : i32
    %c0_i32_0 = arith.constant 0 : i32
    return %arg0, %c0_i32 : i32, i32
  }
  func.func @transform_1(%arg0: i32) -> (i32, i32) {
    %c0_i32 = arith.constant 0 : i32
    %c0_i32_0 = arith.constant 0 : i32
    %c0_i32_1 = arith.constant 0 : i32
    return %c0_i32, %c0_i32_0 : i32, i32
  }
  func.func @transform_2(%arg0: i32) -> (i32, i32) {
    %c0_i32 = arith.constant 0 : i32
    %c0_i32_0 = arith.constant 0 : i32
    %c0_i32_1 = arith.constant 0 : i32
    return %c0_i32, %c0_i32_0 : i32, i32
  }
  func.func @transform_3(%arg0: i32) -> (i32, i32) {
    %c0_i32 = arith.constant 0 : i32
    %c0_i32_0 = arith.constant 0 : i32
    %c0_i32_1 = arith.constant 0 : i32
    return %c0_i32, %c0_i32_0 : i32, i32
  }
  func.func @transform_4(%arg0: i32) -> (i32, i32) {
    %c0_i32 = arith.constant 0 : i32
    %c0_i32_0 = arith.constant 0 : i32
    %c0_i32_1 = arith.constant 0 : i32
    return %c0_i32, %c0_i32_0 : i32, i32
  }
  func.func @transform_5(%arg0: i32) -> (i32, i32) {
    %c0_i32 = arith.constant 0 : i32
    %c0_i32_0 = arith.constant 0 : i32
    return %arg0, %c0_i32 : i32, i32
  }
}

</mosaic_0001>

<llo_original>
// kernel: deep_forward.3
$region0: #{deep_forward.3}
  #allocation0 [shape = 'u32[]', space=smem, size = 0x4, offset = 0x4, fixed_abs, tag = 'smem constant byte address 0x4 - core index']
  #allocation1 [shape = 'u32[144,128]{1,0:T(1,128)}', space=vmem, size = 0x12000, scoped, tag = 'internal scratch']
  %s0 = inlined_call_operand.vmem [shape: f32[8,1024], index: 0, kind: input, shape index: {}]
  %s1 = inlined_call_operand.vmem [shape: f32[1024,128], index: 1, kind: input, shape index: {}]
  %s2 = inlined_call_operand.vmem [shape: f32[1,128], index: 2, kind: input, shape index: {}]
  %s3 = inlined_call_operand.vmem [shape: f32[128,128], index: 3, kind: input, shape index: {}]
  %s4 = inlined_call_operand.vmem [shape: f32[1,128], index: 4, kind: input, shape index: {}]
  %s5 = inlined_call_operand.vmem [shape: f32[8,128], index: 5, kind: output, shape index: {}]
  %s6 = sld [smem:[#allocation0]]
  $region30: #{deep_forward.3} parent=0
    _
  %s8 = ssub.s32 1, %s6
  %s9 = scalar_select 0, %s8, %s6
  // Predicated region
  $region2: #{deep_forward.3} parent=0 // pred_check
    _
  $region3: #{deep_forward.3} parent=0 // pred_check_branch
    %11 = sbr.rel (0) target = $region5
  $region4: #{deep_forward.3} parent=0 // pred_region
    _
  $region5: #{deep_forward.3} parent=0 // pred_fallthru
    _
  // Predicated region
  $region6: #{deep_forward.3} parent=0 // pred_check
    _
  $region7: #{deep_forward.3} parent=0 // pred_check_branch
    %13 = sbr.rel (0) target = $region9
  $region8: #{deep_forward.3} parent=0 // pred_region
    _
  $region9: #{deep_forward.3} parent=0 // pred_fallthru
    _
  // Predicated region
  $region10: #{deep_forward.3} parent=0 // pred_check
    _
  $region11: #{deep_forward.3} parent=0 // pred_check_branch
    %15 = sbr.rel (0) target = $region13
  $region12: #{deep_forward.3} parent=0 // pred_region
    _
  $region13: #{deep_forward.3} parent=0 // pred_fallthru
    _
  // Predicated region
  $region14: #{deep_forward.3} parent=0 // pred_check
    _
  $region15: #{deep_forward.3} parent=0 // pred_check_branch
    %17 = sbr.rel (0) target = $region17
  $region16: #{deep_forward.3} parent=0 // pred_region
    _
  $region17: #{deep_forward.3} parent=0 // pred_fallthru
    _
  // Predicated region
  $region18: #{deep_forward.3} parent=0 // pred_check
    _
  $region19: #{deep_forward.3} parent=0 // pred_check_branch
    %19 = sbr.rel (0) target = $region21
  $region20: #{deep_forward.3} parent=0 // pred_region
    _
  $region21: #{deep_forward.3} parent=0 // pred_fallthru
    _
  %v20 = vld [vmem:[%s0] sm:$0xff]
  %v21 = vld [vmem:[%s0 + $0x8] sm:$0xff]
  %v22 = vld [vmem:[%s0 + $0x10] sm:$0xff]
  %v23 = vld [vmem:[%s0 + $0x18] sm:$0xff]
  %v24 = vld [vmem:[%s0 + $0x20] sm:$0xff]
  %v25 = vld [vmem:[%s0 + $0x28] sm:$0xff]
  %v26 = vld [vmem:[%s0 + $0x30] sm:$0xff]
  %v27 = vld [vmem:[%s0 + $0x38] sm:$0xff]
  %v28 = vld [vmem:[%s1] sm:$0xff]
  %v29 = vld [vmem:[%s1 + $0x8] sm:$0xff]
  %v30 = vld [vmem:[%s1 + $0x10] sm:$0xff]
  %v31 = vld [vmem:[%s1 + $0x18] sm:$0xff]
  %v32 = vld [vmem:[%s1 + $0x20] sm:$0xff]
  %v33 = vld [vmem:[%s1 + $0x28] sm:$0xff]
  %v34 = vld [vmem:[%s1 + $0x30] sm:$0xff]
  %v35 = vld [vmem:[%s1 + $0x38] sm:$0xff]
  %v36 = vld [vmem:[%s1 + $0x40] sm:$0xff]
  %v37 = vld [vmem:[%s1 + $0x48] sm:$0xff]
  %v38 = vld [vmem:[%s1 + $0x50] sm:$0xff]
  %v39 = vld [vmem:[%s1 + $0x58] sm:$0xff]
  %v40 = vld [vmem:[%s1 + $0x60] sm:$0xff]
  %v41 = vld [vmem:[%s1 + $0x68] sm:$0xff]
  %v42 = vld [vmem:[%s1 + $0x70] sm:$0xff]
  %v43 = vld [vmem:[%s1 + $0x78] sm:$0xff]
  %v44 = vld [vmem:[%s1 + $0x80] sm:$0xff]
  %v45 = vld [vmem:[%s1 + $0x88] sm:$0xff]
  %v46 = vld [vmem:[%s1 + $0x90] sm:$0xff]
  %v47 = vld [vmem:[%s1 + $0x98] sm:$0xff]
  %v48 = vld [vmem:[%s1 + $0xa0] sm:$0xff]
  %v49 = vld [vmem:[%s1 + $0xa8] sm:$0xff]
  %v50 = vld [vmem:[%s1 + $0xb0] sm:$0xff]
  %v51 = vld [vmem:[%s1 + $0xb8] sm:$0xff]
  %v52 = vld [vmem:[%s1 + $0xc0] sm:$0xff]
  %v53 = vld [vmem:[%s1 + $0xc8] sm:$0xff]
  %v54 = vld [vmem:[%s1 + $0xd0] sm:$0xff]
  %v55 = vld [vmem:[%s1 + $0xd8] sm:$0xff]
  %v56 = vld [vmem:[%s1 + $0xe0] sm:$0xff]
  %v57 = vld [vmem:[%s1 + $0xe8] sm:$0xff]
  %v58 = vld [vmem:[%s1 + $0xf0] sm:$0xff]
  %v59 = vld [vmem:[%s1 + $0xf8] sm:$0xff]
  %v60 = vld [vmem:[%s1 + $0x100] sm:$0xff]
  %v61 = vld [vmem:[%s1 + $0x108] sm:$0xff]
  %v62 = vld [vmem:[%s1 + $0x110] sm:$0xff]
  %v63 = vld [vmem:[%s1 + $0x118] sm:$0xff]
  %v64 = vld [vmem:[%s1 + $0x120] sm:$0xff]
  %v65 = vld [vmem:[%s1 + $0x128] sm:$0xff]
  %v66 = vld [vmem:[%s1 + $0x130] sm:$0xff]
  %v67 = vld [vmem:[%s1 + $0x138] sm:$0xff]
  %v68 = vld [vmem:[%s1 + $0x140] sm:$0xff]
  %v69 = vld [vmem:[%s1 + $0x148] sm:$0xff]
  %v70 = vld [vmem:[%s1 + $0x150] sm:$0xff]
  %v71 = vld [vmem:[%s1 + $0x158] sm:$0xff]
  %v72 = vld [vmem:[%s1 + $0x160] sm:$0xff]
  %v73 = vld [vmem:[%s1 + $0x168] sm:$0xff]
  %v74 = vld [vmem:[%s1 + $0x170] sm:$0xff]
  %v75 = vld [vmem:[%s1 + $0x178] sm:$0xff]
  %v76 = vld [vmem:[%s1 + $0x180] sm:$0xff]
  %v77 = vld [vmem:[%s1 + $0x188] sm:$0xff]
  %v78 = vld [vmem:[%s1 + $0x190] sm:$0xff]
  %v79 = vld [vmem:[%s1 + $0x198] sm:$0xff]
  %v80 = vld [vmem:[%s1 + $0x1a0] sm:$0xff]
  %v81 = vld [vmem:[%s1 + $0x1a8] sm:$0xff]
  %v82 = vld [vmem:[%s1 + $0x1b0] sm:$0xff]
  %v83 = vld [vmem:[%s1 + $0x1b8] sm:$0xff]
  %v84 = vld [vmem:[%s1 + $0x1c0] sm:$0xff]
  %v85 = vld [vmem:[%s1 + $0x1c8] sm:$0xff]
  %v86 = vld [vmem:[%s1 + $0x1d0] sm:$0xff]
  %v87 = vld [vmem:[%s1 + $0x1d8] sm:$0xff]
  %v88 = vld [vmem:[%s1 + $0x1e0] sm:$0xff]
  %v89 = vld [vmem:[%s1 + $0x1e8] sm:$0xff]
  %v90 = vld [vmem:[%s1 + $0x1f0] sm:$0xff]
  %v91 = vld [vmem:[%s1 + $0x1f8] sm:$0xff]
  %v92 = vld [vmem:[%s1 + $0x200] sm:$0xff]
  %v93 = vld [vmem:[%s1 + $0x208] sm:$0xff]
  %v94 = vld [vmem:[%s1 + $0x210] sm:$0xff]
  %v95 = vld [vmem:[%s1 + $0x218] sm:$0xff]
  %v96 = vld [vmem:[%s1 + $0x220] sm:$0xff]
  %v97 = vld [vmem:[%s1 + $0x228] sm:$0xff]
  %v98 = vld [vmem:[%s1 + $0x230] sm:$0xff]
  %v99 = vld [vmem:[%s1 + $0x238] sm:$0xff]
  %v100 = vld [vmem:[%s1 + $0x240] sm:$0xff]
  %v101 = vld [vmem:[%s1 + $0x248] sm:$0xff]
  %v102 = vld [vmem:[%s1 + $0x250] sm:$0xff]
  %v103 = vld [vmem:[%s1 + $0x258] sm:$0xff]
  %v104 = vld [vmem:[%s1 + $0x260] sm:$0xff]
  %v105 = vld [vmem:[%s1 + $0x268] sm:$0xff]
  %v106 = vld [vmem:[%s1 + $0x270] sm:$0xff]
  %v107 = vld [vmem:[%s1 + $0x278] sm:$0xff]
  %v108 = vld [vmem:[%s1 + $0x280] sm:$0xff]
  %v109 = vld [vmem:[%s1 + $0x288] sm:$0xff]
  %v110 = vld [vmem:[%s1 + $0x290] sm:$0xff]
  %v111 = vld [vmem:[%s1 + $0x298] sm:$0xff]
  %v112 = vld [vmem:[%s1 + $0x2a0] sm:$0xff]
  %v113 = vld [vmem:[%s1 + $0x2a8] sm:$0xff]
  %v114 = vld [vmem:[%s1 + $0x2b0] sm:$0xff]
  %v115 = vld [vmem:[%s1 + $0x2b8] sm:$0xff]
  %v116 = vld [vmem:[%s1 + $0x2c0] sm:$0xff]
  %v117 = vld [vmem:[%s1 + $0x2c8] sm:$0xff]
  %v118 = vld [vmem:[%s1 + $0x2d0] sm:$0xff]
  %v119 = vld [vmem:[%s1 + $0x2d8] sm:$0xff]
  %v120 = vld [vmem:[%s1 + $0x2e0] sm:$0xff]
  %v121 = vld [vmem:[%s1 + $0x2e8] sm:$0xff]
  %v122 = vld [vmem:[%s1 + $0x2f0] sm:$0xff]
  %v123 = vld [vmem:[%s1 + $0x2f8] sm:$0xff]
  %v124 = vld [vmem:[%s1 + $0x300] sm:$0xff]
  %v125 = vld [vmem:[%s1 + $0x308] sm:$0xff]
  %v126 = vld [vmem:[%s1 + $0x310] sm:$0xff]
  %v127 = vld [vmem:[%s1 + $0x318] sm:$0xff]
  %v128 = vld [vmem:[%s1 + $0x320] sm:$0xff]
  %v129 = vld [vmem:[%s1 + $0x328] sm:$0xff]
  %v130 = vld [vmem:[%s1 + $0x330] sm:$0xff]
  %v131 = vld [vmem:[%s1 + $0x338] sm:$0xff]
  %v132 = vld [vmem:[%s1 + $0x340] sm:$0xff]
  %v133 = vld [vmem:[%s1 + $0x348] sm:$0xff]
  %v134 = vld [vmem:[%s1 + $0x350] sm:$0xff]
  %v135 = vld [vmem:[%s1 + $0x358] sm:$0xff]
  %v136 = vld [vmem:[%s1 + $0x360] sm:$0xff]
  %v137 = vld [vmem:[%s1 + $0x368] sm:$0xff]
  %v138 = vld [vmem:[%s1 + $0x370] sm:$0xff]
  %v139 = vld [vmem:[%s1 + $0x378] sm:$0xff]
  %v140 = vld [vmem:[%s1 + $0x380] sm:$0xff]
  %v141 = vld [vmem:[%s1 + $0x388] sm:$0xff]
  %v142 = vld [vmem:[%s1 + $0x390] sm:$0xff]
  %v143 = vld [vmem:[%s1 + $0x398] sm:$0xff]
  %v144 = vld [vmem:[%s1 + $0x3a0] sm:$0xff]
  %v145 = vld [vmem:[%s1 + $0x3a8] sm:$0xff]
  %v146 = vld [vmem:[%s1 + $0x3b0] sm:$0xff]
  %v147 = vld [vmem:[%s1 + $0x3b8] sm:$0xff]
  %v148 = vld [vmem:[%s1 + $0x3c0] sm:$0xff]
  %v149 = vld [vmem:[%s1 + $0x3c8] sm:$0xff]
  %v150 = vld [vmem:[%s1 + $0x3d0] sm:$0xff]
  %v151 = vld [vmem:[%s1 + $0x3d8] sm:$0xff]
  %v152 = vld [vmem:[%s1 + $0x3e0] sm:$0xff]
  %v153 = vld [vmem:[%s1 + $0x3e8] sm:$0xff]
  %v154 = vld [vmem:[%s1 + $0x3f0] sm:$0xff]
  %v155 = vld [vmem:[%s1 + $0x3f8] sm:$0xff]
  %v156 = vld [vmem:[%s2] sm:$0x1]
  %v158 = vlaneseq
  %v159 = vshrl.u32 %v158, 7
  %v160 = vsub.s32 0, %v159
  %v161 = vrot.slane %v156, %v160
  %163 = vmatprep.subr.mxu0 0.0
  %164 = vmatpush1.msra.mxu0 %v28
  %165 = vmatprep.subr.mxu0 0.0
  %166 = vmatpush1.msra.mxu0 %v29
  %167 = vmatprep.subr.mxu0 0.0
  %168 = vmatpush1.msra.mxu0 %v30
  %169 = vmatprep.subr.mxu0 0.0
  %170 = vmatpush1.msra.mxu0 %v31
  %171 = vmatprep.subr.mxu0 0.0
  %172 = vmatpush1.msra.mxu0 %v32
  %173 = vmatprep.subr.mxu0 0.0
  %174 = vmatpush1.msra.mxu0 %v33
  %175 = vmatprep.subr.mxu0 0.0
  %176 = vmatpush1.msra.mxu0 %v34
  %177 = vmatprep.subr.mxu0 0.0
  %178 = vmatpush1.msra.mxu0 %v35
  %179 = vmatprep.subr.mxu0 0.0
  %180 = vmatpush1.msra.mxu0 %v36
  %181 = vmatprep.subr.mxu0 0.0
  %182 = vmatpush1.msra.mxu0 %v37
  %183 = vmatprep.subr.mxu0 0.0
  %184 = vmatpush1.msra.mxu0 %v38
  %185 = vmatprep.subr.mxu0 0.0
  %186 = vmatpush1.msra.mxu0 %v39
  %187 = vmatprep.subr.mxu0 0.0
  %188 = vmatpush1.msra.mxu0 %v40
  %189 = vmatprep.subr.mxu0 0.0
  %190 = vmatpush1.msra.mxu0 %v41
  %191 = vmatprep.subr.mxu0 0.0
  %192 = vmatpush1.msra.mxu0 %v42
  %193 = vmatprep.subr.mxu0 0.0
  %194 = vmatpush1.msra.mxu0 %v43
  %195 = vmatprep.subr.mxu0 0.0
  %196 = vmatpush1.msra.mxu0 %v44
  %197 = vmatprep.subr.mxu0 0.0
  %198 = vmatpush1.msra.mxu0 %v45
  %199 = vmatprep.subr.mxu0 0.0
  %200 = vmatpush1.msra.mxu0 %v46
  %201 = vmatprep.subr.mxu0 0.0
  %202 = vmatpush1.msra.mxu0 %v47
  %203 = vmatprep.subr.mxu0 0.0
  %204 = vmatpush1.msra.mxu0 %v48
  %205 = vmatprep.subr.mxu0 0.0
  %206 = vmatpush1.msra.mxu0 %v49
  %207 = vmatprep.subr.mxu0 0.0
  %208 = vmatpush1.msra.mxu0 %v50
  %209 = vmatprep.subr.mxu0 0.0
  %210 = vmatpush1.msra.mxu0 %v51
  %211 = vmatprep.subr.mxu0 0.0
  %212 = vmatpush1.msra.mxu0 %v52
  %213 = vmatprep.subr.mxu0 0.0
  %214 = vmatpush1.msra.mxu0 %v53
  %215 = vmatprep.subr.mxu0 0.0
  %216 = vmatpush1.msra.mxu0 %v54
  %217 = vmatprep.subr.mxu0 0.0
  %218 = vmatpush1.msra.mxu0 %v55
  %219 = vmatprep.subr.mxu0 0.0
  %220 = vmatpush1.msra.mxu0 %v56
  %221 = vmatprep.subr.mxu0 0.0
  %222 = vmatpush1.msra.mxu0 %v57
  %223 = vmatprep.subr.mxu0 0.0
  %224 = vmatpush1.msra.mxu0 %v58
  %225 = vmatprep.subr.mxu0 0.0
  %226 = vmatpush1.msra.mxu0 %v59
  %227 = vmatprep.mubr.f32.mxu0 %v21
  %228 = vmatmul.mubr.f32.gmra.mrb[0].mxu0 %v20
  %v229 = vpop.f32.mrb[0].mxu0
  %v230 = vadd.f32 %v161, %v229
  %v231 = vpop.f32.mrb[0].mxu0
  %232 = vdwg.mxu0
  %233 = vmatprep.subr.mxu0 0.0
  %234 = vmatpush1.msra.mxu0 %v60
  %235 = vmatprep.subr.mxu0 0.0
  %236 = vmatpush1.msra.mxu0 %v61
  %237 = vmatprep.subr.mxu0 0.0
  %238 = vmatpush1.msra.mxu0 %v62
  %239 = vmatprep.subr.mxu0 0.0
  %240 = vmatpush1.msra.mxu0 %v63
  %241 = vmatprep.subr.mxu0 0.0
  %242 = vmatpush1.msra.mxu0 %v64
  %243 = vmatprep.subr.mxu0 0.0
  %244 = vmatpush1.msra.mxu0 %v65
  %245 = vmatprep.subr.mxu0 0.0
  %246 = vmatpush1.msra.mxu0 %v66
  %247 = vmatprep.subr.mxu0 0.0
  %248 = vmatpush1.msra.mxu0 %v67
  %249 = vmatprep.subr.mxu0 0.0
  %250 = vmatpush1.msra.mxu0 %v68
  %251 = vmatprep.subr.mxu0 0.0
  %252 = vmatpush1.msra.mxu0 %v69
  %253 = vmatprep.subr.mxu0 0.0
  %254 = vmatpush1.msra.mxu0 %v70
  %255 = vmatprep.subr.mxu0 0.0
  %256 = vmatpush1.msra.mxu0 %v71
  %257 = vmatprep.subr.mxu0 0.0
  %258 = vmatpush1.msra.mxu0 %v72
  %259 = vmatprep.subr.mxu0 0.0
  %260 = vmatpush1.msra.mxu0 %v73
  %261 = vmatprep.subr.mxu0 0.0
  %262 = vmatpush1.msra.mxu0 %v74
  %263 = vmatprep.subr.mxu0 0.0
  %264 = vmatpush1.msra.mxu0 %v75
  %265 = vmatprep.subr.mxu0 0.0
  %266 = vmatpush1.msra.mxu0 %v76
  %267 = vmatprep.subr.mxu0 0.0
  %268 = vmatpush1.msra.mxu0 %v77
  %269 = vmatprep.subr.mxu0 0.0
  %270 = vmatpush1.msra.mxu0 %v78
  %271 = vmatprep.subr.mxu0 0.0
  %272 = vmatpush1.msra.mxu0 %v79
  %273 = vmatprep.subr.mxu0 0.0
  %274 = vmatpush1.msra.mxu0 %v80
  %275 = vmatprep.subr.mxu0 0.0
  %276 = vmatpush1.msra.mxu0 %v81
  %277 = vmatprep.subr.mxu0 0.0
  %278 = vmatpush1.msra.mxu0 %v82
  %279 = vmatprep.subr.mxu0 0.0
  %280 = vmatpush1.msra.mxu0 %v83
  %281 = vmatprep.subr.mxu0 0.0
  %282 = vmatpush1.msra.mxu0 %v84
  %283 = vmatprep.subr.mxu0 0.0
  %284 = vmatpush1.msra.mxu0 %v85
  %285 = vmatprep.subr.mxu0 0.0
  %286 = vmatpush1.msra.mxu0 %v86
  %287 = vmatprep.subr.mxu0 0.0
  %288 = vmatpush1.msra.mxu0 %v87
  %289 = vmatprep.subr.mxu0 0.0
  %290 = vmatpush1.msra.mxu0 %v88
  %291 = vmatprep.subr.mxu0 0.0
  %292 = vmatpush1.msra.mxu0 %v89
  %293 = vmatprep.subr.mxu0 0.0
  %294 = vmatpush1.msra.mxu0 %v90
  %295 = vmatprep.subr.mxu0 0.0
  %296 = vmatpush1.msra.mxu0 %v91
  %297 = vmatprep.mubr.f32.mxu0 %v23
  %298 = vmatmul.mubr.f32.gmra.mrb[0].mxu0 %v22
  %v299 = vpop.f32.mrb[0].mxu0
  %v300 = vadd.f32 %v230, %v299
  %v301 = vpop.f32.mrb[0].mxu0
  %302 = vdwg.mxu0
  %303 = vmatprep.subr.mxu0 0.0
  %304 = vmatpush1.msra.mxu0 %v92
  %305 = vmatprep.subr.mxu0 0.0
  %306 = vmatpush1.msra.mxu0 %v93
  %307 = vmatprep.subr.mxu0 0.0
  %308 = vmatpush1.msra.mxu0 %v94
  %309 = vmatprep.subr.mxu0 0.0
  %310 = vmatpush1.msra.mxu0 %v95
  %311 = vmatprep.subr.mxu0 0.0
  %312 = vmatpush1.msra.mxu0 %v96
  %313 = vmatprep.subr.mxu0 0.0
  %314 = vmatpush1.msra.mxu0 %v97
  %315 = vmatprep.subr.mxu0 0.0
  %316 = vmatpush1.msra.mxu0 %v98
  %317 = vmatprep.subr.mxu0 0.0
  %318 = vmatpush1.msra.mxu0 %v99
  %319 = vmatprep.subr.mxu0 0.0
  %320 = vmatpush1.msra.mxu0 %v100
  %321 = vmatprep.subr.mxu0 0.0
  %322 = vmatpush1.msra.mxu0 %v101
  %323 = vmatprep.subr.mxu0 0.0
  %324 = vmatpush1.msra.mxu0 %v102
  %325 = vmatprep.subr.mxu0 0.0
  %326 = vmatpush1.msra.mxu0 %v103
  %327 = vmatprep.subr.mxu0 0.0
  %328 = vmatpush1.msra.mxu0 %v104
  %329 = vmatprep.subr.mxu0 0.0
  %330 = vmatpush1.msra.mxu0 %v105
  %331 = vmatprep.subr.mxu0 0.0
  %332 = vmatpush1.msra.mxu0 %v106
  %333 = vmatprep.subr.mxu0 0.0
  %334 = vmatpush1.msra.mxu0 %v107
  %335 = vmatprep.subr.mxu0 0.0
  %336 = vmatpush1.msra.mxu0 %v108
  %337 = vmatprep.subr.mxu0 0.0
  %338 = vmatpush1.msra.mxu0 %v109
  %339 = vmatprep.subr.mxu0 0.0
  %340 = vmatpush1.msra.mxu0 %v110
  %341 = vmatprep.subr.mxu0 0.0
  %342 = vmatpush1.msra.mxu0 %v111
  %343 = vmatprep.subr.mxu0 0.0
  %344 = vmatpush1.msra.mxu0 %v112
  %345 = vmatprep.subr.mxu0 0.0
  %346 = vmatpush1.msra.mxu0 %v113
  %347 = vmatprep.subr.mxu0 0.0
  %348 = vmatpush1.msra.mxu0 %v114
  %349 = vmatprep.subr.mxu0 0.0
  %350 = vmatpush1.msra.mxu0 %v115
  %351 = vmatprep.subr.mxu0 0.0
  %352 = vmatpush1.msra.mxu0 %v116
  %353 = vmatprep.subr.mxu0 0.0
  %354 = vmatpush1.msra.mxu0 %v117
  %355 = vmatprep.subr.mxu0 0.0
  %356 = vmatpush1.msra.mxu0 %v118
  %357 = vmatprep.subr.mxu0 0.0
  %358 = vmatpush1.msra.mxu0 %v119
  %359 = vmatprep.subr.mxu0 0.0
  %360 = vmatpush1.msra.mxu0 %v120
  %361 = vmatprep.subr.mxu0 0.0
  %362 = vmatpush1.msra.mxu0 %v121
  %363 = vmatprep.subr.mxu0 0.0
  %364 = vmatpush1.msra.mxu0 %v122
  %365 = vmatprep.subr.mxu0 0.0
  %366 = vmatpush1.msra.mxu0 %v123
  %367 = vmatprep.mubr.f32.mxu0 %v25
  %368 = vmatmul.mubr.f32.gmra.mrb[0].mxu0 %v24
  %v369 = vpop.f32.mrb[0].mxu0
  %v370 = vadd.f32 %v300, %v369
  %v371 = vpop.f32.mrb[0].mxu0
  %372 = vdwg.mxu0
  %373 = vmatprep.subr.mxu0 0.0
  %374 = vmatpush1.msra.mxu0 %v124
  %375 = vmatprep.subr.mxu0 0.0
  %376 = vmatpush1.msra.mxu0 %v125
  %377 = vmatprep.subr.mxu0 0.0
  %378 = vmatpush1.msra.mxu0 %v126
  %379 = vmatprep.subr.mxu0 0.0
  %380 = vmatpush1.msra.mxu0 %v127
  %381 = vmatprep.subr.mxu0 0.0
  %382 = vmatpush1.msra.mxu0 %v128
  %383 = vmatprep.subr.mxu0 0.0
  %384 = vmatpush1.msra.mxu0 %v129
  %385 = vmatprep.subr.mxu0 0.0
  %386 = vmatpush1.msra.mxu0 %v130
  %387 = vmatprep.subr.mxu0 0.0
  %388 = vmatpush1.msra.mxu0 %v131
  %389 = vmatprep.subr.mxu0 0.0
  %390 = vmatpush1.msra.mxu0 %v132
  %391 = vmatprep.subr.mxu0 0.0
  %392 = vmatpush1.msra.mxu0 %v133
  %393 = vmatprep.subr.mxu0 0.0
  %394 = vmatpush1.msra.mxu0 %v134
  %395 = vmatprep.subr.mxu0 0.0
  %396 = vmatpush1.msra.mxu0 %v135
  %397 = vmatprep.subr.mxu0 0.0
  %398 = vmatpush1.msra.mxu0 %v136
  %399 = vmatprep.subr.mxu0 0.0
  %400 = vmatpush1.msra.mxu0 %v137
  %401 = vmatprep.subr.mxu0 0.0
  %402 = vmatpush1.msra.mxu0 %v138
  %403 = vmatprep.subr.mxu0 0.0
  %404 = vmatpush1.msra.mxu0 %v139
  %405 = vmatprep.subr.mxu0 0.0
  %406 = vmatpush1.msra.mxu0 %v140
  %407 = vmatprep.subr.mxu0 0.0
  %408 = vmatpush1.msra.mxu0 %v141
  %409 = vmatprep.subr.mxu0 0.0
  %410 = vmatpush1.msra.mxu0 %v142
  %411 = vmatprep.subr.mxu0 0.0
  %412 = vmatpush1.msra.mxu0 %v143
  %413 = vmatprep.subr.mxu0 0.0
  %414 = vmatpush1.msra.mxu0 %v144
  %415 = vmatprep.subr.mxu0 0.0
  %416 = vmatpush1.msra.mxu0 %v145
  %417 = vmatprep.subr.mxu0 0.0
  %418 = vmatpush1.msra.mxu0 %v146
  %419 = vmatprep.subr.mxu0 0.0
  %420 = vmatpush1.msra.mxu0 %v147
  %421 = vmatprep.subr.mxu0 0.0
  %422 = vmatpush1.msra.mxu0 %v148
  %423 = vmatprep.subr.mxu0 0.0
  %424 = vmatpush1.msra.mxu0 %v149
  %425 = vmatprep.subr.mxu0 0.0
  %426 = vmatpush1.msra.mxu0 %v150
  %427 = vmatprep.subr.mxu0 0.0
  %428 = vmatpush1.msra.mxu0 %v151
  %429 = vmatprep.subr.mxu0 0.0
  %430 = vmatpush1.msra.mxu0 %v152
  %431 = vmatprep.subr.mxu0 0.0
  %432 = vmatpush1.msra.mxu0 %v153
  %433 = vmatprep.subr.mxu0 0.0
  %434 = vmatpush1.msra.mxu0 %v154
  %435 = vmatprep.subr.mxu0 0.0
  %436 = vmatpush1.msra.mxu0 %v155
  %437 = vmatprep.mubr.f32.mxu0 %v27
  %438 = vmatmul.mubr.f32.gmra.mrb[0].mxu0 %v26
  %v439 = vpop.f32.mrb[0].mxu0
  %v440 = vadd.f32 %v370, %v439
  %v441 = vpop.f32.mrb[0].mxu0
  %442 = vdwg.mxu0
  %v443 = vmax.f32 %v440, 0.0
  %v444 = vld [vmem:[%s3] sm:$0xff]
  %v445 = vld [vmem:[%s3 + $0x8] sm:$0xff]
  %v446 = vld [vmem:[%s3 + $0x10] sm:$0xff]
  %v447 = vld [vmem:[%s3 + $0x18] sm:$0xff]
  %v448 = vld [vmem:[%s3 + $0x20] sm:$0xff]
  %v449 = vld [vmem:[%s3 + $0x28] sm:$0xff]
  %v450 = vld [vmem:[%s3 + $0x30] sm:$0xff]
  %v451 = vld [vmem:[%s3 + $0x38] sm:$0xff]
  %v452 = vld [vmem:[%s3 + $0x40] sm:$0xff]
  %v453 = vld [vmem:[%s3 + $0x48] sm:$0xff]
  %v454 = vld [vmem:[%s3 + $0x50] sm:$0xff]
  %v455 = vld [vmem:[%s3 + $0x58] sm:$0xff]
  %v456 = vld [vmem:[%s3 + $0x60] sm:$0xff]
  %v457 = vld [vmem:[%s3 + $0x68] sm:$0xff]
  %v458 = vld [vmem:[%s3 + $0x70] sm:$0xff]
  %v459 = vld [vmem:[%s3 + $0x78] sm:$0xff]
  %v460 = vld [vmem:[%s4] sm:$0x1]
  %v462 = vlaneseq
  %v463 = vshrl.u32 %v462, 7
  %v464 = vsub.s32 0, %v463
  %v465 = vrot.slane %v460, %v464
  %467 = vmatprep.subr.mxu0 0.0
  %468 = vmatpush1.msra.mxu0 %v444
  %469 = vmatprep.subr.mxu0 0.0
  %470 = vmatpush1.msra.mxu0 %v445
  %471 = vmatprep.subr.mxu0 0.0
  %472 = vmatpush1.msra.mxu0 %v446
  %473 = vmatprep.subr.mxu0 0.0
  %474 = vmatpush1.msra.mxu0 %v447
  %475 = vmatprep.subr.mxu0 0.0
  %476 = vmatpush1.msra.mxu0 %v448
  %477 = vmatprep.subr.mxu0 0.0
  %478 = vmatpush1.msra.mxu0 %v449
  %479 = vmatprep.subr.mxu0 0.0
  %480 = vmatpush1.msra.mxu0 %v450
  %481 = vmatprep.subr.mxu0 0.0
  %482 = vmatpush1.msra.mxu0 %v451
  %483 = vmatprep.subr.mxu0 0.0
  %484 = vmatpush1.msra.mxu0 %v452
  %485 = vmatprep.subr.mxu0 0.0
  %486 = vmatpush1.msra.mxu0 %v453
  %487 = vmatprep.subr.mxu0 0.0
  %488 = vmatpush1.msra.mxu0 %v454
  %489 = vmatprep.subr.mxu0 0.0
  %490 = vmatpush1.msra.mxu0 %v455
  %491 = vmatprep.subr.mxu0 0.0
  %492 = vmatpush1.msra.mxu0 %v456
  %493 = vmatprep.subr.mxu0 0.0
  %494 = vmatpush1.msra.mxu0 %v457
  %495 = vmatprep.subr.mxu0 0.0
  %496 = vmatpush1.msra.mxu0 %v458
  %497 = vmatprep.subr.mxu0 0.0
  %498 = vmatpush1.msra.mxu0 %v459
  %499 = vmatprep.subr.mxu0 0.0
  %500 = vmatpush1.msra.mxu0 0.0
  %501 = vmatprep.subr.mxu0 0.0
  %502 = vmatpush1.msra.mxu0 0.0
  %503 = vmatprep.subr.mxu0 0.0
  %504 = vmatpush1.msra.mxu0 0.0
  %505 = vmatprep.subr.mxu0 0.0
  %506 = vmatpush1.msra.mxu0 0.0
  %507 = vmatprep.subr.mxu0 0.0
  %508 = vmatpush1.msra.mxu0 0.0
  %509 = vmatprep.subr.mxu0 0.0
  %510 = vmatpush1.msra.mxu0 0.0
  %511 = vmatprep.subr.mxu0 0.0
  %512 = vmatpush1.msra.mxu0 0.0
  %513 = vmatprep.subr.mxu0 0.0
  %514 = vmatpush1.msra.mxu0 0.0
  %515 = vmatprep.subr.mxu0 0.0
  %516 = vmatpush1.msra.mxu0 0.0
  %517 = vmatprep.subr.mxu0 0.0
  %518 = vmatpush1.msra.mxu0 0.0
  %519 = vmatprep.subr.mxu0 0.0
  %520 = vmatpush1.msra.mxu0 0.0
  %521 = vmatprep.subr.mxu0 0.0
  %522 = vmatpush1.msra.mxu0 0.0
  %523 = vmatprep.subr.mxu0 0.0
  %524 = vmatpush1.msra.mxu0 0.0
  %525 = vmatprep.subr.mxu0 0.0
  %526 = vmatpush1.msra.mxu0 0.0
  %527 = vmatprep.subr.mxu0 0.0
  %528 = vmatpush1.msra.mxu0 0.0
  %529 = vmatprep.subr.mxu0 0.0
  %530 = vmatpush1.msra.mxu0 0.0
  %531 = vmatprep.mubr.f32.mxu0 0.0
  %532 = vmatmul.mubr.f32.gmra.mrb[0].mxu0 %v443
  %v533 = vpop.f32.mrb[0].mxu0
  %v534 = vadd.f32 %v465, %v533
  %v535 = vpop.f32.mrb[0].mxu0
  %536 = vdwg.mxu0
  %537 = vmax.xlane.f32.xlu0 %v534
  %v538 = vpop.xlane.xlu0 %537
  %v539 = vsub.f32 %v534, %v538
  %v540 = vmul.f32 %v539, 1.442695
  %v541 = vpow.pop %v540
  %542 = vadd.xlane.f32.xlu0 %v541
  %v543 = vpop.xlane.xlu0 %542
  %v544 = vlog2.pop %v543
  %v545 = vmul.f32 %v544, 0.6931472
  %v546 = vsub.f32 %v539, %v545
  %547 = vst [vmem:[%s5] sm:$0xff] %v546
  // Predicated region
  $region22: #{deep_forward.3} parent=0 // pred_check
    _
  $region23: #{deep_forward.3} parent=0 // pred_check_branch
    %549 = sbr.rel (0) target = $region25
  $region24: #{deep_forward.3} parent=0 // pred_region
    _
  $region25: #{deep_forward.3} parent=0 // pred_fallthru
    _
  // Predicated region
  $region26: #{deep_forward.3} parent=0 // pred_check
    _
  $region27: #{deep_forward.3} parent=0 // pred_check_branch
    %551 = sbr.rel (0) target = $region29
  $region28: #{deep_forward.3} parent=0 // pred_region
    _
  $region29: #{deep_forward.3} parent=0 // pred_fallthru
    _

// kernel: deep_forward.2
$region0: #{deep_forward.2}
  #allocation0 [shape = 'u32[]', space=smem, size = 0x4, offset = 0x4, fixed_abs, tag = 'smem constant byte address 0x4 - core index']
  #allocation1 [shape = 'u32[144,128]{1,0:T(1,128)}', space=vmem, size = 0x12000, scoped, tag = 'internal scratch']
  #allocation2 [shape = 'f32[1,16,256]{2,1,0:T(8,128)}', space=vmem, size = 0x4000, scoped, tag = 'scratch operand']
  #allocation3 [shape = 'f32[1,16,256]{2,1,0:T(8,128)}', space=vmem, size = 0x4000, scoped, tag = 'scratch operand']
  %s0 = inlined_call_operand.vmem [shape: f32[2,4,24,32], index: 0, kind: input, shape index: {}]
  %s1 = inlined_call_operand.hbm [shape: f32[3,2,32,256], index: 1, kind: input, shape index: {}]
  %s2 = inlined_call_operand.hbm [shape: f32[1,256], index: 2, kind: input, shape index: {}]
  %s3 = inlined_call_operand.hbm [shape: f32[3,2,256,256], index: 3, kind: input, shape index: {}]
  %s4 = inlined_call_operand.hbm [shape: f32[1,256], index: 4, kind: input, shape index: {}]
  %s5 = inlined_call_operand.vmem [shape: f32[2,8,256], index: 5, kind: output, shape index: {}]
  %s6 = sld [smem:[#allocation0]]
  $region69: #{deep_forward.2} parent=0
    _
  %s8 = ssub.s32 1, %s6
  %s9 = scalar_select 0, %s8, %s6
  $region1: #{deep_forward.2} parent=0
    #allocation4 [shape = 'u8[196608]{0}', space=vmem, size = 0x30000, scoped, tag = 'input window, operand 1, single buffered']
    #allocation5 [shape = 's32[2]{0}', space=sflag, size = 0x8, scoped, tag = 'scoped memory for deep_forward.2']
    #allocation6 [shape = 'u8[1024]{0}', space=vmem, size = 0x400, scoped, tag = 'input window, operand 2, single buffered']
    #allocation7 [shape = 's32[1]{0}', space=sflag, size = 0x4, scoped, tag = 'scoped memory for deep_forward.2']
    #allocation8 [shape = 'u8[1572864]{0}', space=vmem, size = 0x180000, scoped, tag = 'input window, operand 3, single buffered']
    #allocation9 [shape = 'u8[1024]{0}', space=vmem, size = 0x400, scoped, tag = 'input window, operand 4, single buffered']
    #allocation10 [shape = 's32[1]{0}', space=sflag, size = 0x4, scoped, tag = 'scoped memory for deep_forward.2']
    %10 = vsyncpa [#allocation5], 0
    %11 = vsyncpa [#allocation7], 0
    %12 = vsyncpa [#allocation10], 0
    loop: start=0, step=1, limit=4
    $region2: #{deep_forward.2} parent=1 // loop_pre_header
      _
    $region3: #{deep_forward.2} parent=1 // loop_header
      %s14 = sphi 0, %s18
      %p15 = scmp.ge.s32.totalorder %s14, 4
      %s24 = sphi 0, %s26
      %s27 = sphi 0, %s24
      %s28 = sphi 0, %s27
      %s44 = sphi 0, %s28
      %s48 = sphi 0, %s48
      %s50 = sphi 0, %s48
      %s51 = sphi 0, %s50
      %s65 = sphi 0, %s51
      %s69 = sphi 0, %s69
      %s71 = sphi 0, %s69
      %s72 = sphi 0, %s71
      %s86 = sphi 0, %s72
      %s90 = sphi 0, %s90
      %s92 = sphi 0, %s90
      %s93 = sphi 0, %s92
      %s107 = sphi 0, %s93
      %s111 = sphi 0, %s111
      %s113 = sphi 0, %s111
      %s114 = sphi 0, %s113
      %s128 = sphi 0, %s114
      %s134 = sphi 0, %s136
      %s137 = sphi 0, %s134
      %s138 = sphi 0, %s137
      %s154 = sphi 0, %s138
    $region4: #{deep_forward.2} parent=1 // loop_header_branch
      %17 = sbr.rel (%p15) target = $region8
    $region5: #{deep_forward.2} parent=1 // loop_body
      %s19 = ssub.s32 %s14, 1
      %s20 = ssub.s32 %s14, 2
      %s21 = sadd.s32 %s14, 1
      %s22 = ssub.s32 %s14, %s21
      %p23 = scmp.eq.s32.totalorder %s22, 0
      %s25 = sadd.s32 %s24, 1
      %s26 = scalar_select %p23, %s24, %s25
      %p29 = pneg %p23
      %p30 = scmp.eq.s32.totalorder %s14, 1
      %p31 = por %p29, %p30
      %p32 = scmp.ne.s32.totalorder %s24, %s27
      %p33 = scmp.eq.s32.totalorder %s14, 0
      %p34 = por %p32, %p33
      %p35 = scmp.ne.s32.totalorder %s24, %s27
      %p36 = scmp.eq.s32.totalorder %s19, 1
      %p37 = por %p35, %p36
      %p38 = scmp.ne.s32.totalorder %s27, %s28
      %p39 = scmp.eq.s32.totalorder %s19, 0
      %p40 = por %p38, %p39
      %p41 = scmp.ne.s32.totalorder %s27, %s28
      %p42 = scmp.eq.s32.totalorder %s20, 1
      %p43 = por %p41, %p42
      %p45 = scmp.ne.s32.totalorder %s28, %s44
      %p46 = scmp.eq.s32.totalorder %s20, 0
      %p47 = por %p45, %p46
      %s49 = sadd.s32 %s48, 1
      %p52 = scmp.eq.s32.totalorder %s14, 1
      %p53 = scmp.ne.s32.totalorder %s48, %s50
      %p54 = scmp.eq.s32.totalorder %s14, 0
      %p55 = por %p53, %p54
      %p56 = scmp.ne.s32.totalorder %s48, %s50
      %p57 = scmp.eq.s32.totalorder %s19, 1
      %p58 = por %p56, %p57
      %p59 = scmp.ne.s32.totalorder %s50, %s51
      %p60 = scmp.eq.s32.totalorder %s19, 0
      %p61 = por %p59, %p60
      %p62 = scmp.ne.s32.totalorder %s50, %s51
      %p63 = scmp.eq.s32.totalorder %s20, 1
      %p64 = por %p62, %p63
      %p66 = scmp.ne.s32.totalorder %s51, %s65
      %p67 = scmp.eq.s32.totalorder %s20, 0
      %p68 = por %p66, %p67
      %s70 = sadd.s32 %s69, 1
      %p73 = scmp.eq.s32.totalorder %s14, 1
      %p74 = scmp.ne.s32.totalorder %s69, %s71
      %p75 = scmp.eq.s32.totalorder %s14, 0
      %p76 = por %p74, %p75
      %p77 = scmp.ne.s32.totalorder %s69, %s71
      %p78 = scmp.eq.s32.totalorder %s19, 1
      %p79 = por %p77, %p78
      %p80 = scmp.ne.s32.totalorder %s71, %s72
      %p81 = scmp.eq.s32.totalorder %s19, 0
      %p82 = por %p80, %p81
      %p83 = scmp.ne.s32.totalorder %s71, %s72
      %p84 = scmp.eq.s32.totalorder %s20, 1
      %p85 = por %p83, %p84
      %p87 = scmp.ne.s32.totalorder %s72, %s86
      %p88 = scmp.eq.s32.totalorder %s20, 0
      %p89 = por %p87, %p88
      %s91 = sadd.s32 %s90, 1
      %p94 = scmp.eq.s32.totalorder %s14, 1
      %p95 = scmp.ne.s32.totalorder %s90, %s92
      %p96 = scmp.eq.s32.totalorder %s14, 0
      %p97 = por %p95, %p96
      %p98 = scmp.ne.s32.totalorder %s90, %s92
      %p99 = scmp.eq.s32.totalorder %s19, 1
      %p100 = por %p98, %p99
      %p101 = scmp.ne.s32.totalorder %s92, %s93
      %p102 = scmp.eq.s32.totalorder %s19, 0
      %p103 = por %p101, %p102
      %p104 = scmp.ne.s32.totalorder %s92, %s93
      %p105 = scmp.eq.s32.totalorder %s20, 1
      %p106 = por %p104, %p105
      %p108 = scmp.ne.s32.totalorder %s93, %s107
      %p109 = scmp.eq.s32.totalorder %s20, 0
      %p110 = por %p108, %p109
      %s112 = sadd.s32 %s111, 1
      %p115 = scmp.eq.s32.totalorder %s14, 1
      %p116 = scmp.ne.s32.totalorder %s111, %s113
      %p117 = scmp.eq.s32.totalorder %s14, 0
      %p118 = por %p116, %p117
      %p119 = scmp.ne.s32.totalorder %s111, %s113
      %p120 = scmp.eq.s32.totalorder %s19, 1
      %p121 = por %p119, %p120
      %p122 = scmp.ne.s32.totalorder %s113, %s114
      %p123 = scmp.eq.s32.totalorder %s19, 0
      %p124 = por %p122, %p123
      %p125 = scmp.ne.s32.totalorder %s113, %s114
      %p126 = scmp.eq.s32.totalorder %s20, 1
      %p127 = por %p125, %p126
      %p129 = scmp.ne.s32.totalorder %s114, %s128
      %p130 = scmp.eq.s32.totalorder %s20, 0
      %p131 = por %p129, %p130
      %s132 = ssub.s32 %s14, %s21
      %p133 = scmp.eq.s32.totalorder %s132, 0
      %s135 = sadd.s32 %s134, 1
      %s136 = scalar_select %p133, %s134, %s135
      %p139 = pneg %p133
      %p140 = scmp.eq.s32.totalorder %s14, 1
      %p141 = por %p139, %p140
      %p142 = scmp.ne.s32.totalorder %s134, %s137
      %p143 = scmp.eq.s32.totalorder %s14, 0
      %p144 = por %p142, %p143
      %p145 = scmp.ne.s32.totalorder %s134, %s137
      %p146 = scmp.eq.s32.totalorder %s19, 1
      %p147 = por %p145, %p146
      %p148 = scmp.ne.s32.totalorder %s137, %s138
      %p149 = scmp.eq.s32.totalorder %s19, 0
      %p150 = por %p148, %p149
      %p151 = scmp.ne.s32.totalorder %s137, %s138
      %p152 = scmp.eq.s32.totalorder %s20, 1
      %p153 = por %p151, %p152
      %p155 = scmp.ne.s32.totalorder %s138, %s154
      %p156 = scmp.eq.s32.totalorder %s20, 0
      %p157 = por %p155, %p156
      %p158 = scmp.le.s32.totalorder 1, %s14
      %p159 = scmp.lt.s32.totalorder %s14, 3
      %p160 = pnand %p158, %p159
      %p161 = pneg %p160
      // Predicated region
      $region9: #{deep_forward.2} parent=5 // pred_check
        _
      $region10: #{deep_forward.2} parent=5 // pred_check_branch
        %163 = sbr.rel (%p160) target = $region12
      $region11: #{deep_forward.2} parent=5 // pred_region
        %s164 = ssub.s32 %s14, 1
        // Predicated region
        $region13: #{deep_forward.2} parent=11 // pred_check
          %p165 = pneg %p61
        $region14: #{deep_forward.2} parent=11 // pred_check_branch
          %167 = sbr.rel (%p165) target = $region16
        $region15: #{deep_forward.2} parent=11 // pred_region
          %s169 = ssub.s32 6144, 6144
          %170 = vsyncadd [#allocation5], %s169
          %s171 = sshll.u32 [#allocation4], 4
          %s172 = int_to_ptr.vmem [resolvable:$true] %s171
          %177 = dma.hbm_to_vmem [thread:$0]  %s1, 6144, %s172, [#allocation5], 256, 256, 16
        $region16: #{deep_forward.2} parent=11 // pred_fallthru
          _
        // Predicated region
        $region17: #{deep_forward.2} parent=11 // pred_check
          %p178 = pneg %p82
        $region18: #{deep_forward.2} parent=11 // pred_check_branch
          %180 = sbr.rel (%p178) target = $region20
        $region19: #{deep_forward.2} parent=11 // pred_region
          %s182 = ssub.s32 32, 32
          %183 = vsyncadd [#allocation7], %s182
          %s185 = sshll.u32 [#allocation6], 4
          %s186 = int_to_ptr.vmem [resolvable:$true] %s185
          %188 = dma.hbm_to_vmem [thread:$0]  %s2, 32, %s186, [#allocation7]
        $region20: #{deep_forward.2} parent=11 // pred_fallthru
          _
        // Predicated region
        $region21: #{deep_forward.2} parent=11 // pred_check
          %p189 = pneg %p103
        $region22: #{deep_forward.2} parent=11 // pred_check_branch
          %191 = sbr.rel (%p189) target = $region24
        $region23: #{deep_forward.2} parent=11 // pred_region
          %s193 = ssub.s32 49152, 49152
          %194 = vsyncadd [#allocation7], %s193
          %s195 = sshll.u32 [#allocation8], 4
          %s196 = int_to_ptr.vmem [resolvable:$true] %s195
          %201 = dma.hbm_to_vmem [thread:$0]  %s3, 49152, %s196, [#allocation7], 256, 256, 16
        $region24: #{deep_forward.2} parent=11 // pred_fallthru
          _
        // Predicated region
        $region25: #{deep_forward.2} parent=11 // pred_check
          %p202 = pneg %p124
        $region26: #{deep_forward.2} parent=11 // pred_check_branch
          %204 = sbr.rel (%p202) target = $region28
        $region27: #{deep_forward.2} parent=11 // pred_region
          %s206 = ssub.s32 32, 32
          %207 = vsyncadd [#allocation10], %s206
          %s209 = sshll.u32 [#allocation9], 4
          %s210 = int_to_ptr.vmem [resolvable:$true] %s209
          %212 = dma.hbm_to_vmem [thread:$0]  %s4, 32, %s210, [#allocation10]
        $region28: #{deep_forward.2} parent=11 // pred_fallthru
          _
      $region12: #{deep_forward.2} parent=5 // pred_fallthru
        _
      %p213 = scmp.lt.s32.totalorder %s14, 2
      // Predicated region
      $region29: #{deep_forward.2} parent=5 // pred_check
        %p214 = pneg %p213
      $region30: #{deep_forward.2} parent=5 // pred_check_branch
        %216 = sbr.rel (%p214) target = $region32
      $region31: #{deep_forward.2} parent=5 // pred_region
        // Predicated region
        $region33: #{deep_forward.2} parent=31 // pred_check
          %p217 = pneg %p34
        $region34: #{deep_forward.2} parent=31 // pred_check_branch
          %219 = sbr.rel (%p217) target = $region36
        $region35: #{deep_forward.2} parent=31 // pred_region
          %p220 = scmp.lt.s32.totalorder %s14, 1
          %s221 = scalar_select %p220, %s14, 1
          %s222 = smul.addr %s221, 12
          %s223 = smul.addr %s222, 8
          %s224 = scalar_lea.vmem %s0, %s223
        $region36: #{deep_forward.2} parent=31 // pred_fallthru
          _
      $region32: #{deep_forward.2} parent=5 // pred_fallthru
        _
      %p225 = scmp.le.s32.totalorder 1, %s14
      %p226 = scmp.lt.s32.totalorder %s14, 3
      %p227 = pnand %p225, %p226
      %p228 = pneg %p227
      // Predicated region
      $region37: #{deep_forward.2} parent=5 // pred_check
        _
      $region38: #{deep_forward.2} parent=5 // pred_check_branch
        %230 = sbr.rel (%p227) target = $region40
      $region39: #{deep_forward.2} parent=5 // pred_region
        %s231 = ssub.s32 %s14, 1
        // Predicated region
        $region41: #{deep_forward.2} parent=39 // pred_check
          %p232 = pneg %p61
        $region42: #{deep_forward.2} parent=39 // pred_check_branch
          %234 = sbr.rel (%p232) target = $region44
        $region43: #{deep_forward.2} parent=39 // pred_region
          %235 = dma.done [#allocation5], 6144
        $region44: #{deep_forward.2} parent=39 // pred_fallthru
          _
        // Predicated region
        $region45: #{deep_forward.2} parent=39 // pred_check
          %p236 = pneg %p82
        $region46: #{deep_forward.2} parent=39 // pred_check_branch
          %238 = sbr.rel (%p236) target = $region48
        $region47: #{deep_forward.2} parent=39 // pred_region
          %239 = dma.done [#allocation7], 32
        $region48: #{deep_forward.2} parent=39 // pred_fallthru
          _
        // Predicated region
        $region49: #{deep_forward.2} parent=39 // pred_check
          %p240 = pneg %p103
        $region50: #{deep_forward.2} parent=39 // pred_check_branch
          %242 = sbr.rel (%p240) target = $region52
        $region51: #{deep_forward.2} parent=39 // pred_region
          %243 = dma.done [#allocation7], 49152
        $region52: #{deep_forward.2} parent=39 // pred_fallthru
          _
        // Predicated region
        $region53: #{deep_forward.2} parent=39 // pred_check
          %p244 = pneg %p124
        $region54: #{deep_forward.2} parent=39 // pred_check_branch
          %246 = sbr.rel (%p244) target = $region56
        $region55: #{deep_forward.2} parent=39 // pred_region
          %247 = dma.done [#allocation10], 32
        $region56: #{deep_forward.2} parent=39 // pred_fallthru
          _
        %p248 = scmp.lt.s32.totalorder %s19, 1
        %s249 = scalar_select %p248, %s19, 1
        %s250 = smul.addr %s249, 12
        %s251 = smul.addr %s250, 8
        %s252 = scalar_lea.vmem %s0, %s251
        %p253 = pneg %p40
        %p254 = pneg %p37
        %p255 = pneg %p61
        %p256 = pneg %p58
        %p257 = pneg %p82
        %p258 = pneg %p79
        %p259 = pneg %p103
        %p260 = pneg %p100
        %p261 = pneg %p124
        %p262 = pneg %p121
        %p263 = pneg %p150
        %p264 = pneg %p147
        %p265 = scmp.lt.s32.totalorder %s19, 1
        %s266 = scalar_select %p265, %s19, 1
        %s267 = smul.addr %s266, 2
        %s268 = smul.addr %s267, 8
        %s269 = scalar_lea.vmem %s5, %s268
        %p270 = scmp.lt.s32.totalorder %s19, 1
        %s271 = scalar_select %p270, %s19, 1
        %s272 = smul.addr %s271, 12
        %s273 = smul.addr %s272, 8
        %s274 = scalar_lea.vmem %s0, %s273
        %p275 = scmp.lt.s32.totalorder %s19, 1
        %s276 = scalar_select %p275, %s19, 1
        %s277 = smul.addr %s276, 2
        %s278 = smul.addr %s277, 8
        %s279 = scalar_lea.vmem %s5, %s278
        %v280 = vld [vmem:[%s274 + $0x1] sm:$0xff]
        %v281 = vld [vmem:[%s274 + $0x9] sm:$0xff]
        %s282 = scalar_lea.vmem %s274, 24
        %v283 = vld [vmem:[%s282 + $0x1] sm:$0xff]
        %v284 = vld [vmem:[%s282 + $0x9] sm:$0xff]
        %s285 = scalar_lea.vmem %s274, 48
        %v286 = vld [vmem:[%s285 + $0x1] sm:$0xff]
        %v287 = vld [vmem:[%s285 + $0x9] sm:$0xff]
        %s288 = scalar_lea.vmem %s274, 72
        %v289 = vld [vmem:[%s288 + $0x1] sm:$0xff]
        %v290 = vld [vmem:[%s288 + $0x9] sm:$0xff]
        %v291 = vld [vmem:[%s285] sm:$0xff]
        %v292 = vld [vmem:[%s285 + $0x8] sm:$0xff]
        %v293 = vld [vmem:[%s288] sm:$0xff]
        %v294 = vld [vmem:[%s288 + $0x8] sm:$0xff]
        %v295 = vld [vmem:[#allocation4] sm:$0xff]
        %v296 = vld [vmem:[#allocation4 + $0x8] sm:$0xff]
        %v297 = vld [vmem:[#allocation4 + $0x10] sm:$0xff]
        %v298 = vld [vmem:[#allocation4 + $0x18] sm:$0xff]
        %v299 = vld [vmem:[#allocation4 + $0x20] sm:$0xff]
        %v300 = vld [vmem:[#allocation4 + $0x28] sm:$0xff]
        %v301 = vld [vmem:[#allocation4 + $0x30] sm:$0xff]
        %v302 = vld [vmem:[#allocation4 + $0x38] sm:$0xff]
        %s303 = scalar_lea.vmem [#allocation4], 128
        %v304 = vld [vmem:[%s303] sm:$0xff]
        %v305 = vld [vmem:[%s303 + $0x8] sm:$0xff]
        %v306 = vld [vmem:[%s303 + $0x10] sm:$0xff]
        %v307 = vld [vmem:[%s303 + $0x18] sm:$0xff]
        %v308 = vld [vmem:[%s303 + $0x20] sm:$0xff]
        %v309 = vld [vmem:[%s303 + $0x28] sm:$0xff]
        %v310 = vld [vmem:[%s303 + $0x30] sm:$0xff]
        %v311 = vld [vmem:[%s303 + $0x38] sm:$0xff]
        %vm312 = vcmask 261120
        %v314 = vsel %vm312, %v283, 0
        %v317 = vsel %vm312, %v284, 0
        %319 = vmatprep.subr.mxu0 %v305
        %320 = vmatpush1.msra.mxu0 %v304
        %321 = vmatprep.subr.mxu0 %v307
        %322 = vmatpush1.msra.mxu0 %v306
        %323 = vmatprep.subr.mxu0 %v309
        %324 = vmatpush1.msra.mxu0 %v308
        %325 = vmatprep.subr.mxu0 %v311
        %326 = vmatpush1.msra.mxu0 %v310
        %327 = vmatprep.subr.mxu0 0.0
        %328 = vmatpush1.msra.mxu0 0.0
        %329 = vmatprep.subr.mxu0 0.0
        %330 = vmatpush1.msra.mxu0 0.0
        %331 = vmatprep.subr.mxu0 0.0
        %332 = vmatpush1.msra.mxu0 0.0
        %333 = vmatprep.subr.mxu0 0.0
        %334 = vmatpush1.msra.mxu0 0.0
        %335 = vmatprep.subr.mxu0 0.0
        %336 = vmatpush1.msra.mxu0 0.0
        %337 = vmatprep.subr.mxu0 0.0
        %338 = vmatpush1.msra.mxu0 0.0
        %339 = vmatprep.subr.mxu0 0.0
        %340 = vmatpush1.msra.mxu0 0.0
        %341 = vmatprep.subr.mxu0 0.0
        %342 = vmatpush1.msra.mxu0 0.0
        %343 = vmatprep.subr.mxu0 0.0
        %344 = vmatpush1.msra.mxu0 0.0
        %345 = vmatprep.subr.mxu0 0.0
        %346 = vmatpush1.msra.mxu0 0.0
        %347 = vmatprep.subr.mxu0 0.0
        %348 = vmatpush1.msra.mxu0 0.0
        %349 = vmatprep.subr.mxu0 0.0
        %350 = vmatpush1.msra.mxu0 0.0
        %351 = vmatprep.subr.mxu0 0.0
        %352 = vmatpush1.msra.mxu0 0.0
        %353 = vmatprep.subr.mxu0 0.0
        %354 = vmatpush1.msra.mxu0 0.0
        %355 = vmatprep.subr.mxu0 0.0
        %356 = vmatpush1.msra.mxu0 0.0
        %357 = vmatprep.subr.mxu0 0.0
        %358 = vmatpush1.msra.mxu0 0.0
        %359 = vmatprep.subr.mxu0 0.0
        %360 = vmatpush1.msra.mxu0 0.0
        %361 = vmatprep.subr.mxu0 0.0
        %362 = vmatpush1.msra.mxu0 0.0
        %363 = vmatprep.subr.mxu0 0.0
        %364 = vmatpush1.msra.mxu0 0.0
        %365 = vmatprep.subr.mxu0 0.0
        %366 = vmatpush1.msra.mxu0 0.0
        %367 = vmatprep.subr.mxu0 0.0
        %368 = vmatpush1.msra.mxu0 0.0
        %369 = vmatprep.subr.mxu0 0.0
        %370 = vmatpush1.msra.mxu0 0.0
        %371 = vmatprep.subr.mxu0 0.0
        %372 = vmatpush1.msra.mxu0 0.0
        %373 = vmatprep.subr.mxu0 0.0
        %374 = vmatpush1.msra.mxu0 0.0
        %375 = vmatprep.subr.mxu0 0.0
        %376 = vmatpush1.msra.mxu0 0.0
        %377 = vmatprep.subr.mxu0 0.0
        %378 = vmatpush1.msra.mxu0 0.0
        %379 = vmatprep.subr.mxu0 0.0
        %380 = vmatpush1.msra.mxu0 0.0
        %381 = vmatprep.subr.mxu0 0.0
        %382 = vmatpush1.msra.mxu0 0.0
        %383 = vmatprep.mubr.f32.mxu0 0.0
        %384 = vmatmul.mubr.f32.gmra.mrb[0].mxu0 %v314
        %v385 = vpop.f32.mrb[0].mxu0
        %v386 = vadd.f32 0.0, %v385
        %v387 = vpop.f32.mrb[0].mxu0
        %v388 = vadd.f32 0.0, %v387
        %389 = vmatprep.mubr.f32.mxu0 0.0
        %390 = vmatmul.mubr.f32.gmra.mrb[0].mxu0 %v317
        %v391 = vpop.f32.mrb[0].mxu0
        %v392 = vadd.f32 0.0, %v391
        %v393 = vpop.f32.mrb[0].mxu0
        %v394 = vadd.f32 0.0, %v393
        %395 = vdwg.mxu0
        %v397 = vsel %vm312, %v280, 0
        %v400 = vsel %vm312, %v281, 0
        %402 = vmatprep.subr.mxu0 %v296
        %403 = vmatpush1.msra.mxu0 %v295
        %404 = vmatprep.subr.mxu0 %v298
        %405 = vmatpush1.msra.mxu0 %v297
        %406 = vmatprep.subr.mxu0 %v300
        %407 = vmatpush1.msra.mxu0 %v299
        %408 = vmatprep.subr.mxu0 %v302
        %409 = vmatpush1.msra.mxu0 %v301
        %410 = vmatprep.subr.mxu0 0.0
        %411 = vmatpush1.msra.mxu0 0.0
        %412 = vmatprep.subr.mxu0 0.0
        %413 = vmatpush1.msra.mxu0 0.0
        %414 = vmatprep.subr.mxu0 0.0
        %415 = vmatpush1.msra.mxu0 0.0
        %416 = vmatprep.subr.mxu0 0.0
        %417 = vmatpush1.msra.mxu0 0.0
        %418 = vmatprep.subr.mxu0 0.0
        %419 = vmatpush1.msra.mxu0 0.0
        %420 = vmatprep.subr.mxu0 0.0
        %421 = vmatpush1.msra.mxu0 0.0
        %422 = vmatprep.subr.mxu0 0.0
        %423 = vmatpush1.msra.mxu0 0.0
        %424 = vmatprep.subr.mxu0 0.0
        %425 = vmatpush1.msra.mxu0 0.0
        %426 = vmatprep.subr.mxu0 0.0
        %427 = vmatpush1.msra.mxu0 0.0
        %428 = vmatprep.subr.mxu0 0.0
        %429 = vmatpush1.msra.mxu0 0.0
        %430 = vmatprep.subr.mxu0 0.0
        %431 = vmatpush1.msra.mxu0 0.0
        %432 = vmatprep.subr.mxu0 0.0
        %433 = vmatpush1.msra.mxu0 0.0
        %434 = vmatprep.subr.mxu0 0.0
        %435 = vmatpush1.msra.mxu0 0.0
        %436 = vmatprep.subr.mxu0 0.0
        %437 = vmatpush1.msra.mxu0 0.0
        %438 = vmatprep.subr.mxu0 0.0
        %439 = vmatpush1.msra.mxu0 0.0
        %440 = vmatprep.subr.mxu0 0.0
        %441 = vmatpush1.msra.mxu0 0.0
        %442 = vmatprep.subr.mxu0 0.0
        %443 = vmatpush1.msra.mxu0 0.0
        %444 = vmatprep.subr.mxu0 0.0
        %445 = vmatpush1.msra.mxu0 0.0
        %446 = vmatprep.subr.mxu0 0.0
        %447 = vmatpush1.msra.mxu0 0.0
        %448 = vmatprep.subr.mxu0 0.0
        %449 = vmatpush1.msra.mxu0 0.0
        %450 = vmatprep.subr.mxu0 0.0
        %451 = vmatpush1.msra.mxu0 0.0
        %452 = vmatprep.subr.mxu0 0.0
        %453 = vmatpush1.msra.mxu0 0.0
        %454 = vmatprep.subr.mxu0 0.0
        %455 = vmatpush1.msra.mxu0 0.0
        %456 = vmatprep.subr.mxu0 0.0
        %457 = vmatpush1.msra.mxu0 0.0
        %458 = vmatprep.subr.mxu0 0.0
        %459 = vmatpush1.msra.mxu0 0.0
        %460 = vmatprep.subr.mxu0 0.0
        %461 = vmatpush1.msra.mxu0 0.0
        %462 = vmatprep.subr.mxu0 0.0
        %463 = vmatpush1.msra.mxu0 0.0
        %464 = vmatprep.subr.mxu0 0.0
        %465 = vmatpush1.msra.mxu0 0.0
        %466 = vmatprep.mubr.f32.mxu0 0.0
        %467 = vmatmul.mubr.f32.gmra.mrb[0].mxu0 %v397
        %v468 = vpop.f32.mrb[0].mxu0
        %v469 = vadd.f32 %v386, %v468
        %v470 = vpop.f32.mrb[0].mxu0
        %v471 = vadd.f32 %v388, %v470
        %472 = vmatprep.mubr.f32.mxu0 0.0
        %473 = vmatmul.mubr.f32.gmra.mrb[0].mxu0 %v400
        %v474 = vpop.f32.mrb[0].mxu0
        %v475 = vadd.f32 %v392, %v474
        %v476 = vpop.f32.mrb[0].mxu0
        %v477 = vadd.f32 %v394, %v476
        %478 = vdwg.mxu0
        %s479 = scalar_lea.vmem [#allocation4], 256
        %v480 = vld [vmem:[%s479] sm:$0xff]
        %v481 = vld [vmem:[%s479 + $0x8] sm:$0xff]
        %v482 = vld [vmem:[%s479 + $0x10] sm:$0xff]
        %v483 = vld [vmem:[%s479 + $0x18] sm:$0xff]
        %v484 = vld [vmem:[%s479 + $0x20] sm:$0xff]
        %v485 = vld [vmem:[%s479 + $0x28] sm:$0xff]
        %v486 = vld [vmem:[%s479 + $0x30] sm:$0xff]
        %v487 = vld [vmem:[%s479 + $0x38] sm:$0xff]
        %v489 = vsel %vm312, %v286, 0
        %v492 = vsel %vm312, %v287, 0
        %494 = vmatprep.subr.mxu0 %v481
        %495 = vmatpush1.msra.mxu0 %v480
        %496 = vmatprep.subr.mxu0 %v483
        %497 = vmatpush1.msra.mxu0 %v482
        %498 = vmatprep.subr.mxu0 %v485
        %499 = vmatpush1.msra.mxu0 %v484
        %500 = vmatprep.subr.mxu0 %v487
        %501 = vmatpush1.msra.mxu0 %v486
        %502 = vmatprep.subr.mxu0 0.0
        %503 = vmatpush1.msra.mxu0 0.0
        %504 = vmatprep.subr.mxu0 0.0
        %505 = vmatpush1.msra.mxu0 0.0
        %506 = vmatprep.subr.mxu0 0.0
        %507 = vmatpush1.msra.mxu0 0.0
        %508 = vmatprep.subr.mxu0 0.0
        %509 = vmatpush1.msra.mxu0 0.0
        %510 = vmatprep.subr.mxu0 0.0
        %511 = vmatpush1.msra.mxu0 0.0
        %512 = vmatprep.subr.mxu0 0.0
        %513 = vmatpush1.msra.mxu0 0.0
        %514 = vmatprep.subr.mxu0 0.0
        %515 = vmatpush1.msra.mxu0 0.0
        %516 = vmatprep.subr.mxu0 0.0
        %517 = vmatpush1.msra.mxu0 0.0
        %518 = vmatprep.subr.mxu0 0.0
        %519 = vmatpush1.msra.mxu0 0.0
        %520 = vmatprep.subr.mxu0 0.0
        %521 = vmatpush1.msra.mxu0 0.0
        %522 = vmatprep.subr.mxu0 0.0
        %523 = vmatpush1.msra.mxu0 0.0
        %524 = vmatprep.subr.mxu0 0.0
        %525 = vmatpush1.msra.mxu0 0.0
        %526 = vmatprep.subr.mxu0 0.0
        %527 = vmatpush1.msra.mxu0 0.0
        %528 = vmatprep.subr.mxu0 0.0
        %529 = vmatpush1.msra.mxu0 0.0
        %530 = vmatprep.subr.mxu0 0.0
        %531 = vmatpush1.msra.mxu0 0.0
        %532 = vmatprep.subr.mxu0 0.0
        %533 = vmatpush1.msra.mxu0 0.0
        %534 = vmatprep.subr.mxu0 0.0
        %535 = vmatpush1.msra.mxu0 0.0
        %536 = vmatprep.subr.mxu0 0.0
        %537 = vmatpush1.msra.mxu0 0.0
        %538 = vmatprep.subr.mxu0 0.0
        %539 = vmatpush1.msra.mxu0 0.0
        %540 = vmatprep.subr.mxu0 0.0
        %541 = vmatpush1.msra.mxu0 0.0
        %542 = vmatprep.subr.mxu0 0.0
        %543 = vmatpush1.msra.mxu0 0.0
        %544 = vmatprep.subr.mxu0 0.0
        %545 = vmatpush1.msra.mxu0 0.0
        %546 = vmatprep.subr.mxu0 0.0
        %547 = vmatpush1.msra.mxu0 0.0
        %548 = vmatprep.subr.mxu0 0.0
        %549 = vmatpush1.msra.mxu0 0.0
        %550 = vmatprep.subr.mxu0 0.0
        %551 = vmatpush1.msra.mxu0 0.0
        %552 = vmatprep.subr.mxu0 0.0
        %553 = vmatpush1.msra.mxu0 0.0
        %554 = vmatprep.subr.mxu0 0.0
        %555 = vmatpush1.msra.mxu0 0.0
        %556 = vmatprep.subr.mxu0 0.0
        %557 = vmatpush1.msra.mxu0 0.0
        %558 = vmatprep.mubr.f32.mxu0 0.0
        %559 = vmatmul.mubr.f32.gmra.mrb[0].mxu0 %v489
        %v560 = vpop.f32.mrb[0].mxu0
        %v561 = vadd.f32 0.0, %v560
        %v562 = vpop.f32.mrb[0].mxu0
        %v563 = vadd.f32 0.0, %v562
        %564 = vmatprep.mubr.f32.mxu0 0.0
        %565 = vmatmul.mubr.f32.gmra.mrb[0].mxu0 %v492
        %v566 = vpop.f32.mrb[0].mxu0
        %v567 = vadd.f32 0.0, %v566
        %v568 = vpop.f32.mrb[0].mxu0
        %v569 = vadd.f32 0.0, %v568
        %570 = vdwg.mxu0
        %v571 = vadd.f32 %v469, %v561
        %v572 = vadd.f32 %v471, %v563
        %v573 = vadd.f32 %v475, %v567
        %v574 = vadd.f32 %v477, %v569
        %575 = vst [vmem:[#allocation3] sm:$0xff] %v571
        %576 = vst [vmem:[#allocation3 + $0x8] sm:$0xff] %v572
        %577 = vst [vmem:[#allocation3 + $0x10] sm:$0xff] %v573
        %578 = vst [vmem:[#allocation3 + $0x18] sm:$0xff] %v574
        %s579 = scalar_lea.vmem [#allocation4], 64
        %v580 = vld [vmem:[%s579] sm:$0xff]
        %v581 = vld [vmem:[%s579 + $0x8] sm:$0xff]
        %v582 = vld [vmem:[%s579 + $0x10] sm:$0xff]
        %v583 = vld [vmem:[%s579 + $0x18] sm:$0xff]
        %v584 = vld [vmem:[%s579 + $0x20] sm:$0xff]
        %v585 = vld [vmem:[%s579 + $0x28] sm:$0xff]
        %v586 = vld [vmem:[%s579 + $0x30] sm:$0xff]
        %v587 = vld [vmem:[%s579 + $0x38] sm:$0xff]
        %s588 = scalar_lea.vmem [#allocation4], 192
        %v589 = vld [vmem:[%s588] sm:$0xff]
        %v590 = vld [vmem:[%s588 + $0x8] sm:$0xff]
        %v591 = vld [vmem:[%s588 + $0x10] sm:$0xff]
        %v592 = vld [vmem:[%s588 + $0x18] sm:$0xff]
        %v593 = vld [vmem:[%s588 + $0x20] sm:$0xff]
        %v594 = vld [vmem:[%s588 + $0x28] sm:$0xff]
        %v595 = vld [vmem:[%s588 + $0x30] sm:$0xff]
        %v596 = vld [vmem:[%s588 + $0x38] sm:$0xff]
        %597 = vmatprep.subr.mxu0 %v590
        %598 = vmatpush1.msra.mxu0 %v589
        %599 = vmatprep.subr.mxu0 %v592
        %600 = vmatpush1.msra.mxu0 %v591
        %601 = vmatprep.subr.mxu0 %v594
        %602 = vmatpush1.msra.mxu0 %v593
        %603 = vmatprep.subr.mxu0 %v596
        %604 = vmatpush1.msra.mxu0 %v595
        %605 = vmatprep.subr.mxu0 0.0
        %606 = vmatpush1.msra.mxu0 0.0
        %607 = vmatprep.subr.mxu0 0.0
        %608 = vmatpush1.msra.mxu0 0.0
        %609 = vmatprep.subr.mxu0 0.0
        %610 = vmatpush1.msra.mxu0 0.0
        %611 = vmatprep.subr.mxu0 0.0
        %612 = vmatpush1.msra.mxu0 0.0
        %613 = vmatprep.subr.mxu0 0.0
        %614 = vmatpush1.msra.mxu0 0.0
        %615 = vmatprep.subr.mxu0 0.0
        %616 = vmatpush1.msra.mxu0 0.0
        %617 = vmatprep.subr.mxu0 0.0
        %618 = vmatpush1.msra.mxu0 0.0
        %619 = vmatprep.subr.mxu0 0.0
        %620 = vmatpush1.msra.mxu0 0.0
        %621 = vmatprep.subr.mxu0 0.0
        %622 = vmatpush1.msra.mxu0 0.0
        %623 = vmatprep.subr.mxu0 0.0
        %624 = vmatpush1.msra.mxu0 0.0
        %625 = vmatprep.subr.mxu0 0.0
        %626 = vmatpush1.msra.mxu0 0.0
        %627 = vmatprep.subr.mxu0 0.0
        %628 = vmatpush1.msra.mxu0 0.0
        %629 = vmatprep.subr.mxu0 0.0
        %630 = vmatpush1.msra.mxu0 0.0
        %631 = vmatprep.subr.mxu0 0.0
        %632 = vmatpush1.msra.mxu0 0.0
        %633 = vmatprep.subr.mxu0 0.0
        %634 = vmatpush1.msra.mxu0 0.0
        %635 = vmatprep.subr.mxu0 0.0
        %636 = vmatpush1.msra.mxu0 0.0
        %637 = vmatprep.subr.mxu0 0.0
        %638 = vmatpush1.msra.mxu0 0.0
        %639 = vmatprep.subr.mxu0 0.0
        %640 = vmatpush1.msra.mxu0 0.0
        %641 = vmatprep.subr.mxu0 0.0
        %642 = vmatpush1.msra.mxu0 0.0
        %643 = vmatprep.subr.mxu0 0.0
        %644 = vmatpush1.msra.mxu0 0.0
        %645 = vmatprep.subr.mxu0 0.0
        %646 = vmatpush1.msra.mxu0 0.0
        %647 = vmatprep.subr.mxu0 0.0
        %648 = vmatpush1.msra.mxu0 0.0
        %649 = vmatprep.subr.mxu0 0.0
        %650 = vmatpush1.msra.mxu0 0.0
        %651 = vmatprep.subr.mxu0 0.0
        %652 = vmatpush1.msra.mxu0 0.0
        %653 = vmatprep.subr.mxu0 0.0
        %654 = vmatpush1.msra.mxu0 0.0
        %655 = vmatprep.subr.mxu0 0.0
        %656 = vmatpush1.msra.mxu0 0.0
        %657 = vmatprep.subr.mxu0 0.0
        %658 = vmatpush1.msra.mxu0 0.0
        %659 = vmatprep.subr.mxu0 0.0
        %660 = vmatpush1.msra.mxu0 0.0
        %661 = vmatprep.mubr.f32.mxu0 0.0
        %662 = vmatmul.mubr.f32.gmra.mrb[0].mxu0 %v314
        %v663 = vpop.f32.mrb[0].mxu0
        %v664 = vadd.f32 0.0, %v663
        %v665 = vpop.f32.mrb[0].mxu0
        %v666 = vadd.f32 0.0, %v665
        %667 = vmatprep.mubr.f32.mxu0 0.0
        %668 = vmatmul.mubr.f32.gmra.mrb[0].mxu0 %v317
        %v669 = vpop.f32.mrb[0].mxu0
        %v670 = vadd.f32 0.0, %v669
        %v671 = vpop.f32.mrb[0].mxu0
        %v672 = vadd.f32 0.0, %v671
        %673 = vdwg.mxu0
        %674 = vmatprep.subr.mxu0 %v581
        %675 = vmatpush1.msra.mxu0 %v580
        %676 = vmatprep.subr.mxu0 %v583
        %677 = vmatpush1.msra.mxu0 %v582
        %678 = vmatprep.subr.mxu0 %v585
        %679 = vmatpush1.msra.mxu0 %v584
        %680 = vmatprep.subr.mxu0 %v587
        %681 = vmatpush1.msra.mxu0 %v586
        %682 = vmatprep.subr.mxu0 0.0
        %683 = vmatpush1.msra.mxu0 0.0
        %684 = vmatprep.subr.mxu0 0.0
        %685 = vmatpush1.msra.mxu0 0.0
        %686 = vmatprep.subr.mxu0 0.0
        %687 = vmatpush1.msra.mxu0 0.0
        %688 = vmatprep.subr.mxu0 0.0
        %689 = vmatpush1.msra.mxu0 0.0
        %690 = vmatprep.subr.mxu0 0.0
        %691 = vmatpush1.msra.mxu0 0.0
        %692 = vmatprep.subr.mxu0 0.0
        %693 = vmatpush1.msra.mxu0 0.0
        %694 = vmatprep.subr.mxu0 0.0
        %695 = vmatpush1.msra.mxu0 0.0
        %696 = vmatprep.subr.mxu0 0.0
        %697 = vmatpush1.msra.mxu0 0.0
        %698 = vmatprep.subr.mxu0 0.0
        %699 = vmatpush1.msra.mxu0 0.0
        %700 = vmatprep.subr.mxu0 0.0
        %701 = vmatpush1.msra.mxu0 0.0
        %702 = vmatprep.subr.mxu0 0.0
        %703 = vmatpush1.msra.mxu0 0.0
        %704 = vmatprep.subr.mxu0 0.0
        %705 = vmatpush1.msra.mxu0 0.0
        %706 = vmatprep.subr.mxu0 0.0
        %707 = vmatpush1.msra.mxu0 0.0
        %708 = vmatprep.subr.mxu0 0.0
        %709 = vmatpush1.msra.mxu0 0.0
        %710 = vmatprep.subr.mxu0 0.0
        %711 = vmatpush1.msra.mxu0 0.0
        %712 = vmatprep.subr.mxu0 0.0
        %713 = vmatpush1.msra.mxu0 0.0
        %714 = vmatprep.subr.mxu0 0.0
        %715 = vmatpush1.msra.mxu0 0.0
        %716 = vmatprep.subr.mxu0 0.0
        %717 = vmatpush1.msra.mxu0 0.0
        %718 = vmatprep.subr.mxu0 0.0
        %719 = vmatpush1.msra.mxu0 0.0
        %720 = vmatprep.subr.mxu0 0.0
        %721 = vmatpush1.msra.mxu0 0.0
        %722 = vmatprep.subr.mxu0 0.0
        %723 = vmatpush1.msra.mxu0 0.0
        %724 = vmatprep.subr.mxu0 0.0
        %725 = vmatpush1.msra.mxu0 0.0
        %726 = vmatprep.subr.mxu0 0.0
        %727 = vmatpush1.msra.mxu0 0.0
        %728 = vmatprep.subr.mxu0 0.0
        %729 = vmatpush1.msra.mxu0 0.0
        %730 = vmatprep.subr.mxu0 0.0
        %731 = vmatpush1.msra.mxu0 0.0
        %732 = vmatprep.subr.mxu0 0.0
        %733 = vmatpush1.msra.mxu0 0.0
        %734 = vmatprep.subr.mxu0 0.0
        %735 = vmatpush1.msra.mxu0 0.0
        %736 = vmatprep.subr.mxu0 0.0
        %737 = vmatpush1.msra.mxu0 0.0
        %738 = vmatprep.mubr.f32.mxu0 0.0
        %739 = vmatmul.mubr.f32.gmra.mrb[0].mxu0 %v397
        %v740 = vpop.f32.mrb[0].mxu0
        %v741 = vadd.f32 %v664, %v740
        %v742 = vpop.f32.mrb[0].mxu0
        %v743 = vadd.f32 %v666, %v742
        %744 = vmatprep.mubr.f32.mxu0 0.0
        %745 = vmatmul.mubr.f32.gmra.mrb[0].mxu0 %v400
        %v746 = vpop.f32.mrb[0].mxu0
        %v747 = vadd.f32 %v670, %v746
        %v748 = vpop.f32.mrb[0].mxu0
        %v749 = vadd.f32 %v672, %v748
        %750 = vdwg.mxu0
        %s751 = scalar_lea.vmem [#allocation4], 320
        %v752 = vld [vmem:[%s751] sm:$0xff]
        %v753 = vld [vmem:[%s751 + $0x8] sm:$0xff]
        %v754 = vld [vmem:[%s751 + $0x10] sm:$0xff]
        %v755 = vld [vmem:[%s751 + $0x18] sm:$0xff]
        %v756 = vld [vmem:[%s751 + $0x20] sm:$0xff]
        %v757 = vld [vmem:[%s751 + $0x28] sm:$0xff]
        %v758 = vld [vmem:[%s751 + $0x30] sm:$0xff]
        %v759 = vld [vmem:[%s751 + $0x38] sm:$0xff]
        %760 = vmatprep.subr.mxu0 %v753
        %761 = vmatpush1.msra.mxu0 %v752
        %762 = vmatprep.subr.mxu0 %v755
        %763 = vmatpush1.msra.mxu0 %v754
        %764 = vmatprep.subr.mxu0 %v757
        %765 = vmatpush1.msra.mxu0 %v756
        %766 = vmatprep.subr.mxu0 %v759
        %767 = vmatpush1.msra.mxu0 %v758
        %768 = vmatprep.subr.mxu0 0.0
        %769 = vmatpush1.msra.mxu0 0.0
        %770 = vmatprep.subr.mxu0 0.0
        %771 = vmatpush1.msra.mxu0 0.0
        %772 = vmatprep.subr.mxu0 0.0
        %773 = vmatpush1.msra.mxu0 0.0
        %774 = vmatprep.subr.mxu0 0.0
        %775 = vmatpush1.msra.mxu0 0.0
        %776 = vmatprep.subr.mxu0 0.0
        %777 = vmatpush1.msra.mxu0 0.0
        %778 = vmatprep.subr.mxu0 0.0
        %779 = vmatpush1.msra.mxu0 0.0
        %780 = vmatprep.subr.mxu0 0.0
        %781 = vmatpush1.msra.mxu0 0.0
        %782 = vmatprep.subr.mxu0 0.0
        %783 = vmatpush1.msra.mxu0 0.0
        %784 = vmatprep.subr.mxu0 0.0
        %785 = vmatpush1.msra.mxu0 0.0
        %786 = vmatprep.subr.mxu0 0.0
        %787 = vmatpush1.msra.mxu0 0.0
        %788 = vmatprep.subr.mxu0 0.0
        %789 = vmatpush1.msra.mxu0 0.0
        %790 = vmatprep.subr.mxu0 0.0
        %791 = vmatpush1.msra.mxu0 0.0
        %792 = vmatprep.subr.mxu0 0.0
        %793 = vmatpush1.msra.mxu0 0.0
        %794 = vmatprep.subr.mxu0 0.0
        %795 = vmatpush1.msra.mxu0 0.0
        %796 = vmatprep.subr.mxu0 0.0
        %797 = vmatpush1.msra.mxu0 0.0
        %798 = vmatprep.subr.mxu0 0.0
        %799 = vmatpush1.msra.mxu0 0.0
        %800 = vmatprep.subr.mxu0 0.0
        %801 = vmatpush1.msra.mxu0 0.0
        %802 = vmatprep.subr.mxu0 0.0
        %803 = vmatpush1.msra.mxu0 0.0
        %804 = vmatprep.subr.mxu0 0.0
        %805 = vmatpush1.msra.mxu0 0.0
        %806 = vmatprep.subr.mxu0 0.0
        %807 = vmatpush1.msra.mxu0 0.0
        %808 = vmatprep.subr.mxu0 0.0
        %809 = vmatpush1.msra.mxu0 0.0
        %810 = vmatprep.subr.mxu0 0.0
        %811 = vmatpush1.msra.mxu0 0.0
        %812 = vmatprep.subr.mxu0 0.0
        %813 = vmatpush1.msra.mxu0 0.0
        %814 = vmatprep.subr.mxu0 0.0
        %815 = vmatpush1.msra.mxu0 0.0
        %816 = vmatprep.subr.mxu0 0.0
        %817 = vmatpush1.msra.mxu0 0.0
        %818 = vmatprep.subr.mxu0 0.0
        %819 = vmatpush1.msra.mxu0 0.0
        %820 = vmatprep.subr.mxu0 0.0
        %821 = vmatpush1.msra.mxu0 0.0
        %822 = vmatprep.subr.mxu0 0.0
        %823 = vmatpush1.msra.mxu0 0.0
        %824 = vmatprep.mubr.f32.mxu0 0.0
        %825 = vmatmul.mubr.f32.gmra.mrb[0].mxu0 %v489
        %v826 = vpop.f32.mrb[0].mxu0
        %v827 = vadd.f32 0.0, %v826
        %v828 = vpop.f32.mrb[0].mxu0
        %v829 = vadd.f32 0.0, %v828
        %830 = vmatprep.mubr.f32.mxu0 0.0
        %831 = vmatmul.mubr.f32.gmra.mrb[0].mxu0 %v492
        %v832 = vpop.f32.mrb[0].mxu0
        %v833 = vadd.f32 0.0, %v832
        %v834 = vpop.f32.mrb[0].mxu0
        %v835 = vadd.f32 0.0, %v834
        %836 = vdwg.mxu0
        %v837 = vadd.f32 %v741, %v827
        %v838 = vadd.f32 %v743, %v829
        %v839 = vadd.f32 %v747, %v833
        %v840 = vadd.f32 %v749, %v835
        %v841 = vld [vmem:[#allocation3] sm:$0xff]
        %v842 = vld [vmem:[#allocation3 + $0x8] sm:$0xff]
        %v843 = vld [vmem:[#allocation3 + $0x10] sm:$0xff]
        %v844 = vld [vmem:[#allocation3 + $0x18] sm:$0xff]
        %v845 = vmax.f32 %v841, %v837
        %v846 = vmax.f32 %v842, %v838
        %v847 = vmax.f32 %v843, %v839
        %v848 = vmax.f32 %v844, %v840
        %849 = vst [vmem:[#allocation3] sm:$0xff] %v845
        %850 = vst [vmem:[#allocation3 + $0x8] sm:$0xff] %v846
        %851 = vst [vmem:[#allocation3 + $0x10] sm:$0xff] %v847
        %852 = vst [vmem:[#allocation3 + $0x18] sm:$0xff] %v848
        %v853 = vld [vmem:[#allocation4] sm:$0xff]
        %v854 = vld [vmem:[#allocation4 + $0x8] sm:$0xff]
        %v855 = vld [vmem:[#allocation4 + $0x10] sm:$0xff]
        %v856 = vld [vmem:[#allocation4 + $0x18] sm:$0xff]
        %v857 = vld [vmem:[#allocation4 + $0x20] sm:$0xff]
        %v858 = vld [vmem:[#allocation4 + $0x28] sm:$0xff]
        %v859 = vld [vmem:[#allocation4 + $0x30] sm:$0xff]
        %v860 = vld [vmem:[#allocation4 + $0x38] sm:$0xff]
        %v861 = vld [vmem:[%s303] sm:$0xff]
        %v862 = vld [vmem:[%s303 + $0x8] sm:$0xff]
        %v863 = vld [vmem:[%s303 + $0x10] sm:$0xff]
        %v864 = vld [vmem:[%s303 + $0x18] sm:$0xff]
        %v865 = vld [vmem:[%s303 + $0x20] sm:$0xff]
        %v866 = vld [vmem:[%s303 + $0x28] sm:$0xff]
        %v867 = vld [vmem:[%s303 + $0x30] sm:$0xff]
        %v868 = vld [vmem:[%s303 + $0x38] sm:$0xff]
        %869 = vmatprep.subr.mxu0 %v862
        %870 = vmatpush1.msra.mxu0 %v861
        %871 = vmatprep.subr.mxu0 %v864
        %872 = vmatpush1.msra.mxu0 %v863
        %873 = vmatprep.subr.mxu0 %v866
        %874 = vmatpush1.msra.mxu0 %v865
        %875 = vmatprep.subr.mxu0 %v868
        %876 = vmatpush1.msra.mxu0 %v867
        %877 = vmatprep.subr.mxu0 0.0
        %878 = vmatpush1.msra.mxu0 0.0
        %879 = vmatprep.subr.mxu0 0.0
        %880 = vmatpush1.msra.mxu0 0.0
        %881 = vmatprep.subr.mxu0 0.0
        %882 = vmatpush1.msra.mxu0 0.0
        %883 = vmatprep.subr.mxu0 0.0
        %884 = vmatpush1.msra.mxu0 0.0
        %885 = vmatprep.subr.mxu0 0.0
        %886 = vmatpush1.msra.mxu0 0.0
        %887 = vmatprep.subr.mxu0 0.0
        %888 = vmatpush1.msra.mxu0 0.0
        %889 = vmatprep.subr.mxu0 0.0
        %890 = vmatpush1.msra.mxu0 0.0
        %891 = vmatprep.subr.mxu0 0.0
        %892 = vmatpush1.msra.mxu0 0.0
        %893 = vmatprep.subr.mxu0 0.0
        %894 = vmatpush1.msra.mxu0 0.0
        %895 = vmatprep.subr.mxu0 0.0
        %896 = vmatpush1.msra.mxu0 0.0
        %897 = vmatprep.subr.mxu0 0.0
        %898 = vmatpush1.msra.mxu0 0.0
        %899 = vmatprep.subr.mxu0 0.0
        %900 = vmatpush1.msra.mxu0 0.0
        %901 = vmatprep.subr.mxu0 0.0
        %902 = vmatpush1.msra.mxu0 0.0
        %903 = vmatprep.subr.mxu0 0.0
        %904 = vmatpush1.msra.mxu0 0.0
        %905 = vmatprep.subr.mxu0 0.0
        %906 = vmatpush1.msra.mxu0 0.0
        %907 = vmatprep.subr.mxu0 0.0
        %908 = vmatpush1.msra.mxu0 0.0
        %909 = vmatprep.subr.mxu0 0.0
        %910 = vmatpush1.msra.mxu0 0.0
        %911 = vmatprep.subr.mxu0 0.0
        %912 = vmatpush1.msra.mxu0 0.0
        %913 = vmatprep.subr.mxu0 0.0
        %914 = vmatpush1.msra.mxu0 0.0
        %915 = vmatprep.subr.mxu0 0.0
        %916 = vmatpush1.msra.mxu0 0.0
        %917 = vmatprep.subr.mxu0 0.0
        %918 = vmatpush1.msra.mxu0 0.0
        %919 = vmatprep.subr.mxu0 0.0
        %920 = vmatpush1.msra.mxu0 0.0
        %921 = vmatprep.subr.mxu0 0.0
        %922 = vmatpush1.msra.mxu0 0.0
        %923 = vmatprep.subr.mxu0 0.0
        %924 = vmatpush1.msra.mxu0 0.0
        %925 = vmatprep.subr.mxu0 0.0
        %926 = vmatpush1.msra.mxu0 0.0
        %927 = vmatprep.subr.mxu0 0.0
        %928 = vmatpush1.msra.mxu0 0.0
        %929 = vmatprep.subr.mxu0 0.0
        %930 = vmatpush1.msra.mxu0 0.0
        %931 = vmatprep.subr.mxu0 0.0
        %932 = vmatpush1.msra.mxu0 0.0
        %933 = vmatprep.mubr.f32.mxu0 0.0
        %934 = vmatmul.mubr.f32.gmra.mrb[0].mxu0 %v489
        %v935 = vpop.f32.mrb[0].mxu0
        %v936 = vadd.f32 0.0, %v935
        %v937 = vpop.f32.mrb[0].mxu0
        %v938 = vadd.f32 0.0, %v937
        %939 = vmatprep.mubr.f32.mxu0 0.0
        %940 = vmatmul.mubr.f32.gmra.mrb[0].mxu0 %v492
        %v941 = vpop.f32.mrb[0].mxu0
        %v942 = vadd.f32 0.0, %v941
        %v943 = vpop.f32.mrb[0].mxu0
        %v944 = vadd.f32 0.0, %v943
        %945 = vdwg.mxu0
        %946 = vmatprep.subr.mxu0 %v854
        %947 = vmatpush1.msra.mxu0 %v853
        %948 = vmatprep.subr.mxu0 %v856
        %949 = vmatpush1.msra.mxu0 %v855
        %950 = vmatprep.subr.mxu0 %v858
        %951 = vmatpush1.msra.mxu0 %v857
        %952 = vmatprep.subr.mxu0 %v860
        %953 = vmatpush1.msra.mxu0 %v859
        %954 = vmatprep.subr.mxu0 0.0
        %955 = vmatpush1.msra.mxu0 0.0
        %956 = vmatprep.subr.mxu0 0.0
        %957 = vmatpush1.msra.mxu0 0.0
        %958 = vmatprep.subr.mxu0 0.0
        %959 = vmatpush1.msra.mxu0 0.0
        %960 = vmatprep.subr.mxu0 0.0
        %961 = vmatpush1.msra.mxu0 0.0
        %962 = vmatprep.subr.mxu0 0.0
        %963 = vmatpush1.msra.mxu0 0.0
        %964 = vmatprep.subr.mxu0 0.0
        %965 = vmatpush1.msra.mxu0 0.0
        %966 = vmatprep.subr.mxu0 0.0
        %967 = vmatpush1.msra.mxu0 0.0
        %968 = vmatprep.subr.mxu0 0.0
        %969 = vmatpush1.msra.mxu0 0.0
        %970 = vmatprep.subr.mxu0 0.0
        %971 = vmatpush1.msra.mxu0 0.0
        %972 = vmatprep.subr.mxu0 0.0
        %973 = vmatpush1.msra.mxu0 0.0
        %974 = vmatprep.subr.mxu0 0.0
        %975 = vmatpush1.msra.mxu0 0.0
        %976 = vmatprep.subr.mxu0 0.0
        %977 = vmatpush1.msra.mxu0 0.0
        %978 = vmatprep.subr.mxu0 0.0
        %979 = vmatpush1.msra.mxu0 0.0
        %980 = vmatprep.subr.mxu0 0.0
        %981 = vmatpush1.msra.mxu0 0.0
        %982 = vmatprep.subr.mxu0 0.0
        %983 = vmatpush1.msra.mxu0 0.0
        %984 = vmatprep.subr.mxu0 0.0
        %985 = vmatpush1.msra.mxu0 0.0
        %986 = vmatprep.subr.mxu0 0.0
        %987 = vmatpush1.msra.mxu0 0.0
        %988 = vmatprep.subr.mxu0 0.0
        %989 = vmatpush1.msra.mxu0 0.0
        %990 = vmatprep.subr.mxu0 0.0
        %991 = vmatpush1.msra.mxu0 0.0
        %992 = vmatprep.subr.mxu0 0.0
        %993 = vmatpush1.msra.mxu0 0.0
        %994 = vmatprep.subr.mxu0 0.0
        %995 = vmatpush1.msra.mxu0 0.0
        %996 = vmatprep.subr.mxu0 0.0
        %997 = vmatpush1.msra.mxu0 0.0
        %998 = vmatprep.subr.mxu0 0.0
        %999 = vmatpush1.msra.mxu0 0.0
        %1000 = vmatprep.subr.mxu0 0.0
        %1001 = vmatpush1.msra.mxu0 0.0
        %1002 = vmatprep.subr.mxu0 0.0
        %1003 = vmatpush1.msra.mxu0 0.0
        %1004 = vmatprep.subr.mxu0 0.0
        %1005 = vmatpush1.msra.mxu0 0.0
        %1006 = vmatprep.subr.mxu0 0.0
        %1007 = vmatpush1.msra.mxu0 0.0
        %1008 = vmatprep.subr.mxu0 0.0
        %1009 = vmatpush1.msra.mxu0 0.0
        %1010 = vmatprep.mubr.f32.mxu0 0.0
        %1011 = vmatmul.mubr.f32.gmra.mrb[0].mxu0 %v314
        %v1012 = vpop.f32.mrb[0].mxu0
        %v1013 = vadd.f32 %v936, %v1012
        %v1014 = vpop.f32.mrb[0].mxu0
        %v1015 = vadd.f32 %v938, %v1014
        %1016 = vmatprep.mubr.f32.mxu0 0.0
        %1017 = vmatmul.mubr.f32.gmra.mrb[0].mxu0 %v317
        %v1018 = vpop.f32.mrb[0].mxu0
        %v1019 = vadd.f32 %v942, %v1018
        %v1020 = vpop.f32.mrb[0].mxu0
        %v1021 = vadd.f32 %v944, %v1020
        %1022 = vdwg.mxu0
        %v1023 = vld [vmem:[%s479] sm:$0xff]
        %v1024 = vld [vmem:[%s479 + $0x8] sm:$0xff]
        %v1025 = vld [vmem:[%s479 + $0x10] sm:$0xff]
        %v1026 = vld [vmem:[%s479 + $0x18] sm:$0xff]
        %v1027 = vld [vmem:[%s479 + $0x20] sm:$0xff]
        %v1028 = vld [vmem:[%s479 + $0x28] sm:$0xff]
        %v1029 = vld [vmem:[%s479 + $0x30] sm:$0xff]
        %v1030 = vld [vmem:[%s479 + $0x38] sm:$0xff]
        %v1032 = vsel %vm312, %v289, 0
        %v1035 = vsel %vm312, %v290, 0
        %1037 = vmatprep.subr.mxu0 %v1024
        %1038 = vmatpush1.msra.mxu0 %v1023
        %1039 = vmatprep.subr.mxu0 %v1026
        %1040 = vmatpush1.msra.mxu0 %v1025
        %1041 = vmatprep.subr.mxu0 %v1028
        %1042 = vmatpush1.msra.mxu0 %v1027
        %1043 = vmatprep.subr.mxu0 %v1030
        %1044 = vmatpush1.msra.mxu0 %v1029
        %1045 = vmatprep.subr.mxu0 0.0
        %1046 = vmatpush1.msra.mxu0 0.0
        %1047 = vmatprep.subr.mxu0 0.0
        %1048 = vmatpush1.msra.mxu0 0.0
        %1049 = vmatprep.subr.mxu0 0.0
        %1050 = vmatpush1.msra.mxu0 0.0
        %1051 = vmatprep.subr.mxu0 0.0
        %1052 = vmatpush1.msra.mxu0 0.0
        %1053 = vmatprep.subr.mxu0 0.0
        %1054 = vmatpush1.msra.mxu0 0.0
        %1055 = vmatprep.subr.mxu0 0.0
        %1056 = vmatpush1.msra.mxu0 0.0
        %1057 = vmatprep.subr.mxu0 0.0
        %1058 = vmatpush1.msra.mxu0 0.0
        %1059 = vmatprep.subr.mxu0 0.0
        %1060 = vmatpush1.msra.mxu0 0.0
        %1061 = vmatprep.subr.mxu0 0.0
        %1062 = vmatpush1.msra.mxu0 0.0
        %1063 = vmatprep.subr.mxu0 0.0
        %1064 = vmatpush1.msra.mxu0 0.0
        %1065 = vmatprep.subr.mxu0 0.0
        %1066 = vmatpush1.msra.mxu0 0.0
        %1067 = vmatprep.subr.mxu0 0.0
        %1068 = vmatpush1.msra.mxu0 0.0
        %1069 = vmatprep.subr.mxu0 0.0
        %1070 = vmatpush1.msra.mxu0 0.0
        %1071 = vmatprep.subr.mxu0 0.0
        %1072 = vmatpush1.msra.mxu0 0.0
        %1073 = vmatprep.subr.mxu0 0.0
        %1074 = vmatpush1.msra.mxu0 0.0
        %1075 = vmatprep.subr.mxu0 0.0
        %1076 = vmatpush1.msra.mxu0 0.0
        %1077 = vmatprep.subr.mxu0 0.0
        %1078 = vmatpush1.msra.mxu0 0.0
        %1079 = vmatprep.subr.mxu0 0.0
        %1080 = vmatpush1.msra.mxu0 0.0
        %1081 = vmatprep.subr.mxu0 0.0
        %1082 = vmatpush1.msra.mxu0 0.0
        %1083 = vmatprep.subr.mxu0 0.0
        %1084 = vmatpush1.msra.mxu0 0.0
        %1085 = vmatprep.subr.mxu0 0.0
        %1086 = vmatpush1.msra.mxu0 0.0
        %1087 = vmatprep.subr.mxu0 0.0
        %1088 = vmatpush1.msra.mxu0 0.0
        %1089 = vmatprep.subr.mxu0 0.0
        %1090 = vmatpush1.msra.mxu0 0.0
        %1091 = vmatprep.subr.mxu0 0.0
        %1092 = vmatpush1.msra.mxu0 0.0
        %1093 = vmatprep.subr.mxu0 0.0
        %1094 = vmatpush1.msra.mxu0 0.0
        %1095 = vmatprep.subr.mxu0 0.0
        %1096 = vmatpush1.msra.mxu0 0.0
        %1097 = vmatprep.subr.mxu0 0.0
        %1098 = vmatpush1.msra.mxu0 0.0
        %1099 = vmatprep.subr.mxu0 0.0
        %1100 = vmatpush1.msra.mxu0 0.0
        %1101 = vmatprep.mubr.f32.mxu0 0.0
        %1102 = vmatmul.mubr.f32.gmra.mrb[0].mxu0 %v1032
        %v1103 = vpop.f32.mrb[0].mxu0
        %v1104 = vadd.f32 0.0, %v1103
        %v1105 = vpop.f32.mrb[0].mxu0
        %v1106 = vadd.f32 0.0, %v1105
        %1107 = vmatprep.mubr.f32.mxu0 0.0
        %1108 = vmatmul.mubr.f32.gmra.mrb[0].mxu0 %v1035
        %v1109 = vpop.f32.mrb[0].mxu0
        %v1110 = vadd.f32 0.0, %v1109
        %v1111 = vpop.f32.mrb[0].mxu0
        %v1112 = vadd.f32 0.0, %v1111
        %1113 = vdwg.mxu0
        %v1114 = vadd.f32 %v1013, %v1104
        %v1115 = vadd.f32 %v1015, %v1106
        %v1116 = vadd.f32 %v1019, %v1110
        %v1117 = vadd.f32 %v1021, %v1112
        %v1118 = vld [vmem:[#allocation3] sm:$0xff]
        %v1119 = vld [vmem:[#allocation3 + $0x8] sm:$0xff]
        %v1120 = vld [vmem:[#allocation3 + $0x10] sm:$0xff]
        %v1121 = vld [vmem:[#allocation3 + $0x18] sm:$0xff]
        %v1122 = vmax.f32 %v1118, %v1114
        %v1123 = vmax.f32 %v1119, %v1115
        %v1124 = vmax.f32 %v1120, %v1116
        %v1125 = vmax.f32 %v1121, %v1117
        %1126 = vst [vmem:[#allocation3] sm:$0xff] %v1122
        %1127 = vst [vmem:[#allocation3 + $0x8] sm:$0xff] %v1123
        %1128 = vst [vmem:[#allocation3 + $0x10] sm:$0xff] %v1124
        %1129 = vst [vmem:[#allocation3 + $0x18] sm:$0xff] %v1125
        %v1130 = vld [vmem:[%s579] sm:$0xff]
        %v1131 = vld [vmem:[%s579 + $0x8] sm:$0xff]
        %v1132 = vld [vmem:[%s579 + $0x10] sm:$0xff]
        %v1133 = vld [vmem:[%s579 + $0x18] sm:$0xff]
        %v1134 = vld [vmem:[%s579 + $0x20] sm:$0xff]
        %v1135 = vld [vmem:[%s579 + $0x28] sm:$0xff]
        %v1136 = vld [vmem:[%s579 + $0x30] sm:$0xff]
        %v1137 = vld [vmem:[%s579 + $0x38] sm:$0xff]
        %v1138 = vld [vmem:[%s588] sm:$0xff]
        %v1139 = vld [vmem:[%s588 + $0x8] sm:$0xff]
        %v1140 = vld [vmem:[%s588 + $0x10] sm:$0xff]
        %v1141 = vld [vmem:[%s588 + $0x18] sm:$0xff]
        %v1142 = vld [vmem:[%s588 + $0x20] sm:$0xff]
        %v1143 = vld [vmem:[%s588 + $0x28] sm:$0xff]
        %v1144 = vld [vmem:[%s588 + $0x30] sm:$0xff]
        %v1145 = vld [vmem:[%s588 + $0x38] sm:$0xff]
        %1146 = vmatprep.subr.mxu0 %v1139
        %1147 = vmatpush1.msra.mxu0 %v1138
        %1148 = vmatprep.subr.mxu0 %v1141
        %1149 = vmatpush1.msra.mxu0 %v1140
        %1150 = vmatprep.subr.mxu0 %v1143
        %1151 = vmatpush1.msra.mxu0 %v1142
        %1152 = vmatprep.subr.mxu0 %v1145
        %1153 = vmatpush1.msra.mxu0 %v1144
        %1154 = vmatprep.subr.mxu0 0.0
        %1155 = vmatpush1.msra.mxu0 0.0
        %1156 = vmatprep.subr.mxu0 0.0
        %1157 = vmatpush1.msra.mxu0 0.0
        %1158 = vmatprep.subr.mxu0 0.0
        %1159 = vmatpush1.msra.mxu0 0.0
        %1160 = vmatprep.subr.mxu0 0.0
        %1161 = vmatpush1.msra.mxu0 0.0
        %1162 = vmatprep.subr.mxu0 0.0
        %1163 = vmatpush1.msra.mxu0 0.0
        %1164 = vmatprep.subr.mxu0 0.0
        %1165 = vmatpush1.msra.mxu0 0.0
        %1166 = vmatprep.subr.mxu0 0.0
        %1167 = vmatpush1.msra.mxu0 0.0
        %1168 = vmatprep.subr.mxu0 0.0
        %1169 = vmatpush1.msra.mxu0 0.0
        %1170 = vmatprep.subr.mxu0 0.0
        %1171 = vmatpush1.msra.mxu0 0.0
        %1172 = vmatprep.subr.mxu0 0.0
        %1173 = vmatpush1.msra.mxu0 0.0
        %1174 = vmatprep.subr.mxu0 0.0
        %1175 = vmatpush1.msra.mxu0 0.0
        %1176 = vmatprep.subr.mxu0 0.0
        %1177 = vmatpush1.msra.mxu0 0.0
        %1178 = vmatprep.subr.mxu0 0.0
        %1179 = vmatpush1.msra.mxu0 0.0
        %1180 = vmatprep.subr.mxu0 0.0
        %1181 = vmatpush1.msra.mxu0 0.0
        %1182 = vmatprep.subr.mxu0 0.0
        %1183 = vmatpush1.msra.mxu0 0.0
        %1184 = vmatprep.subr.mxu0 0.0
        %1185 = vmatpush1.msra.mxu0 0.0
        %1186 = vmatprep.subr.mxu0 0.0
        %1187 = vmatpush1.msra.mxu0 0.0
        %1188 = vmatprep.subr.mxu0 0.0
        %1189 = vmatpush1.msra.mxu0 0.0
        %1190 = vmatprep.subr.mxu0 0.0
        %1191 = vmatpush1.msra.mxu0 0.0
        %1192 = vmatprep.subr.mxu0 0.0
        %1193 = vmatpush1.msra.mxu0 0.0
        %1194 = vmatprep.subr.mxu0 0.0
        %1195 = vmatpush1.msra.mxu0 0.0
        %1196 = vmatprep.subr.mxu0 0.0
        %1197 = vmatpush1.msra.mxu0 0.0
        %1198 = vmatprep.subr.mxu0 0.0
        %1199 = vmatpush1.msra.mxu0 0.0
        %1200 = vmatprep.subr.mxu0 0.0
        %1201 = vmatpush1.msra.mxu0 0.0
        %1202 = vmatprep.subr.mxu0 0.0
        %1203 = vmatpush1.msra.mxu0 0.0
        %1204 = vmatprep.subr.mxu0 0.0
        %1205 = vmatpush1.msra.mxu0 0.0
        %1206 = vmatprep.subr.mxu0 0.0
        %1207 = vmatpush1.msra.mxu0 0.0
        %1208 = vmatprep.subr.mxu0 0.0
        %1209 = vmatpush1.msra.mxu0 0.0
        %1210 = vmatprep.mubr.f32.mxu0 0.0
        %1211 = vmatmul.mubr.f32.gmra.mrb[0].mxu0 %v489
        %v1212 = vpop.f32.mrb[0].mxu0
        %v1213 = vadd.f32 0.0, %v1212
        %v1214 = vpop.f32.mrb[0].mxu0
        %v1215 = vadd.f32 0.0, %v1214
        %1216 = vmatprep.mubr.f32.mxu0 0.0
        %1217 = vmatmul.mubr.f32.gmra.mrb[0].mxu0 %v492
        %v1218 = vpop.f32.mrb[0].mxu0
        %v1219 = vadd.f32 0.0, %v1218
        %v1220 = vpop.f32.mrb[0].mxu0
        %v1221 = vadd.f32 0.0, %v1220
        %1222 = vdwg.mxu0
        %1223 = vmatprep.subr.mxu0 %v1131
        %1224 = vmatpush1.msra.mxu0 %v1130
        %1225 = vmatprep.subr.mxu0 %v1133
        %1226 = vmatpush1.msra.mxu0 %v1132
        %1227 = vmatprep.subr.mxu0 %v1135
        %1228 = vmatpush1.msra.mxu0 %v1134
        %1229 = vmatprep.subr.mxu0 %v1137
        %1230 = vmatpush1.msra.mxu0 %v1136
        %1231 = vmatprep.subr.mxu0 0.0
        %1232 = vmatpush1.msra.mxu0 0.0
        %1233 = vmatprep.subr.mxu0 0.0
        %1234 = vmatpush1.msra.mxu0 0.0
        %1235 = vmatprep.subr.mxu0 0.0
        %1236 = vmatpush1.msra.mxu0 0.0
        %1237 = vmatprep.subr.mxu0 0.0
        %1238 = vmatpush1.msra.mxu0 0.0
        %1239 = vmatprep.subr.mxu0 0.0
        %1240 = vmatpush1.msra.mxu0 0.0
        %1241 = vmatprep.subr.mxu0 0.0
        %1242 = vmatpush1.msra.mxu0 0.0
        %1243 = vmatprep.subr.mxu0 0.0
        %1244 = vmatpush1.msra.mxu0 0.0
        %1245 = vmatprep.subr.mxu0 0.0
        %1246 = vmatpush1.msra.mxu0 0.0
        %1247 = vmatprep.subr.mxu0 0.0
        %1248 = vmatpush1.msra.mxu0 0.0
        %1249 = vmatprep.subr.mxu0 0.0
        %1250 = vmatpush1.msra.mxu0 0.0
        %1251 = vmatprep.subr.mxu0 0.0
        %1252 = vmatpush1.msra.mxu0 0.0
        %1253 = vmatprep.subr.mxu0 0.0
        %1254 = vmatpush1.msra.mxu0 0.0
        %1255 = vmatprep.subr.mxu0 0.0
        %1256 = vmatpush1.msra.mxu0 0.0
        %1257 = vmatprep.subr.mxu0 0.0
        %1258 = vmatpush1.msra.mxu0 0.0
        %1259 = vmatprep.subr.mxu0 0.0
        %1260 = vmatpush1.msra.mxu0 0.0
        %1261 = vmatprep.subr.mxu0 0.0
        %1262 = vmatpush1.msra.mxu0 0.0
        %1263 = vmatprep.subr.mxu0 0.0
        %1264 = vmatpush1.msra.mxu0 0.0
        %1265 = vmatprep.subr.mxu0 0.0
        %1266 = vmatpush1.msra.mxu0 0.0
        %1267 = vmatprep.subr.mxu0 0.0
        %1268 = vmatpush1.msra.mxu0 0.0
        %1269 = vmatprep.subr.mxu0 0.0
        %1270 = vmatpush1.msra.mxu0 0.0
        %1271 = vmatprep.subr.mxu0 0.0
        %1272 = vmatpush1.msra.mxu0 0.0
        %1273 = vmatprep.subr.mxu0 0.0
        %1274 = vmatpush1.msra.mxu0 0.0
        %1275 = vmatprep.subr.mxu0 0.0
        %1276 = vmatpush1.msra.mxu0 0.0
        %1277 = vmatprep.subr.mxu0 0.0
        %1278 = vmatpush1.msra.mxu0 0.0
        %1279 = vmatprep.subr.mxu0 0.0
        %1280 = vmatpush1.msra.mxu0 0.0
        %1281 = vmatprep.subr.mxu0 0.0
        %1282 = vmatpush1.msra.mxu0 0.0
        %1283 = vmatprep.subr.mxu0 0.0
        %1284 = vmatpush1.msra.mxu0 0.0
        %1285 = vmatprep.subr.mxu0 0.0
        %1286 = vmatpush1.msra.mxu0 0.0
        %1287 = vmatprep.mubr.f32.mxu0 0.0
        %1288 = vmatmul.mubr.f32.gmra.mrb[0].mxu0 %v314
        %v1289 = vpop.f32.mrb[0].mxu0
        %v1290 = vadd.f32 %v1213, %v1289
        %v1291 = vpop.f32.mrb[0].mxu0
        %v1292 = vadd.f32 %v1215, %v1291
        %1293 = vmatprep.mubr.f32.mxu0 0.0
        %1294 = vmatmul.mubr.f32.gmra.mrb[0].mxu0 %v317
        %v1295 = vpop.f32.mrb[0].mxu0
        %v1296 = vadd.f32 %v1219, %v1295
        %v1297 = vpop.f32.mrb[0].mxu0
        %v1298 = vadd.f32 %v1221, %v1297
        %1299 = vdwg.mxu0
        %v1300 = vld [vmem:[%s751] sm:$0xff]
        %v1301 = vld [vmem:[%s751 + $0x8] sm:$0xff]
        %v1302 = vld [vmem:[%s751 + $0x10] sm:$0xff]
        %v1303 = vld [vmem:[%s751 + $0x18] sm:$0xff]
        %v1304 = vld [vmem:[%s751 + $0x20] sm:$0xff]
        %v1305 = vld [vmem:[%s751 + $0x28] sm:$0xff]
        %v1306 = vld [vmem:[%s751 + $0x30] sm:$0xff]
        %v1307 = vld [vmem:[%s751 + $0x38] sm:$0xff]
        %1308 = vmatprep.subr.mxu0 %v1301
        %1309 = vmatpush1.msra.mxu0 %v1300
        %1310 = vmatprep.subr.mxu0 %v1303
        %1311 = vmatpush1.msra.mxu0 %v1302
        %1312 = vmatprep.subr.mxu0 %v1305
        %1313 = vmatpush1.msra.mxu0 %v1304
        %1314 = vmatprep.subr.mxu0 %v1307
        %1315 = vmatpush1.msra.mxu0 %v1306
        %1316 = vmatprep.subr.mxu0 0.0
        %1317 = vmatpush1.msra.mxu0 0.0
        %1318 = vmatprep.subr.mxu0 0.0
        %1319 = vmatpush1.msra.mxu0 0.0
        %1320 = vmatprep.subr.mxu0 0.0
        %1321 = vmatpush1.msra.mxu0 0.0
        %1322 = vmatprep.subr.mxu0 0.0
        %1323 = vmatpush1.msra.mxu0 0.0
        %1324 = vmatprep.subr.mxu0 0.0
        %1325 = vmatpush1.msra.mxu0 0.0
        %1326 = vmatprep.subr.mxu0 0.0
        %1327 = vmatpush1.msra.mxu0 0.0
        %1328 = vmatprep.subr.mxu0 0.0
        %1329 = vmatpush1.msra.mxu0 0.0
        %1330 = vmatprep.subr.mxu0 0.0
        %1331 = vmatpush1.msra.mxu0 0.0
        %1332 = vmatprep.subr.mxu0 0.0
        %1333 = vmatpush1.msra.mxu0 0.0
        %1334 = vmatprep.subr.mxu0 0.0
        %1335 = vmatpush1.msra.mxu0 0.0
        %1336 = vmatprep.subr.mxu0 0.0
        %1337 = vmatpush1.msra.mxu0 0.0
        %1338 = vmatprep.subr.mxu0 0.0
        %1339 = vmatpush1.msra.mxu0 0.0
        %1340 = vmatprep.subr.mxu0 0.0
        %1341 = vmatpush1.msra.mxu0 0.0
        %1342 = vmatprep.subr.mxu0 0.0
        %1343 = vmatpush1.msra.mxu0 0.0
        %1344 = vmatprep.subr.mxu0 0.0
        %1345 = vmatpush1.msra.mxu0 0.0
        %1346 = vmatprep.subr.mxu0 0.0
        %1347 = vmatpush1.msra.mxu0 0.0
        %1348 = vmatprep.subr.mxu0 0.0
        %1349 = vmatpush1.msra.mxu0 0.0
        %1350 = vmatprep.subr.mxu0 0.0
        %1351 = vmatpush1.msra.mxu0 0.0
        %1352 = vmatprep.subr.mxu0 0.0
        %1353 = vmatpush1.msra.mxu0 0.0
        %1354 = vmatprep.subr.mxu0 0.0
        %1355 = vmatpush1.msra.mxu0 0.0
        %1356 = vmatprep.subr.mxu0 0.0
        %1357 = vmatpush1.msra.mxu0 0.0
        %1358 = vmatprep.subr.mxu0 0.0
        %1359 = vmatpush1.msra.mxu0 0.0
        %1360 = vmatprep.subr.mxu0 0.0
        %1361 = vmatpush1.msra.mxu0 0.0
        %1362 = vmatprep.subr.mxu0 0.0
        %1363 = vmatpush1.msra.mxu0 0.0
        %1364 = vmatprep.subr.mxu0 0.0
        %1365 = vmatpush1.msra.mxu0 0.0
        %1366 = vmatprep.subr.mxu0 0.0
        %1367 = vmatpush1.msra.mxu0 0.0
        %1368 = vmatprep.subr.mxu0 0.0
        %1369 = vmatpush1.msra.mxu0 0.0
        %1370 = vmatprep.subr.mxu0 0.0
        %1371 = vmatpush1.msra.mxu0 0.0
        %1372 = vmatprep.mubr.f32.mxu0 0.0
        %1373 = vmatmul.mubr.f32.gmra.mrb[0].mxu0 %v1032
        %v1374 = vpop.f32.mrb[0].mxu0
        %v1375 = vadd.f32 0.0, %v1374
        %v1376 = vpop.f32.mrb[0].mxu0
        %v1377 = vadd.f32 0.0, %v1376
        %1378 = vmatprep.mubr.f32.mxu0 0.0
        %1379 = vmatmul.mubr.f32.gmra.mrb[0].mxu0 %v1035
        %v1380 = vpop.f32.mrb[0].mxu0
        %v1381 = vadd.f32 0.0, %v1380
        %v1382 = vpop.f32.mrb[0].mxu0
        %v1383 = vadd.f32 0.0, %v1382
        %1384 = vdwg.mxu0
        %v1385 = vadd.f32 %v1290, %v1375
        %v1386 = vadd.f32 %v1292, %v1377
        %v1387 = vadd.f32 %v1296, %v1381
        %v1388 = vadd.f32 %v1298, %v1383
        %v1389 = vld [vmem:[#allocation3] sm:$0xff]
        %v1390 = vld [vmem:[#allocation3 + $0x8] sm:$0xff]
        %v1391 = vld [vmem:[#allocation3 + $0x10] sm:$0xff]
        %v1392 = vld [vmem:[#allocation3 + $0x18] sm:$0xff]
        %v1393 = vmax.f32 %v1389, %v1385
        %v1394 = vmax.f32 %v1390, %v1386
        %v1395 = vmax.f32 %v1391, %v1387
        %v1396 = vmax.f32 %v1392, %v1388
        %1397 = vst [vmem:[#allocation3] sm:$0xff] %v1393
        %1398 = vst [vmem:[#allocation3 + $0x8] sm:$0xff] %v1394
        %1399 = vst [vmem:[#allocation3 + $0x10] sm:$0xff] %v1395
        %1400 = vst [vmem:[#allocation3 + $0x18] sm:$0xff] %v1396
        %v1401 = vlaneseq
        %v1402 = vshrl.u32 %v1401, 7
        %v1403 = vadd.s32 %v1402, 8
        %vm1404 = vcmp.eq.s32.totalorder %v1402, 7
        %vm1405 = vcmp.eq.s32.totalorder %v1403, 7
        %v1406 = vld [vmem:[#allocation3] sm:$0xff]
        %v1407 = vld [vmem:[#allocation3 + $0x8] sm:$0xff]
        %v1408 = vld [vmem:[#allocation3 + $0x10] sm:$0xff]
        %v1409 = vld [vmem:[#allocation3 + $0x18] sm:$0xff]
        %v1410 = vld [vmem:[#allocation6] sm:$0x3]
        %v1412 = vlaneseq
        %v1413 = vshrl.u32 %v1412, 7
        %v1414 = vsub.s32 0, %v1413
        %v1415 = vrot.slane %v1410, %v1414
        %v1416 = vlaneseq
        %v1417 = vshrl.u32 %v1416, 7
        %v1418 = vsub.s32 1, %v1417
        %v1419 = vrot.slane %v1410, %v1418
        %v1422 = vadd.f32 %v1406, %v1415
        %v1423 = vadd.f32 %v1407, %v1419
        %v1424 = vadd.f32 %v1408, %v1415
        %v1425 = vadd.f32 %v1409, %v1419
        %v1426 = vsel %vm1404, 1, 0
        %v1427 = vsel %vm1405, 1, 0
        %vm1428 = vcmp.eq.s32.totalorder %v1426, 1
        %vm1429 = vcmp.eq.s32.totalorder %v1427, 1
        %v1430 = vsel %vm1428, 0.0, %v1422
        %v1431 = vsel %vm1428, 0.0, %v1423
        %v1432 = vsel %vm1429, 0.0, %v1424
        %v1433 = vsel %vm1429, 0.0, %v1425
        %1434 = vst [vmem:[#allocation3] sm:$0xff] %v1430
        %1435 = vst [vmem:[#allocation3 + $0x8] sm:$0xff] %v1431
        %1436 = vst [vmem:[#allocation3 + $0x10] sm:$0xff] %v1432
        %1437 = vst [vmem:[#allocation3 + $0x18] sm:$0xff] %v1433
        %v1438 = vld [vmem:[#allocation4] sm:$0xff]
        %v1439 = vld [vmem:[#allocation4 + $0x8] sm:$0xff]
        %v1440 = vld [vmem:[#allocation4 + $0x10] sm:$0xff]
        %v1441 = vld [vmem:[#allocation4 + $0x18] sm:$0xff]
        %v1442 = vld [vmem:[#allocation4 + $0x20] sm:$0xff]
        %v1443 = vld [vmem:[#allocation4 + $0x28] sm:$0xff]
        %v1444 = vld [vmem:[#allocation4 + $0x30] sm:$0xff]
        %v1445 = vld [vmem:[#allocation4 + $0x38] sm:$0xff]
        %v1446 = vld [vmem:[%s303] sm:$0xff]
        %v1447 = vld [vmem:[%s303 + $0x8] sm:$0xff]
        %v1448 = vld [vmem:[%s303 + $0x10] sm:$0xff]
        %v1449 = vld [vmem:[%s303 + $0x18] sm:$0xff]
        %v1450 = vld [vmem:[%s303 + $0x20] sm:$0xff]
        %v1451 = vld [vmem:[%s303 + $0x28] sm:$0xff]
        %v1452 = vld [vmem:[%s303 + $0x30] sm:$0xff]
        %v1453 = vld [vmem:[%s303 + $0x38] sm:$0xff]
        %v1455 = vsel %vm312, %v293, 0
        %v1458 = vsel %vm312, %v294, 0
        %1460 = vmatprep.subr.mxu0 %v1447
        %1461 = vmatpush1.msra.mxu0 %v1446
        %1462 = vmatprep.subr.mxu0 %v1449
        %1463 = vmatpush1.msra.mxu0 %v1448
        %1464 = vmatprep.subr.mxu0 %v1451
        %1465 = vmatpush1.msra.mxu0 %v1450
        %1466 = vmatprep.subr.mxu0 %v1453
        %1467 = vmatpush1.msra.mxu0 %v1452
        %1468 = vmatprep.subr.mxu0 0.0
        %1469 = vmatpush1.msra.mxu0 0.0
        %1470 = vmatprep.subr.mxu0 0.0
        %1471 = vmatpush1.msra.mxu0 0.0
        %1472 = vmatprep.subr.mxu0 0.0
        %1473 = vmatpush1.msra.mxu0 0.0
        %1474 = vmatprep.subr.mxu0 0.0
        %1475 = vmatpush1.msra.mxu0 0.0
        %1476 = vmatprep.subr.mxu0 0.0
        %1477 = vmatpush1.msra.mxu0 0.0
        %1478 = vmatprep.subr.mxu0 0.0
        %1479 = vmatpush1.msra.mxu0 0.0
        %1480 = vmatprep.subr.mxu0 0.0
        %1481 = vmatpush1.msra.mxu0 0.0
        %1482 = vmatprep.subr.mxu0 0.0
        %1483 = vmatpush1.msra.mxu0 0.0
        %1484 = vmatprep.subr.mxu0 0.0
        %1485 = vmatpush1.msra.mxu0 0.0
        %1486 = vmatprep.subr.mxu0 0.0
        %1487 = vmatpush1.msra.mxu0 0.0
        %1488 = vmatprep.subr.mxu0 0.0
        %1489 = vmatpush1.msra.mxu0 0.0
        %1490 = vmatprep.subr.mxu0 0.0
        %1491 = vmatpush1.msra.mxu0 0.0
        %1492 = vmatprep.subr.mxu0 0.0
        %1493 = vmatpush1.msra.mxu0 0.0
        %1494 = vmatprep.subr.mxu0 0.0
        %1495 = vmatpush1.msra.mxu0 0.0
        %1496 = vmatprep.subr.mxu0 0.0
        %1497 = vmatpush1.msra.mxu0 0.0
        %1498 = vmatprep.subr.mxu0 0.0
        %1499 = vmatpush1.msra.mxu0 0.0
        %1500 = vmatprep.subr.mxu0 0.0
        %1501 = vmatpush1.msra.mxu0 0.0
        %1502 = vmatprep.subr.mxu0 0.0
        %1503 = vmatpush1.msra.mxu0 0.0
        %1504 = vmatprep.subr.mxu0 0.0
        %1505 = vmatpush1.msra.mxu0 0.0
        %1506 = vmatprep.subr.mxu0 0.0
        %1507 = vmatpush1.msra.mxu0 0.0
        %1508 = vmatprep.subr.mxu0 0.0
        %1509 = vmatpush1.msra.mxu0 0.0
        %1510 = vmatprep.subr.mxu0 0.0
        %1511 = vmatpush1.msra.mxu0 0.0
        %1512 = vmatprep.subr.mxu0 0.0
        %1513 = vmatpush1.msra.mxu0 0.0
        %1514 = vmatprep.subr.mxu0 0.0
        %1515 = vmatpush1.msra.mxu0 0.0
        %1516 = vmatprep.subr.mxu0 0.0
        %1517 = vmatpush1.msra.mxu0 0.0
        %1518 = vmatprep.subr.mxu0 0.0
        %1519 = vmatpush1.msra.mxu0 0.0
        %1520 = vmatprep.subr.mxu0 0.0
        %1521 = vmatpush1.msra.mxu0 0.0
        %1522 = vmatprep.subr.mxu0 0.0
        %1523 = vmatpush1.msra.mxu0 0.0
        %1524 = vmatprep.mubr.f32.mxu0 0.0
        %1525 = vmatmul.mubr.f32.gmra.mrb[0].mxu0 %v1455
        %v1526 = vpop.f32.mrb[0].mxu0
        %v1527 = vadd.f32 0.0, %v1526
        %v1528 = vpop.f32.mrb[0].mxu0
        %v1529 = vadd.f32 0.0, %v1528
        %1530 = vmatprep.mubr.f32.mxu0 0.0
        %1531 = vmatmul.mubr.f32.gmra.mrb[0].mxu0 %v1458
        %v1532 = vpop.f32.mrb[0].mxu0
        %v1533 = vadd.f32 0.0, %v1532
        %v1534 = vpop.f32.mrb[0].mxu0
        %v1535 = vadd.f32 0.0, %v1534
        %1536 = vdwg.mxu0
        %v1538 = vsel %vm312, %v291, 0
        %v1541 = vsel %vm312, %v292, 0
        %1543 = vmatprep.subr.mxu0 %v1439
        %1544 = vmatpush1.msra.mxu0 %v1438
        %1545 = vmatprep.subr.mxu0 %v1441
        %1546 = vmatpush1.msra.mxu0 %v1440
        %1547 = vmatprep.subr.mxu0 %v1443
        %1548 = vmatpush1.msra.mxu0 %v1442
        %1549 = vmatprep.subr.mxu0 %v1445
        %1550 = vmatpush1.msra.mxu0 %v1444
        %1551 = vmatprep.subr.mxu0 0.0
        %1552 = vmatpush1.msra.mxu0 0.0
        %1553 = vmatprep.subr.mxu0 0.0
        %1554 = vmatpush1.msra.mxu0 0.0
        %1555 = vmatprep.subr.mxu0 0.0
        %1556 = vmatpush1.msra.mxu0 0.0
        %1557 = vmatprep.subr.mxu0 0.0
        %1558 = vmatpush1.msra.mxu0 0.0
        %1559 = vmatprep.subr.mxu0 0.0
        %1560 = vmatpush1.msra.mxu0 0.0
        %1561 = vmatprep.subr.mxu0 0.0
        %1562 = vmatpush1.msra.mxu0 0.0
        %1563 = vmatprep.subr.mxu0 0.0
        %1564 = vmatpush1.msra.mxu0 0.0
        %1565 = vmatprep.subr.mxu0 0.0
        %1566 = vmatpush1.msra.mxu0 0.0
        %1567 = vmatprep.subr.mxu0 0.0
        %1568 = vmatpush1.msra.mxu0 0.0
        %1569 = vmatprep.subr.mxu0 0.0
        %1570 = vmatpush1.msra.mxu0 0.0
        %1571 = vmatprep.subr.mxu0 0.0
        %1572 = vmatpush1.msra.mxu0 0.0
        %1573 = vmatprep.subr.mxu0 0.0
        %1574 = vmatpush1.msra.mxu0 0.0
        %1575 = vmatprep.subr.mxu0 0.0
        %1576 = vmatpush1.msra.mxu0 0.0
        %1577 = vmatprep.subr.mxu0 0.0
        %1578 = vmatpush1.msra.mxu0 0.0
        %1579 = vmatprep.subr.mxu0 0.0
        %1580 = vmatpush1.msra.mxu0 0.0
        %1581 = vmatprep.subr.mxu0 0.0
        %1582 = vmatpush1.msra.mxu0 0.0
        %1583 = vmatprep.subr.mxu0 0.0
        %1584 = vmatpush1.msra.mxu0 0.0
        %1585 = vmatprep.subr.mxu0 0.0
        %1586 = vmatpush1.msra.mxu0 0.0
        %1587 = vmatprep.subr.mxu0 0.0
        %1588 = vmatpush1.msra.mxu0 0.0
        %1589 = vmatprep.subr.mxu0 0.0
        %1590 = vmatpush1.msra.mxu0 0.0
        %1591 = vmatprep.subr.mxu0 0.0
        %1592 = vmatpush1.msra.mxu0 0.0
        %1593 = vmatprep.subr.mxu0 0.0
        %1594 = vmatpush1.msra.mxu0 0.0
        %1595 = vmatprep.subr.mxu0 0.0
        %1596 = vmatpush1.msra.mxu0 0.0
        %1597 = vmatprep.subr.mxu0 0.0
        %1598 = vmatpush1.msra.mxu0 0.0
        %1599 = vmatprep.subr.mxu0 0.0
        %1600 = vmatpush1.msra.mxu0 0.0
        %1601 = vmatprep.subr.mxu0 0.0
        %1602 = vmatpush1.msra.mxu0 0.0
        %1603 = vmatprep.subr.mxu0 0.0
        %1604 = vmatpush1.msra.mxu0 0.0
        %1605 = vmatprep.subr.mxu0 0.0
        %1606 = vmatpush1.msra.mxu0 0.0
        %1607 = vmatprep.mubr.f32.mxu0 0.0
        %1608 = vmatmul.mubr.f32.gmra.mrb[0].mxu0 %v1538
        %v1609 = vpop.f32.mrb[0].mxu0
        %v1610 = vadd.f32 %v1527, %v1609
        %v1611 = vpop.f32.mrb[0].mxu0
        %v1612 = vadd.f32 %v1529, %v1611
        %1613 = vmatprep.mubr.f32.mxu0 0.0
        %1614 = vmatmul.mubr.f32.gmra.mrb[0].mxu0 %v1541
        %v1615 = vpop.f32.mrb[0].mxu0
        %v1616 = vadd.f32 %v1533, %v1615
        %v1617 = vpop.f32.mrb[0].mxu0
        %v1618 = vadd.f32 %v1535, %v1617
        %1619 = vdwg.mxu0
        %v1620 = vld [vmem:[%s479] sm:$0xff]
        %v1621 = vld [vmem:[%s479 + $0x8] sm:$0xff]
        %v1622 = vld [vmem:[%s479 + $0x10] sm:$0xff]
        %v1623 = vld [vmem:[%s479 + $0x18] sm:$0xff]
        %v1624 = vld [vmem:[%s479 + $0x20] sm:$0xff]
        %v1625 = vld [vmem:[%s479 + $0x28] sm:$0xff]
        %v1626 = vld [vmem:[%s479 + $0x30] sm:$0xff]
        %v1627 = vld [vmem:[%s479 + $0x38] sm:$0xff]
        %1628 = vmatprep.subr.mxu0 %v1621
        %1629 = vmatpush1.msra.mxu0 %v1620
        %1630 = vmatprep.subr.mxu0 %v1623
        %1631 = vmatpush1.msra.mxu0 %v1622
        %1632 = vmatprep.subr.mxu0 %v1625
        %1633 = vmatpush1.msra.mxu0 %v1624
        %1634 = vmatprep.subr.mxu0 %v1627
        %1635 = vmatpush1.msra.mxu0 %v1626
        %1636 = vmatprep.subr.mxu0 0.0
        %1637 = vmatpush1.msra.mxu0 0.0
        %1638 = vmatprep.subr.mxu0 0.0
        %1639 = vmatpush1.msra.mxu0 0.0
        %1640 = vmatprep.subr.mxu0 0.0
        %1641 = vmatpush1.msra.mxu0 0.0
        %1642 = vmatprep.subr.mxu0 0.0
        %1643 = vmatpush1.msra.mxu0 0.0
        %1644 = vmatprep.subr.mxu0 0.0
        %1645 = vmatpush1.msra.mxu0 0.0
        %1646 = vmatprep.subr.mxu0 0.0
        %1647 = vmatpush1.msra.mxu0 0.0
        %1648 = vmatprep.subr.mxu0 0.0
        %1649 = vmatpush1.msra.mxu0 0.0
        %1650 = vmatprep.subr.mxu0 0.0
        %1651 = vmatpush1.msra.mxu0 0.0
        %1652 = vmatprep.subr.mxu0 0.0
        %1653 = vmatpush1.msra.mxu0 0.0
        %1654 = vmatprep.subr.mxu0 0.0
        %1655 = vmatpush1.msra.mxu0 0.0
        %1656 = vmatprep.subr.mxu0 0.0
        %1657 = vmatpush1.msra.mxu0 0.0
        %1658 = vmatprep.subr.mxu0 0.0
        %1659 = vmatpush1.msra.mxu0 0.0
        %1660 = vmatprep.subr.mxu0 0.0
        %1661 = vmatpush1.msra.mxu0 0.0
        %1662 = vmatprep.subr.mxu0 0.0
        %1663 = vmatpush1.msra.mxu0 0.0
        %1664 = vmatprep.subr.mxu0 0.0
        %1665 = vmatpush1.msra.mxu0 0.0
        %1666 = vmatprep.subr.mxu0 0.0
        %1667 = vmatpush1.msra.mxu0 0.0
        %1668 = vmatprep.subr.mxu0 0.0
        %1669 = vmatpush1.msra.mxu0 0.0
        %1670 = vmatprep.subr.mxu0 0.0
        %1671 = vmatpush1.msra.mxu0 0.0
        %1672 = vmatprep.subr.mxu0 0.0
        %1673 = vmatpush1.msra.mxu0 0.0
        %1674 = vmatprep.subr.mxu0 0.0
        %1675 = vmatpush1.msra.mxu0 0.0
        %1676 = vmatprep.subr.mxu0 0.0
        %1677 = vmatpush1.msra.mxu0 0.0
        %1678 = vmatprep.subr.mxu0 0.0
        %1679 = vmatpush1.msra.mxu0 0.0
        %1680 = vmatprep.subr.mxu0 0.0
        %1681 = vmatpush1.msra.mxu0 0.0
        %1682 = vmatprep.subr.mxu0 0.0
        %1683 = vmatpush1.msra.mxu0 0.0
        %1684 = vmatprep.subr.mxu0 0.0
        %1685 = vmatpush1.msra.mxu0 0.0
        %1686 = vmatprep.subr.mxu0 0.0
        %1687 = vmatpush1.msra.mxu0 0.0
        %1688 = vmatprep.subr.mxu0 0.0
        %1689 = vmatpush1.msra.mxu0 0.0
        %1690 = vmatprep.subr.mxu0 0.0
        %1691 = vmatpush1.msra.mxu0 0.0
        %1692 = vmatprep.mubr.f32.mxu0 0.0
        %1693 = vmatmul.mubr.f32.gmra.mrb[0].mxu0 %v397
        %v1694 = vpop.f32.mrb[0].mxu0
        %v1695 = vadd.f32 0.0, %v1694
        %v1696 = vpop.f32.mrb[0].mxu0
        %v1697 = vadd.f32 0.0, %v1696
        %1698 = vmatprep.mubr.f32.mxu0 0.0
        %1699 = vmatmul.mubr.f32.gmra.mrb[0].mxu0 %v400
        %v1700 = vpop.f32.mrb[0].mxu0
        %v1701 = vadd.f32 0.0, %v1700
        %v1702 = vpop.f32.mrb[0].mxu0
        %v1703 = vadd.f32 0.0, %v1702
        %1704 = vdwg.mxu0
        %v1705 = vadd.f32 %v1610, %v1695
        %v1706 = vadd.f32 %v1612, %v1697
        %v1707 = vadd.f32 %v1616, %v1701
        %v1708 = vadd.f32 %v1618, %v1703
        %1709 = vst [vmem:[#allocation2] sm:$0xff] %v1705
        %1710 = vst [vmem:[#allocation2 + $0x8] sm:$0xff] %v1706
        %1711 = vst [vmem:[#allocation2 + $0x10] sm:$0xff] %v1707
        %1712 = vst [vmem:[#allocation2 + $0x18] sm:$0xff] %v1708
        %v1713 = vld [vmem:[%s579] sm:$0xff]
        %v1714 = vld [vmem:[%s579 + $0x8] sm:$0xff]
        %v1715 = vld [vmem:[%s579 + $0x10] sm:$0xff]
        %v1716 = vld [vmem:[%s579 + $0x18] sm:$0xff]
        %v1717 = vld [vmem:[%s579 + $0x20] sm:$0xff]
        %v1718 = vld [vmem:[%s579 + $0x28] sm:$0xff]
        %v1719 = vld [vmem:[%s579 + $0x30] sm:$0xff]
        %v1720 = vld [vmem:[%s579 + $0x38] sm:$0xff]
        %v1721 = vld [vmem:[%s588] sm:$0xff]
        %v1722 = vld [vmem:[%s588 + $0x8] sm:$0xff]
        %v1723 = vld [vmem:[%s588 + $0x10] sm:$0xff]
        %v1724 = vld [vmem:[%s588 + $0x18] sm:$0xff]
        %v1725 = vld [vmem:[%s588 + $0x20] sm:$0xff]
        %v1726 = vld [vmem:[%s588 + $0x28] sm:$0xff]
        %v1727 = vld [vmem:[%s588 + $0x30] sm:$0xff]
        %v1728 = vld [vmem:[%s588 + $0x38] sm:$0xff]
        %1729 = vmatprep.subr.mxu0 %v1722
        %1730 = vmatpush1.msra.mxu0 %v1721
        %1731 = vmatprep.subr.mxu0 %v1724
        %1732 = vmatpush1.msra.mxu0 %v1723
        %1733 = vmatprep.subr.mxu0 %v1726
        %1734 = vmatpush1.msra.mxu0 %v1725
        %1735 = vmatprep.subr.mxu0 %v1728
        %1736 = vmatpush1.msra.mxu0 %v1727
        %1737 = vmatprep.subr.mxu0 0.0
        %1738 = vmatpush1.msra.mxu0 0.0
        %1739 = vmatprep.subr.mxu0 0.0
        %1740 = vmatpush1.msra.mxu0 0.0
        %1741 = vmatprep.subr.mxu0 0.0
        %1742 = vmatpush1.msra.mxu0 0.0
        %1743 = vmatprep.subr.mxu0 0.0
        %1744 = vmatpush1.msra.mxu0 0.0
        %1745 = vmatprep.subr.mxu0 0.0
        %1746 = vmatpush1.msra.mxu0 0.0
        %1747 = vmatprep.subr.mxu0 0.0
        %1748 = vmatpush1.msra.mxu0 0.0
        %1749 = vmatprep.subr.mxu0 0.0
        %1750 = vmatpush1.msra.mxu0 0.0
        %1751 = vmatprep.subr.mxu0 0.0
        %1752 = vmatpush1.msra.mxu0 0.0
        %1753 = vmatprep.subr.mxu0 0.0
        %1754 = vmatpush1.msra.mxu0 0.0
        %1755 = vmatprep.subr.mxu0 0.0
        %1756 = vmatpush1.msra.mxu0 0.0
        %1757 = vmatprep.subr.mxu0 0.0
        %1758 = vmatpush1.msra.mxu0 0.0
        %1759 = vmatprep.subr.mxu0 0.0
        %1760 = vmatpush1.msra.mxu0 0.0
        %1761 = vmatprep.subr.mxu0 0.0
        %1762 = vmatpush1.msra.mxu0 0.0
        %1763 = vmatprep.subr.mxu0 0.0
        %1764 = vmatpush1.msra.mxu0 0.0
        %1765 = vmatprep.subr.mxu0 0.0
        %1766 = vmatpush1.msra.mxu0 0.0
        %1767 = vmatprep.subr.mxu0 0.0
        %1768 = vmatpush1.msra.mxu0 0.0
        %1769 = vmatprep.subr.mxu0 0.0
        %1770 = vmatpush1.msra.mxu0 0.0
        %1771 = vmatprep.subr.mxu0 0.0
        %1772 = vmatpush1.msra.mxu0 0.0
        %1773 = vmatprep.subr.mxu0 0.0
        %1774 = vmatpush1.msra.mxu0 0.0
        %1775 = vmatprep.subr.mxu0 0.0
        %1776 = vmatpush1.msra.mxu0 0.0
        %1777 = vmatprep.subr.mxu0 0.0
        %1778 = vmatpush1.msra.mxu0 0.0
        %1779 = vmatprep.subr.mxu0 0.0
        %1780 = vmatpush1.msra.mxu0 0.0
        %1781 = vmatprep.subr.mxu0 0.0
        %1782 = vmatpush1.msra.mxu0 0.0
        %1783 = vmatprep.subr.mxu0 0.0
        %1784 = vmatpush1.msra.mxu0 0.0
        %1785 = vmatprep.subr.mxu0 0.0
        %1786 = vmatpush1.msra.mxu0 0.0
        %1787 = vmatprep.subr.mxu0 0.0
        %1788 = vmatpush1.msra.mxu0 0.0
        %1789 = vmatprep.subr.mxu0 0.0
        %1790 = vmatpush1.msra.mxu0 0.0
        %1791 = vmatprep.subr.mxu0 0.0
        %1792 = vmatpush1.msra.mxu0 0.0
        %1793 = vmatprep.mubr.f32.mxu0 0.0
        %1794 = vmatmul.mubr.f32.gmra.mrb[0].mxu0 %v1455
        %v1795 = vpop.f32.mrb[0].mxu0
        %v1796 = vadd.f32 0.0, %v1795
        %v1797 = vpop.f32.mrb[0].mxu0
        %v1798 = vadd.f32 0.0, %v1797
        %1799 = vmatprep.mubr.f32.mxu0 0.0
        %1800 = vmatmul.mubr.f32.gmra.mrb[0].mxu0 %v1458
        %v1801 = vpop.f32.mrb[0].mxu0
        %v1802 = vadd.f32 0.0, %v1801
        %v1803 = vpop.f32.mrb[0].mxu0
        %v1804 = vadd.f32 0.0, %v1803
        %1805 = vdwg.mxu0
        %1806 = vmatprep.subr.mxu0 %v1714
        %1807 = vmatpush1.msra.mxu0 %v1713
        %1808 = vmatprep.subr.mxu0 %v1716
        %1809 = vmatpush1.msra.mxu0 %v1715
        %1810 = vmatprep.subr.mxu0 %v1718
        %1811 = vmatpush1.msra.mxu0 %v1717
        %1812 = vmatprep.subr.mxu0 %v1720
        %1813 = vmatpush1.msra.mxu0 %v1719
        %1814 = vmatprep.subr.mxu0 0.0
        %1815 = vmatpush1.msra.mxu0 0.0
        %1816 = vmatprep.subr.mxu0 0.0
        %1817 = vmatpush1.msra.mxu0 0.0
        %1818 = vmatprep.subr.mxu0 0.0
        %1819 = vmatpush1.msra.mxu0 0.0
        %1820 = vmatprep.subr.mxu0 0.0
        %1821 = vmatpush1.msra.mxu0 0.0
        %1822 = vmatprep.subr.mxu0 0.0
        %1823 = vmatpush1.msra.mxu0 0.0
        %1824 = vmatprep.subr.mxu0 0.0
        %1825 = vmatpush1.msra.mxu0 0.0
        %1826 = vmatprep.subr.mxu0 0.0
        %1827 = vmatpush1.msra.mxu0 0.0
        %1828 = vmatprep.subr.mxu0 0.0
        %1829 = vmatpush1.msra.mxu0 0.0
        %1830 = vmatprep.subr.mxu0 0.0
        %1831 = vmatpush1.msra.mxu0 0.0
        %1832 = vmatprep.subr.mxu0 0.0
        %1833 = vmatpush1.msra.mxu0 0.0
        %1834 = vmatprep.subr.mxu0 0.0
        %1835 = vmatpush1.msra.mxu0 0.0
        %1836 = vmatprep.subr.mxu0 0.0
        %1837 = vmatpush1.msra.mxu0 0.0
        %1838 = vmatprep.subr.mxu0 0.0
        %1839 = vmatpush1.msra.mxu0 0.0
        %1840 = vmatprep.subr.mxu0 0.0
        %1841 = vmatpush1.msra.mxu0 0.0
        %1842 = vmatprep.subr.mxu0 0.0
        %1843 = vmatpush1.msra.mxu0 0.0
        %1844 = vmatprep.subr.mxu0 0.0
        %1845 = vmatpush1.msra.mxu0 0.0
        %1846 = vmatprep.subr.mxu0 0.0
        %1847 = vmatpush1.msra.mxu0 0.0
        %1848 = vmatprep.subr.mxu0 0.0
        %1849 = vmatpush1.msra.mxu0 0.0
        %1850 = vmatprep.subr.mxu0 0.0
        %1851 = vmatpush1.msra.mxu0 0.0
        %1852 = vmatprep.subr.mxu0 0.0
        %1853 = vmatpush1.msra.mxu0 0.0
        %1854 = vmatprep.subr.mxu0 0.0
        %1855 = vmatpush1.msra.mxu0 0.0
        %1856 = vmatprep.subr.mxu0 0.0
        %1857 = vmatpush1.msra.mxu0 0.0
        %1858 = vmatprep.subr.mxu0 0.0
        %1859 = vmatpush1.msra.mxu0 0.0
        %1860 = vmatprep.subr.mxu0 0.0
        %1861 = vmatpush1.msra.mxu0 0.0
        %1862 = vmatprep.subr.mxu0 0.0
        %1863 = vmatpush1.msra.mxu0 0.0
        %1864 = vmatprep.subr.mxu0 0.0
        %1865 = vmatpush1.msra.mxu0 0.0
        %1866 = vmatprep.subr.mxu0 0.0
        %1867 = vmatpush1.msra.mxu0 0.0
        %1868 = vmatprep.subr.mxu0 0.0
        %1869 = vmatpush1.msra.mxu0 0.0
        %1870 = vmatprep.mubr.f32.mxu0 0.0
        %1871 = vmatmul.mubr.f32.gmra.mrb[0].mxu0 %v1538
        %v1872 = vpop.f32.mrb[0].mxu0
        %v1873 = vadd.f32 %v1796, %v1872
        %v1874 = vpop.f32.mrb[0].mxu0
        %v1875 = vadd.f32 %v1798, %v1874
        %1876 = vmatprep.mubr.f32.mxu0 0.0
        %1877 = vmatmul.mubr.f32.gmra.mrb[0].mxu0 %v1541
        %v1878 = vpop.f32.mrb[0].mxu0
        %v1879 = vadd.f32 %v1802, %v1878
        %v1880 = vpop.f32.mrb[0].mxu0
        %v1881 = vadd.f32 %v1804, %v1880
        %1882 = vdwg.mxu0
        %v1883 = vld [vmem:[%s751] sm:$0xff]
        %v1884 = vld [vmem:[%s751 + $0x8] sm:$0xff]
        %v1885 = vld [vmem:[%s751 + $0x10] sm:$0xff]
        %v1886 = vld [vmem:[%s751 + $0x18] sm:$0xff]
        %v1887 = vld [vmem:[%s751 + $0x20] sm:$0xff]
        %v1888 = vld [vmem:[%s751 + $0x28] sm:$0xff]
        %v1889 = vld [vmem:[%s751 + $0x30] sm:$0xff]
        %v1890 = vld [vmem:[%s751 + $0x38] sm:$0xff]
        %1891 = vmatprep.subr.mxu0 %v1884
        %1892 = vmatpush1.msra.mxu0 %v1883
        %1893 = vmatprep.subr.mxu0 %v1886
        %1894 = vmatpush1.msra.mxu0 %v1885
        %1895 = vmatprep.subr.mxu0 %v1888
        %1896 = vmatpush1.msra.mxu0 %v1887
        %1897 = vmatprep.subr.mxu0 %v1890
        %1898 = vmatpush1.msra.mxu0 %v1889
        %1899 = vmatprep.subr.mxu0 0.0
        %1900 = vmatpush1.msra.mxu0 0.0
        %1901 = vmatprep.subr.mxu0 0.0
        %1902 = vmatpush1.msra.mxu0 0.0
        %1903 = vmatprep.subr.mxu0 0.0
        %1904 = vmatpush1.msra.mxu0 0.0
        %1905 = vmatprep.subr.mxu0 0.0
        %1906 = vmatpush1.msra.mxu0 0.0
        %1907 = vmatprep.subr.mxu0 0.0
        %1908 = vmatpush1.msra.mxu0 0.0
        %1909 = vmatprep.subr.mxu0 0.0
        %1910 = vmatpush1.msra.mxu0 0.0
        %1911 = vmatprep.subr.mxu0 0.0
        %1912 = vmatpush1.msra.mxu0 0.0
        %1913 = vmatprep.subr.mxu0 0.0
        %1914 = vmatpush1.msra.mxu0 0.0
        %1915 = vmatprep.subr.mxu0 0.0
        %1916 = vmatpush1.msra.mxu0 0.0
        %1917 = vmatprep.subr.mxu0 0.0
        %1918 = vmatpush1.msra.mxu0 0.0
        %1919 = vmatprep.subr.mxu0 0.0
        %1920 = vmatpush1.msra.mxu0 0.0
        %1921 = vmatprep.subr.mxu0 0.0
        %1922 = vmatpush1.msra.mxu0 0.0
        %1923 = vmatprep.subr.mxu0 0.0
        %1924 = vmatpush1.msra.mxu0 0.0
        %1925 = vmatprep.subr.mxu0 0.0
        %1926 = vmatpush1.msra.mxu0 0.0
        %1927 = vmatprep.subr.mxu0 0.0
        %1928 = vmatpush1.msra.mxu0 0.0
        %1929 = vmatprep.subr.mxu0 0.0
        %1930 = vmatpush1.msra.mxu0 0.0
        %1931 = vmatprep.subr.mxu0 0.0
        %1932 = vmatpush1.msra.mxu0 0.0
        %1933 = vmatprep.subr.mxu0 0.0
        %1934 = vmatpush1.msra.mxu0 0.0
        %1935 = vmatprep.subr.mxu0 0.0
        %1936 = vmatpush1.msra.mxu0 0.0
        %1937 = vmatprep.subr.mxu0 0.0
        %1938 = vmatpush1.msra.mxu0 0.0
        %1939 = vmatprep.subr.mxu0 0.0
        %1940 = vmatpush1.msra.mxu0 0.0
        %1941 = vmatprep.subr.mxu0 0.0
        %1942 = vmatpush1.msra.mxu0 0.0
        %1943 = vmatprep.subr.mxu0 0.0
        %1944 = vmatpush1.msra.mxu0 0.0
        %1945 = vmatprep.subr.mxu0 0.0
        %1946 = vmatpush1.msra.mxu0 0.0
        %1947 = vmatprep.subr.mxu0 0.0
        %1948 = vmatpush1.msra.mxu0 0.0
        %1949 = vmatprep.subr.mxu0 0.0
        %1950 = vmatpush1.msra.mxu0 0.0
        %1951 = vmatprep.subr.mxu0 0.0
        %1952 = vmatpush1.msra.mxu0 0.0
        %1953 = vmatprep.subr.mxu0 0.0
        %1954 = vmatpush1.msra.mxu0 0.0
        %1955 = vmatprep.mubr.f32.mxu0 0.0
        %1956 = vmatmul.mubr.f32.gmra.mrb[0].mxu0 %v397
        %v1957 = vpop.f32.mrb[0].mxu0
        %v1958 = vadd.f32 0.0, %v1957
        %v1959 = vpop.f32.mrb[0].mxu0
        %v1960 = vadd.f32 0.0, %v1959
        %1961 = vmatprep.mubr.f32.mxu0 0.0
        %1962 = vmatmul.mubr.f32.gmra.mrb[0].mxu0 %v400
        %v1963 = vpop.f32.mrb[0].mxu0
        %v1964 = vadd.f32 0.0, %v1963
        %v1965 = vpop.f32.mrb[0].mxu0
        %v1966 = vadd.f32 0.0, %v1965
        %1967 = vdwg.mxu0
        %v1968 = vadd.f32 %v1873, %v1958
        %v1969 = vadd.f32 %v1875, %v1960
        %v1970 = vadd.f32 %v1879, %v1964
        %v1971 = vadd.f32 %v1881, %v1966
        %v1972 = vld [vmem:[#allocation2] sm:$0xff]
        %v1973 = vld [vmem:[#allocation2 + $0x8] sm:$0xff]
        %v1974 = vld [vmem:[#allocation2 + $0x10] sm:$0xff]
        %v1975 = vld [vmem:[#allocation2 + $0x18] sm:$0xff]
        %v1976 = vmax.f32 %v1972, %v1968
        %v1977 = vmax.f32 %v1973, %v1969
        %v1978 = vmax.f32 %v1974, %v1970
        %v1979 = vmax.f32 %v1975, %v1971
        %1980 = vst [vmem:[#allocation2] sm:$0xff] %v1976
        %1981 = vst [vmem:[#allocation2 + $0x8] sm:$0xff] %v1977
        %1982 = vst [vmem:[#allocation2 + $0x10] sm:$0xff] %v1978
        %1983 = vst [vmem:[#allocation2 + $0x18] sm:$0xff] %v1979
        %v1984 = vld [vmem:[#allocation4] sm:$0xff]
        %v1985 = vld [vmem:[#allocation4 + $0x8] sm:$0xff]
        %v1986 = vld [vmem:[#allocation4 + $0x10] sm:$0xff]
        %v1987 = vld [vmem:[#allocation4 + $0x18] sm:$0xff]
        %v1988 = vld [vmem:[#allocation4 + $0x20] sm:$0xff]
        %v1989 = vld [vmem:[#allocation4 + $0x28] sm:$0xff]
        %v1990 = vld [vmem:[#allocation4 + $0x30] sm:$0xff]
        %v1991 = vld [vmem:[#allocation4 + $0x38] sm:$0xff]
        %v1992 = vld [vmem:[%s303] sm:$0xff]
        %v1993 = vld [vmem:[%s303 + $0x8] sm:$0xff]
        %v1994 = vld [vmem:[%s303 + $0x10] sm:$0xff]
        %v1995 = vld [vmem:[%s303 + $0x18] sm:$0xff]
        %v1996 = vld [vmem:[%s303 + $0x20] sm:$0xff]
        %v1997 = vld [vmem:[%s303 + $0x28] sm:$0xff]
        %v1998 = vld [vmem:[%s303 + $0x30] sm:$0xff]
        %v1999 = vld [vmem:[%s303 + $0x38] sm:$0xff]
        %2000 = vmatprep.subr.mxu0 %v1993
        %2001 = vmatpush1.msra.mxu0 %v1992
        %2002 = vmatprep.subr.mxu0 %v1995
        %2003 = vmatpush1.msra.mxu0 %v1994
        %2004 = vmatprep.subr.mxu0 %v1997
        %2005 = vmatpush1.msra.mxu0 %v1996
        %2006 = vmatprep.subr.mxu0 %v1999
        %2007 = vmatpush1.msra.mxu0 %v1998
        %2008 = vmatprep.subr.mxu0 0.0
        %2009 = vmatpush1.msra.mxu0 0.0
        %2010 = vmatprep.subr.mxu0 0.0
        %2011 = vmatpush1.msra.mxu0 0.0
        %2012 = vmatprep.subr.mxu0 0.0
        %2013 = vmatpush1.msra.mxu0 0.0
        %2014 = vmatprep.subr.mxu0 0.0
        %2015 = vmatpush1.msra.mxu0 0.0
        %2016 = vmatprep.subr.mxu0 0.0
        %2017 = vmatpush1.msra.mxu0 0.0
        %2018 = vmatprep.subr.mxu0 0.0
        %2019 = vmatpush1.msra.mxu0 0.0
        %2020 = vmatprep.subr.mxu0 0.0
        %2021 = vmatpush1.msra.mxu0 0.0
        %2022 = vmatprep.subr.mxu0 0.0
        %2023 = vmatpush1.msra.mxu0 0.0
        %2024 = vmatprep.subr.mxu0 0.0
        %2025 = vmatpush1.msra.mxu0 0.0
        %2026 = vmatprep.subr.mxu0 0.0
        %2027 = vmatpush1.msra.mxu0 0.0
        %2028 = vmatprep.subr.mxu0 0.0
        %2029 = vmatpush1.msra.mxu0 0.0
        %2030 = vmatprep.subr.mxu0 0.0
        %2031 = vmatpush1.msra.mxu0 0.0
        %2032 = vmatprep.subr.mxu0 0.0
        %2033 = vmatpush1.msra.mxu0 0.0
        %2034 = vmatprep.subr.mxu0 0.0
        %2035 = vmatpush1.msra.mxu0 0.0
        %2036 = vmatprep.subr.mxu0 0.0
        %2037 = vmatpush1.msra.mxu0 0.0
        %2038 = vmatprep.subr.mxu0 0.0
        %2039 = vmatpush1.msra.mxu0 0.0
        %2040 = vmatprep.subr.mxu0 0.0
        %2041 = vmatpush1.msra.mxu0 0.0
        %2042 = vmatprep.subr.mxu0 0.0
        %2043 = vmatpush1.msra.mxu0 0.0
        %2044 = vmatprep.subr.mxu0 0.0
        %2045 = vmatpush1.msra.mxu0 0.0
        %2046 = vmatprep.subr.mxu0 0.0
        %2047 = vmatpush1.msra.mxu0 0.0
        %2048 = vmatprep.subr.mxu0 0.0
        %2049 = vmatpush1.msra.mxu0 0.0
        %2050 = vmatprep.subr.mxu0 0.0
        %2051 = vmatpush1.msra.mxu0 0.0
        %2052 = vmatprep.subr.mxu0 0.0
        %2053 = vmatpush1.msra.mxu0 0.0
        %2054 = vmatprep.subr.mxu0 0.0
        %2055 = vmatpush1.msra.mxu0 0.0
        %2056 = vmatprep.subr.mxu0 0.0
        %2057 = vmatpush1.msra.mxu0 0.0
        %2058 = vmatprep.subr.mxu0 0.0
        %2059 = vmatpush1.msra.mxu0 0.0
        %2060 = vmatprep.subr.mxu0 0.0
        %2061 = vmatpush1.msra.mxu0 0.0
        %2062 = vmatprep.subr.mxu0 0.0
        %2063 = vmatpush1.msra.mxu0 0.0
        %2064 = vmatprep.mubr.f32.mxu0 0.0
        %2065 = vmatmul.mubr.f32.gmra.mrb[0].mxu0 %v397
        %v2066 = vpop.f32.mrb[0].mxu0
        %v2067 = vadd.f32 0.0, %v2066
        %v2068 = vpop.f32.mrb[0].mxu0
        %v2069 = vadd.f32 0.0, %v2068
        %2070 = vmatprep.mubr.f32.mxu0 0.0
        %2071 = vmatmul.mubr.f32.gmra.mrb[0].mxu0 %v400
        %v2072 = vpop.f32.mrb[0].mxu0
        %v2073 = vadd.f32 0.0, %v2072
        %v2074 = vpop.f32.mrb[0].mxu0
        %v2075 = vadd.f32 0.0, %v2074
        %2076 = vdwg.mxu0
        %2077 = vmatprep.subr.mxu0 %v1985
        %2078 = vmatpush1.msra.mxu0 %v1984
        %2079 = vmatprep.subr.mxu0 %v1987
        %2080 = vmatpush1.msra.mxu0 %v1986
        %2081 = vmatprep.subr.mxu0 %v1989
        %2082 = vmatpush1.msra.mxu0 %v1988
        %2083 = vmatprep.subr.mxu0 %v1991
        %2084 = vmatpush1.msra.mxu0 %v1990
        %2085 = vmatprep.subr.mxu0 0.0
        %2086 = vmatpush1.msra.mxu0 0.0
        %2087 = vmatprep.subr.mxu0 0.0
        %2088 = vmatpush1.msra.mxu0 0.0
        %2089 = vmatprep.subr.mxu0 0.0
        %2090 = vmatpush1.msra.mxu0 0.0
        %2091 = vmatprep.subr.mxu0 0.0
        %2092 = vmatpush1.msra.mxu0 0.0
        %2093 = vmatprep.subr.mxu0 0.0
        %2094 = vmatpush1.msra.mxu0 0.0
        %2095 = vmatprep.subr.mxu0 0.0
        %2096 = vmatpush1.msra.mxu0 0.0
        %2097 = vmatprep.subr.mxu0 0.0
        %2098 = vmatpush1.msra.mxu0 0.0
        %2099 = vmatprep.subr.mxu0 0.0
        %2100 = vmatpush1.msra.mxu0 0.0
        %2101 = vmatprep.subr.mxu0 0.0
        %2102 = vmatpush1.msra.mxu0 0.0
        %2103 = vmatprep.subr.mxu0 0.0
        %2104 = vmatpush1.msra.mxu0 0.0
        %2105 = vmatprep.subr.mxu0 0.0
        %2106 = vmatpush1.msra.mxu0 0.0
        %2107 = vmatprep.subr.mxu0 0.0
        %2108 = vmatpush1.msra.mxu0 0.0
        %2109 = vmatprep.subr.mxu0 0.0
        %2110 = vmatpush1.msra.mxu0 0.0
        %2111 = vmatprep.subr.mxu0 0.0
        %2112 = vmatpush1.msra.mxu0 0.0
        %2113 = vmatprep.subr.mxu0 0.0
        %2114 = vmatpush1.msra.mxu0 0.0
        %2115 = vmatprep.subr.mxu0 0.0
        %2116 = vmatpush1.msra.mxu0 0.0
        %2117 = vmatprep.subr.mxu0 0.0
        %2118 = vmatpush1.msra.mxu0 0.0
        %2119 = vmatprep.subr.mxu0 0.0
        %2120 = vmatpush1.msra.mxu0 0.0
        %2121 = vmatprep.subr.mxu0 0.0
        %2122 = vmatpush1.msra.mxu0 0.0
        %2123 = vmatprep.subr.mxu0 0.0
        %2124 = vmatpush1.msra.mxu0 0.0
        %2125 = vmatprep.subr.mxu0 0.0
        %2126 = vmatpush1.msra.mxu0 0.0
        %2127 = vmatprep.subr.mxu0 0.0
        %2128 = vmatpush1.msra.mxu0 0.0
        %2129 = vmatprep.subr.mxu0 0.0
        %2130 = vmatpush1.msra.mxu0 0.0
        %2131 = vmatprep.subr.mxu0 0.0
        %2132 = vmatpush1.msra.mxu0 0.0
        %2133 = vmatprep.subr.mxu0 0.0
        %2134 = vmatpush1.msra.mxu0 0.0
        %2135 = vmatprep.subr.mxu0 0.0
        %2136 = vmatpush1.msra.mxu0 0.0
        %2137 = vmatprep.subr.mxu0 0.0
        %2138 = vmatpush1.msra.mxu0 0.0
        %2139 = vmatprep.subr.mxu0 0.0
        %2140 = vmatpush1.msra.mxu0 0.0
        %2141 = vmatprep.mubr.f32.mxu0 0.0
        %2142 = vmatmul.mubr.f32.gmra.mrb[0].mxu0 %v1455
        %v2143 = vpop.f32.mrb[0].mxu0
        %v2144 = vadd.f32 %v2067, %v2143
        %v2145 = vpop.f32.mrb[0].mxu0
        %v2146 = vadd.f32 %v2069, %v2145
        %2147 = vmatprep.mubr.f32.mxu0 0.0
        %2148 = vmatmul.mubr.f32.gmra.mrb[0].mxu0 %v1458
        %v2149 = vpop.f32.mrb[0].mxu0
        %v2150 = vadd.f32 %v2073, %v2149
        %v2151 = vpop.f32.mrb[0].mxu0
        %v2152 = vadd.f32 %v2075, %v2151
        %2153 = vdwg.mxu0
        %v2154 = vld [vmem:[%s479] sm:$0xff]
        %v2155 = vld [vmem:[%s479 + $0x8] sm:$0xff]
        %v2156 = vld [vmem:[%s479 + $0x10] sm:$0xff]
        %v2157 = vld [vmem:[%s479 + $0x18] sm:$0xff]
        %v2158 = vld [vmem:[%s479 + $0x20] sm:$0xff]
        %v2159 = vld [vmem:[%s479 + $0x28] sm:$0xff]
        %v2160 = vld [vmem:[%s479 + $0x30] sm:$0xff]
        %v2161 = vld [vmem:[%s479 + $0x38] sm:$0xff]
        %2162 = vmatprep.subr.mxu0 %v2155
        %2163 = vmatpush1.msra.mxu0 %v2154
        %2164 = vmatprep.subr.mxu0 %v2157
        %2165 = vmatpush1.msra.mxu0 %v2156
        %2166 = vmatprep.subr.mxu0 %v2159
        %2167 = vmatpush1.msra.mxu0 %v2158
        %2168 = vmatprep.subr.mxu0 %v2161
        %2169 = vmatpush1.msra.mxu0 %v2160
        %2170 = vmatprep.subr.mxu0 0.0
        %2171 = vmatpush1.msra.mxu0 0.0
        %2172 = vmatprep.subr.mxu0 0.0
        %2173 = vmatpush1.msra.mxu0 0.0
        %2174 = vmatprep.subr.mxu0 0.0
        %2175 = vmatpush1.msra.mxu0 0.0
        %2176 = vmatprep.subr.mxu0 0.0
        %2177 = vmatpush1.msra.mxu0 0.0
        %2178 = vmatprep.subr.mxu0 0.0
        %2179 = vmatpush1.msra.mxu0 0.0
        %2180 = vmatprep.subr.mxu0 0.0
        %2181 = vmatpush1.msra.mxu0 0.0
        %2182 = vmatprep.subr.mxu0 0.0
        %2183 = vmatpush1.msra.mxu0 0.0
        %2184 = vmatprep.subr.mxu0 0.0
        %2185 = vmatpush1.msra.mxu0 0.0
        %2186 = vmatprep.subr.mxu0 0.0
        %2187 = vmatpush1.msra.mxu0 0.0
        %2188 = vmatprep.subr.mxu0 0.0
        %2189 = vmatpush1.msra.mxu0 0.0
        %2190 = vmatprep.subr.mxu0 0.0
        %2191 = vmatpush1.msra.mxu0 0.0
        %2192 = vmatprep.subr.mxu0 0.0
        %2193 = vmatpush1.msra.mxu0 0.0
        %2194 = vmatprep.subr.mxu0 0.0
        %2195 = vmatpush1.msra.mxu0 0.0
        %2196 = vmatprep.subr.mxu0 0.0
        %2197 = vmatpush1.msra.mxu0 0.0
        %2198 = vmatprep.subr.mxu0 0.0
        %2199 = vmatpush1.msra.mxu0 0.0
        %2200 = vmatprep.subr.mxu0 0.0
        %2201 = vmatpush1.msra.mxu0 0.0
        %2202 = vmatprep.subr.mxu0 0.0
        %2203 = vmatpush1.msra.mxu0 0.0
        %2204 = vmatprep.subr.mxu0 0.0
        %2205 = vmatpush1.msra.mxu0 0.0
        %2206 = vmatprep.subr.mxu0 0.0
        %2207 = vmatpush1.msra.mxu0 0.0
        %2208 = vmatprep.subr.mxu0 0.0
        %2209 = vmatpush1.msra.mxu0 0.0
        %2210 = vmatprep.subr.mxu0 0.0
        %2211 = vmatpush1.msra.mxu0 0.0
        %2212 = vmatprep.subr.mxu0 0.0
        %2213 = vmatpush1.msra.mxu0 0.0
        %2214 = vmatprep.subr.mxu0 0.0
        %2215 = vmatpush1.msra.mxu0 0.0
        %2216 = vmatprep.subr.mxu0 0.0
        %2217 = vmatpush1.msra.mxu0 0.0
        %2218 = vmatprep.subr.mxu0 0.0
        %2219 = vmatpush1.msra.mxu0 0.0
        %2220 = vmatprep.subr.mxu0 0.0
        %2221 = vmatpush1.msra.mxu0 0.0
        %2222 = vmatprep.subr.mxu0 0.0
        %2223 = vmatpush1.msra.mxu0 0.0
        %2224 = vmatprep.subr.mxu0 0.0
        %2225 = vmatpush1.msra.mxu0 0.0
        %2226 = vmatprep.mubr.f32.mxu0 0.0
        %2227 = vmatmul.mubr.f32.gmra.mrb[0].mxu0 %v314
        %v2228 = vpop.f32.mrb[0].mxu0
        %v2229 = vadd.f32 0.0, %v2228
        %v2230 = vpop.f32.mrb[0].mxu0
        %v2231 = vadd.f32 0.0, %v2230
        %2232 = vmatprep.mubr.f32.mxu0 0.0
        %2233 = vmatmul.mubr.f32.gmra.mrb[0].mxu0 %v317
        %v2234 = vpop.f32.mrb[0].mxu0
        %v2235 = vadd.f32 0.0, %v2234
        %v2236 = vpop.f32.mrb[0].mxu0
        %v2237 = vadd.f32 0.0, %v2236
        %2238 = vdwg.mxu0
        %v2239 = vadd.f32 %v2144, %v2229
        %v2240 = vadd.f32 %v2146, %v2231
        %v2241 = vadd.f32 %v2150, %v2235
        %v2242 = vadd.f32 %v2152, %v2237
        %v2243 = vld [vmem:[#allocation2] sm:$0xff]
        %v2244 = vld [vmem:[#allocation2 + $0x8] sm:$0xff]
        %v2245 = vld [vmem:[#allocation2 + $0x10] sm:$0xff]
        %v2246 = vld [vmem:[#allocation2 + $0x18] sm:$0xff]
        %v2247 = vmax.f32 %v2243, %v2239
        %v2248 = vmax.f32 %v2244, %v2240
        %v2249 = vmax.f32 %v2245, %v2241
        %v2250 = vmax.f32 %v2246, %v2242
        %2251 = vst [vmem:[#allocation2] sm:$0xff] %v2247
        %2252 = vst [vmem:[#allocation2 + $0x8] sm:$0xff] %v2248
        %2253 = vst [vmem:[#allocation2 + $0x10] sm:$0xff] %v2249
        %2254 = vst [vmem:[#allocation2 + $0x18] sm:$0xff] %v2250
        %v2255 = vld [vmem:[%s579] sm:$0xff]
        %v2256 = vld [vmem:[%s579 + $0x8] sm:$0xff]
        %v2257 = vld [vmem:[%s579 + $0x10] sm:$0xff]
        %v2258 = vld [vmem:[%s579 + $0x18] sm:$0xff]
        %v2259 = vld [vmem:[%s579 + $0x20] sm:$0xff]
        %v2260 = vld [vmem:[%s579 + $0x28] sm:$0xff]
        %v2261 = vld [vmem:[%s579 + $0x30] sm:$0xff]
        %v2262 = vld [vmem:[%s579 + $0x38] sm:$0xff]
        %v2263 = vld [vmem:[%s588] sm:$0xff]
        %v2264 = vld [vmem:[%s588 + $0x8] sm:$0xff]
        %v2265 = vld [vmem:[%s588 + $0x10] sm:$0xff]
        %v2266 = vld [vmem:[%s588 + $0x18] sm:$0xff]
        %v2267 = vld [vmem:[%s588 + $0x20] sm:$0xff]
        %v2268 = vld [vmem:[%s588 + $0x28] sm:$0xff]
        %v2269 = vld [vmem:[%s588 + $0x30] sm:$0xff]
        %v2270 = vld [vmem:[%s588 + $0x38] sm:$0xff]
        %2271 = vmatprep.subr.mxu0 %v2264
        %2272 = vmatpush1.msra.mxu0 %v2263
        %2273 = vmatprep.subr.mxu0 %v2266
        %2274 = vmatpush1.msra.mxu0 %v2265
        %2275 = vmatprep.subr.mxu0 %v2268
        %2276 = vmatpush1.msra.mxu0 %v2267
        %2277 = vmatprep.subr.mxu0 %v2270
        %2278 = vmatpush1.msra.mxu0 %v2269
        %2279 = vmatprep.subr.mxu0 0.0
        %2280 = vmatpush1.msra.mxu0 0.0
        %2281 = vmatprep.subr.mxu0 0.0
        %2282 = vmatpush1.msra.mxu0 0.0
        %2283 = vmatprep.subr.mxu0 0.0
        %2284 = vmatpush1.msra.mxu0 0.0
        %2285 = vmatprep.subr.mxu0 0.0
        %2286 = vmatpush1.msra.mxu0 0.0
        %2287 = vmatprep.subr.mxu0 0.0
        %2288 = vmatpush1.msra.mxu0 0.0
        %2289 = vmatprep.subr.mxu0 0.0
        %2290 = vmatpush1.msra.mxu0 0.0
        %2291 = vmatprep.subr.mxu0 0.0
        %2292 = vmatpush1.msra.mxu0 0.0
        %2293 = vmatprep.subr.mxu0 0.0
        %2294 = vmatpush1.msra.mxu0 0.0
        %2295 = vmatprep.subr.mxu0 0.0
        %2296 = vmatpush1.msra.mxu0 0.0
        %2297 = vmatprep.subr.mxu0 0.0
        %2298 = vmatpush1.msra.mxu0 0.0
        %2299 = vmatprep.subr.mxu0 0.0
        %2300 = vmatpush1.msra.mxu0 0.0
        %2301 = vmatprep.subr.mxu0 0.0
        %2302 = vmatpush1.msra.mxu0 0.0
        %2303 = vmatprep.subr.mxu0 0.0
        %2304 = vmatpush1.msra.mxu0 0.0
        %2305 = vmatprep.subr.mxu0 0.0
        %2306 = vmatpush1.msra.mxu0 0.0
        %2307 = vmatprep.subr.mxu0 0.0
        %2308 = vmatpush1.msra.mxu0 0.0
        %2309 = vmatprep.subr.mxu0 0.0
        %2310 = vmatpush1.msra.mxu0 0.0
        %2311 = vmatprep.subr.mxu0 0.0
        %2312 = vmatpush1.msra.mxu0 0.0
        %2313 = vmatprep.subr.mxu0 0.0
        %2314 = vmatpush1.msra.mxu0 0.0
        %2315 = vmatprep.subr.mxu0 0.0
        %2316 = vmatpush1.msra.mxu0 0.0
        %2317 = vmatprep.subr.mxu0 0.0
        %2318 = vmatpush1.msra.mxu0 0.0
        %2319 = vmatprep.subr.mxu0 0.0
        %2320 = vmatpush1.msra.mxu0 0.0
        %2321 = vmatprep.subr.mxu0 0.0
        %2322 = vmatpush1.msra.mxu0 0.0
        %2323 = vmatprep.subr.mxu0 0.0
        %2324 = vmatpush1.msra.mxu0 0.0
        %2325 = vmatprep.subr.mxu0 0.0
        %2326 = vmatpush1.msra.mxu0 0.0
        %2327 = vmatprep.subr.mxu0 0.0
        %2328 = vmatpush1.msra.mxu0 0.0
        %2329 = vmatprep.subr.mxu0 0.0
        %2330 = vmatpush1.msra.mxu0 0.0
        %2331 = vmatprep.subr.mxu0 0.0
        %2332 = vmatpush1.msra.mxu0 0.0
        %2333 = vmatprep.subr.mxu0 0.0
        %2334 = vmatpush1.msra.mxu0 0.0
        %2335 = vmatprep.mubr.f32.mxu0 0.0
        %2336 = vmatmul.mubr.f32.gmra.mrb[0].mxu0 %v397
        %v2337 = vpop.f32.mrb[0].mxu0
        %v2338 = vadd.f32 0.0, %v2337
        %v2339 = vpop.f32.mrb[0].mxu0
        %v2340 = vadd.f32 0.0, %v2339
        %2341 = vmatprep.mubr.f32.mxu0 0.0
        %2342 = vmatmul.mubr.f32.gmra.mrb[0].mxu0 %v400
        %v2343 = vpop.f32.mrb[0].mxu0
        %v2344 = vadd.f32 0.0, %v2343
        %v2345 = vpop.f32.mrb[0].mxu0
        %v2346 = vadd.f32 0.0, %v2345
        %2347 = vdwg.mxu0
        %2348 = vmatprep.subr.mxu0 %v2256
        %2349 = vmatpush1.msra.mxu0 %v2255
        %2350 = vmatprep.subr.mxu0 %v2258
        %2351 = vmatpush1.msra.mxu0 %v2257
        %2352 = vmatprep.subr.mxu0 %v2260
        %2353 = vmatpush1.msra.mxu0 %v2259
        %2354 = vmatprep.subr.mxu0 %v2262
        %2355 = vmatpush1.msra.mxu0 %v2261
        %2356 = vmatprep.subr.mxu0 0.0
        %2357 = vmatpush1.msra.mxu0 0.0
        %2358 = vmatprep.subr.mxu0 0.0
        %2359 = vmatpush1.msra.mxu0 0.0
        %2360 = vmatprep.subr.mxu0 0.0
        %2361 = vmatpush1.msra.mxu0 0.0
        %2362 = vmatprep.subr.mxu0 0.0
        %2363 = vmatpush1.msra.mxu0 0.0
        %2364 = vmatprep.subr.mxu0 0.0
        %2365 = vmatpush1.msra.mxu0 0.0
        %2366 = vmatprep.subr.mxu0 0.0
        %2367 = vmatpush1.msra.mxu0 0.0
        %2368 = vmatprep.subr.mxu0 0.0
        %2369 = vmatpush1.msra.mxu0 0.0
        %2370 = vmatprep.subr.mxu0 0.0
        %2371 = vmatpush1.msra.mxu0 0.0
        %2372 = vmatprep.subr.mxu0 0.0
        %2373 = vmatpush1.msra.mxu0 0.0
        %2374 = vmatprep.subr.mxu0 0.0
        %2375 = vmatpush1.msra.mxu0 0.0
        %2376 = vmatprep.subr.mxu0 0.0
        %2377 = vmatpush1.msra.mxu0 0.0
        %2378 = vmatprep.subr.mxu0 0.0
        %2379 = vmatpush1.msra.mxu0 0.0
        %2380 = vmatprep.subr.mxu0 0.0
        %2381 = vmatpush1.msra.mxu0 0.0
        %2382 = vmatprep.subr.mxu0 0.0
        %2383 = vmatpush1.msra.mxu0 0.0
        %2384 = vmatprep.subr.mxu0 0.0
        %2385 = vmatpush1.msra.mxu0 0.0
        %2386 = vmatprep.subr.mxu0 0.0
        %2387 = vmatpush1.msra.mxu0 0.0
        %2388 = vmatprep.subr.mxu0 0.0
        %2389 = vmatpush1.msra.mxu0 0.0
        %2390 = vmatprep.subr.mxu0 0.0
        %2391 = vmatpush1.msra.mxu0 0.0
        %2392 = vmatprep.subr.mxu0 0.0
        %2393 = vmatpush1.msra.mxu0 0.0
        %2394 = vmatprep.subr.mxu0 0.0
        %2395 = vmatpush1.msra.mxu0 0.0
        %2396 = vmatprep.subr.mxu0 0.0
        %2397 = vmatpush1.msra.mxu0 0.0
        %2398 = vmatprep.subr.mxu0 0.0
        %2399 = vmatpush1.msra.mxu0 0.0
        %2400 = vmatprep.subr.mxu0 0.0
        %2401 = vmatpush1.msra.mxu0 0.0
        %2402 = vmatprep.subr.mxu0 0.0
        %2403 = vmatpush1.msra.mxu0 0.0
        %2404 = vmatprep.subr.mxu0 0.0
        %2405 = vmatpush1.msra.mxu0 0.0
        %2406 = vmatprep.subr.mxu0 0.0
        %2407 = vmatpush1.msra.mxu0 0.0
        %2408 = vmatprep.subr.mxu0 0.0
        %2409 = vmatpush1.msra.mxu0 0.0
        %2410 = vmatprep.subr.mxu0 0.0
        %2411 = vmatpush1.msra.mxu0 0.0
        %2412 = vmatprep.mubr.f32.mxu0 0.0
        %2413 = vmatmul.mubr.f32.gmra.mrb[0].mxu0 %v1455
        %v2414 = vpop.f32.mrb[0].mxu0
        %v2415 = vadd.f32 %v2338, %v2414
        %v2416 = vpop.f32.mrb[0].mxu0
        %v2417 = vadd.f32 %v2340, %v2416
        %2418 = vmatprep.mubr.f32.mxu0 0.0
        %2419 = vmatmul.mubr.f32.gmra.mrb[0].mxu0 %v1458
        %v2420 = vpop.f32.mrb[0].mxu0
        %v2421 = vadd.f32 %v2344, %v2420
        %v2422 = vpop.f32.mrb[0].mxu0
        %v2423 = vadd.f32 %v2346, %v2422
        %2424 = vdwg.mxu0
        %v2425 = vld [vmem:[%s751] sm:$0xff]
        %v2426 = vld [vmem:[%s751 + $0x8] sm:$0xff]
        %v2427 = vld [vmem:[%s751 + $0x10] sm:$0xff]
        %v2428 = vld [vmem:[%s751 + $0x18] sm:$0xff]
        %v2429 = vld [vmem:[%s751 + $0x20] sm:$0xff]
        %v2430 = vld [vmem:[%s751 + $0x28] sm:$0xff]
        %v2431 = vld [vmem:[%s751 + $0x30] sm:$0xff]
        %v2432 = vld [vmem:[%s751 + $0x38] sm:$0xff]
        %2433 = vmatprep.subr.mxu0 %v2426
        %2434 = vmatpush1.msra.mxu0 %v2425
        %2435 = vmatprep.subr.mxu0 %v2428
        %2436 = vmatpush1.msra.mxu0 %v2427
        %2437 = vmatprep.subr.mxu0 %v2430
        %2438 = vmatpush1.msra.mxu0 %v2429
        %2439 = vmatprep.subr.mxu0 %v2432
        %2440 = vmatpush1.msra.mxu0 %v2431
        %2441 = vmatprep.subr.mxu0 0.0
        %2442 = vmatpush1.msra.mxu0 0.0
        %2443 = vmatprep.subr.mxu0 0.0
        %2444 = vmatpush1.msra.mxu0 0.0
        %2445 = vmatprep.subr.mxu0 0.0
        %2446 = vmatpush1.msra.mxu0 0.0
        %2447 = vmatprep.subr.mxu0 0.0
        %2448 = vmatpush1.msra.mxu0 0.0
        %2449 = vmatprep.subr.mxu0 0.0
        %2450 = vmatpush1.msra.mxu0 0.0
        %2451 = vmatprep.subr.mxu0 0.0
        %2452 = vmatpush1.msra.mxu0 0.0
        %2453 = vmatprep.subr.mxu0 0.0
        %2454 = vmatpush1.msra.mxu0 0.0
        %2455 = vmatprep.subr.mxu0 0.0
        %2456 = vmatpush1.msra.mxu0 0.0
        %2457 = vmatprep.subr.mxu0 0.0
        %2458 = vmatpush1.msra.mxu0 0.0
        %2459 = vmatprep.subr.mxu0 0.0
        %2460 = vmatpush1.msra.mxu0 0.0
        %2461 = vmatprep.subr.mxu0 0.0
        %2462 = vmatpush1.msra.mxu0 0.0
        %2463 = vmatprep.subr.mxu0 0.0
        %2464 = vmatpush1.msra.mxu0 0.0
        %2465 = vmatprep.subr.mxu0 0.0
        %2466 = vmatpush1.msra.mxu0 0.0
        %2467 = vmatprep.subr.mxu0 0.0
        %2468 = vmatpush1.msra.mxu0 0.0
        %2469 = vmatprep.subr.mxu0 0.0
        %2470 = vmatpush1.msra.mxu0 0.0
        %2471 = vmatprep.subr.mxu0 0.0
        %2472 = vmatpush1.msra.mxu0 0.0
        %2473 = vmatprep.subr.mxu0 0.0
        %2474 = vmatpush1.msra.mxu0 0.0
        %2475 = vmatprep.subr.mxu0 0.0
        %2476 = vmatpush1.msra.mxu0 0.0
        %2477 = vmatprep.subr.mxu0 0.0
        %2478 = vmatpush1.msra.mxu0 0.0
        %2479 = vmatprep.subr.mxu0 0.0
        %2480 = vmatpush1.msra.mxu0 0.0
        %2481 = vmatprep.subr.mxu0 0.0
        %2482 = vmatpush1.msra.mxu0 0.0
        %2483 = vmatprep.subr.mxu0 0.0
        %2484 = vmatpush1.msra.mxu0 0.0
        %2485 = vmatprep.subr.mxu0 0.0
        %2486 = vmatpush1.msra.mxu0 0.0
        %2487 = vmatprep.subr.mxu0 0.0
        %2488 = vmatpush1.msra.mxu0 0.0
        %2489 = vmatprep.subr.mxu0 0.0
        %2490 = vmatpush1.msra.mxu0 0.0
        %2491 = vmatprep.subr.mxu0 0.0
        %2492 = vmatpush1.msra.mxu0 0.0
        %2493 = vmatprep.subr.mxu0 0.0
        %2494 = vmatpush1.msra.mxu0 0.0
        %2495 = vmatprep.subr.mxu0 0.0
        %2496 = vmatpush1.msra.mxu0 0.0
        %2497 = vmatprep.mubr.f32.mxu0 0.0
        %2498 = vmatmul.mubr.f32.gmra.mrb[0].mxu0 %v314
        %v2499 = vpop.f32.mrb[0].mxu0
        %v2500 = vadd.f32 0.0, %v2499
        %v2501 = vpop.f32.mrb[0].mxu0
        %v2502 = vadd.f32 0.0, %v2501
        %2503 = vmatprep.mubr.f32.mxu0 0.0
        %2504 = vmatmul.mubr.f32.gmra.mrb[0].mxu0 %v317
        %v2505 = vpop.f32.mrb[0].mxu0
        %v2506 = vadd.f32 0.0, %v2505
        %v2507 = vpop.f32.mrb[0].mxu0
        %v2508 = vadd.f32 0.0, %v2507
        %2509 = vdwg.mxu0
        %v2510 = vadd.f32 %v2415, %v2500
        %v2511 = vadd.f32 %v2417, %v2502
        %v2512 = vadd.f32 %v2421, %v2506
        %v2513 = vadd.f32 %v2423, %v2508
        %v2514 = vld [vmem:[#allocation2] sm:$0xff]
        %v2515 = vld [vmem:[#allocation2 + $0x8] sm:$0xff]
        %v2516 = vld [vmem:[#allocation2 + $0x10] sm:$0xff]
        %v2517 = vld [vmem:[#allocation2 + $0x18] sm:$0xff]
        %v2518 = vmax.f32 %v2514, %v2510
        %v2519 = vmax.f32 %v2515, %v2511
        %v2520 = vmax.f32 %v2516, %v2512
        %v2521 = vmax.f32 %v2517, %v2513
        %2522 = vst [vmem:[#allocation2] sm:$0xff] %v2518
        %2523 = vst [vmem:[#allocation2 + $0x8] sm:$0xff] %v2519
        %2524 = vst [vmem:[#allocation2 + $0x10] sm:$0xff] %v2520
        %2525 = vst [vmem:[#allocation2 + $0x18] sm:$0xff] %v2521
        %vm2526 = vcmp.eq.s32.totalorder %v1402, 0
        %vm2527 = vcmp.eq.s32.totalorder %v1403, 0
        %v2528 = vld [vmem:[#allocation2] sm:$0xff]
        %v2529 = vld [vmem:[#allocation2 + $0x8] sm:$0xff]
        %v2530 = vld [vmem:[#allocation2 + $0x10] sm:$0xff]
        %v2531 = vld [vmem:[#allocation2 + $0x18] sm:$0xff]
        %v2532 = vld [vmem:[#allocation6] sm:$0x3]
        %v2534 = vlaneseq
        %v2535 = vshrl.u32 %v2534, 7
        %v2536 = vsub.s32 0, %v2535
        %v2537 = vrot.slane %v2532, %v2536
        %v2538 = vlaneseq
        %v2539 = vshrl.u32 %v2538, 7
        %v2540 = vsub.s32 1, %v2539
        %v2541 = vrot.slane %v2532, %v2540
        %v2544 = vadd.f32 %v2528, %v2537
        %v2545 = vadd.f32 %v2529, %v2541
        %v2546 = vadd.f32 %v2530, %v2537
        %v2547 = vadd.f32 %v2531, %v2541
        %v2548 = vsel %vm2526, 1, 0
        %v2549 = vsel %vm2527, 1, 0
        %vm2550 = vcmp.eq.s32.totalorder %v2548, 1
        %vm2551 = vcmp.eq.s32.totalorder %v2549, 1
        %v2552 = vsel %vm2550, 0.0, %v2544
        %v2553 = vsel %vm2550, 0.0, %v2545
        %v2554 = vsel %vm2551, 0.0, %v2546
        %v2555 = vsel %vm2551, 0.0, %v2547
        %2556 = vst [vmem:[#allocation2] sm:$0xff] %v2552
        %2557 = vst [vmem:[#allocation2 + $0x8] sm:$0xff] %v2553
        %2558 = vst [vmem:[#allocation2 + $0x10] sm:$0xff] %v2554
        %2559 = vst [vmem:[#allocation2 + $0x18] sm:$0xff] %v2555
        %v2560 = vld [vmem:[#allocation2] sm:$0xff]
        %v2561 = vld [vmem:[#allocation2 + $0x8] sm:$0xff]
        %v2562 = vld [vmem:[#allocation3] sm:$0xff]
        %v2563 = vld [vmem:[#allocation3 + $0x8] sm:$0xff]
        %v2564 = vld [vmem:[#allocation2] sm:$0xfe]
        %v2565 = vld [vmem:[#allocation2 + $0x8] sm:$0xfe]
        %v2566 = vld [vmem:[#allocation2 + $0x10] sm:$0x1]
        %v2567 = vld [vmem:[#allocation2 + $0x18] sm:$0x1]
        %v2568 = vld [vmem:[#allocation3] sm:$0xfe]
        %v2569 = vld [vmem:[#allocation3 + $0x8] sm:$0xfe]
        %v2570 = vld [vmem:[#allocation3 + $0x10] sm:$0x1]
        %v2571 = vld [vmem:[#allocation3 + $0x18] sm:$0x1]
        %v2572 = vld [vmem:[#allocation8] sm:$0xff]
        %v2573 = vld [vmem:[#allocation8 + $0x8] sm:$0xff]
        %v2574 = vld [vmem:[#allocation8 + $0x10] sm:$0xff]
        %v2575 = vld [vmem:[#allocation8 + $0x18] sm:$0xff]
        %v2576 = vld [vmem:[#allocation8 + $0x20] sm:$0xff]
        %v2577 = vld [vmem:[#allocation8 + $0x28] sm:$0xff]
        %v2578 = vld [vmem:[#allocation8 + $0x30] sm:$0xff]
        %v2579 = vld [vmem:[#allocation8 + $0x38] sm:$0xff]
        %v2580 = vld [vmem:[#allocation8 + $0x40] sm:$0xff]
        %v2581 = vld [vmem:[#allocation8 + $0x48] sm:$0xff]
        %v2582 = vld [vmem:[#allocation8 + $0x50] sm:$0xff]
        %v2583 = vld [vmem:[#allocation8 + $0x58] sm:$0xff]
        %v2584 = vld [vmem:[#allocation8 + $0x60] sm:$0xff]
        %v2585 = vld [vmem:[#allocation8 + $0x68] sm:$0xff]
        %v2586 = vld [vmem:[#allocation8 + $0x70] sm:$0xff]
        %v2587 = vld [vmem:[#allocation8 + $0x78] sm:$0xff]
        %v2588 = vld [vmem:[#allocation8 + $0x80] sm:$0xff]
        %v2589 = vld [vmem:[#allocation8 + $0x88] sm:$0xff]
        %v2590 = vld [vmem:[#allocation8 + $0x90] sm:$0xff]
        %v2591 = vld [vmem:[#allocation8 + $0x98] sm:$0xff]
        %v2592 = vld [vmem:[#allocation8 + $0xa0] sm:$0xff]
        %v2593 = vld [vmem:[#allocation8 + $0xa8] sm:$0xff]
        %v2594 = vld [vmem:[#allocation8 + $0xb0] sm:$0xff]
        %v2595 = vld [vmem:[#allocation8 + $0xb8] sm:$0xff]
        %v2596 = vld [vmem:[#allocation8 + $0xc0] sm:$0xff]
        %v2597 = vld [vmem:[#allocation8 + $0xc8] sm:$0xff]
        %v2598 = vld [vmem:[#allocation8 + $0xd0] sm:$0xff]
        %v2599 = vld [vmem:[#allocation8 + $0xd8] sm:$0xff]
        %v2600 = vld [vmem:[#allocation8 + $0xe0] sm:$0xff]
        %v2601 = vld [vmem:[#allocation8 + $0xe8] sm:$0xff]
        %v2602 = vld [vmem:[#allocation8 + $0xf0] sm:$0xff]
        %v2603 = vld [vmem:[#allocation8 + $0xf8] sm:$0xff]
        %v2604 = vld [vmem:[#allocation8 + $0x100] sm:$0xff]
        %v2605 = vld [vmem:[#allocation8 + $0x108] sm:$0xff]
        %v2606 = vld [vmem:[#allocation8 + $0x110] sm:$0xff]
        %v2607 = vld [vmem:[#allocation8 + $0x118] sm:$0xff]
        %v2608 = vld [vmem:[#allocation8 + $0x120] sm:$0xff]
        %v2609 = vld [vmem:[#allocation8 + $0x128] sm:$0xff]
        %v2610 = vld [vmem:[#allocation8 + $0x130] sm:$0xff]
        %v2611 = vld [vmem:[#allocation8 + $0x138] sm:$0xff]
        %v2612 = vld [vmem:[#allocation8 + $0x140] sm:$0xff]
        %v2613 = vld [vmem:[#allocation8 + $0x148] sm:$0xff]
        %v2614 = vld [vmem:[#allocation8 + $0x150] sm:$0xff]
        %v2615 = vld [vmem:[#allocation8 + $0x158] sm:$0xff]
        %v2616 = vld [vmem:[#allocation8 + $0x160] sm:$0xff]
        %v2617 = vld [vmem:[#allocation8 + $0x168] sm:$0xff]
        %v2618 = vld [vmem:[#allocation8 + $0x170] sm:$0xff]
        %v2619 = vld [vmem:[#allocation8 + $0x178] sm:$0xff]
        %v2620 = vld [vmem:[#allocation8 + $0x180] sm:$0xff]
        %v2621 = vld [vmem:[#allocation8 + $0x188] sm:$0xff]
        %v2622 = vld [vmem:[#allocation8 + $0x190] sm:$0xff]
        %v2623 = vld [vmem:[#allocation8 + $0x198] sm:$0xff]
        %v2624 = vld [vmem:[#allocation8 + $0x1a0] sm:$0xff]
        %v2625 = vld [vmem:[#allocation8 + $0x1a8] sm:$0xff]
        %v2626 = vld [vmem:[#allocation8 + $0x1b0] sm:$0xff]
        %v2627 = vld [vmem:[#allocation8 + $0x1b8] sm:$0xff]
        %v2628 = vld [vmem:[#allocation8 + $0x1c0] sm:$0xff]
        %v2629 = vld [vmem:[#allocation8 + $0x1c8] sm:$0xff]
        %v2630 = vld [vmem:[#allocation8 + $0x1d0] sm:$0xff]
        %v2631 = vld [vmem:[#allocation8 + $0x1d8] sm:$0xff]
        %v2632 = vld [vmem:[#allocation8 + $0x1e0] sm:$0xff]
        %v2633 = vld [vmem:[#allocation8 + $0x1e8] sm:$0xff]
        %v2634 = vld [vmem:[#allocation8 + $0x1f0] sm:$0xff]
        %v2635 = vld [vmem:[#allocation8 + $0x1f8] sm:$0xff]
        %s2636 = scalar_lea.vmem [#allocation8], 1024
        %v2637 = vld [vmem:[%s2636] sm:$0xff]
        %v2638 = vld [vmem:[%s2636 + $0x8] sm:$0xff]
        %v2639 = vld [vmem:[%s2636 + $0x10] sm:$0xff]
        %v2640 = vld [vmem:[%s2636 + $0x18] sm:$0xff]
        %v2641 = vld [vmem:[%s2636 + $0x20] sm:$0xff]
        %v2642 = vld [vmem:[%s2636 + $0x28] sm:$0xff]
        %v2643 = vld [vmem:[%s2636 + $0x30] sm:$0xff]
        %v2644 = vld [vmem:[%s2636 + $0x38] sm:$0xff]
        %v2645 = vld [vmem:[%s2636 + $0x40] sm:$0xff]
        %v2646 = vld [vmem:[%s2636 + $0x48] sm:$0xff]
        %v2647 = vld [vmem:[%s2636 + $0x50] sm:$0xff]
        %v2648 = vld [vmem:[%s2636 + $0x58] sm:$0xff]
        %v2649 = vld [vmem:[%s2636 + $0x60] sm:$0xff]
        %v2650 = vld [vmem:[%s2636 + $0x68] sm:$0xff]
        %v2651 = vld [vmem:[%s2636 + $0x70] sm:$0xff]
        %v2652 = vld [vmem:[%s2636 + $0x78] sm:$0xff]
        %v2653 = vld [vmem:[%s2636 + $0x80] sm:$0xff]
        %v2654 = vld [vmem:[%s2636 + $0x88] sm:$0xff]
        %v2655 = vld [vmem:[%s2636 + $0x90] sm:$0xff]
        %v2656 = vld [vmem:[%s2636 + $0x98] sm:$0xff]
        %v2657 = vld [vmem:[%s2636 + $0xa0] sm:$0xff]
        %v2658 = vld [vmem:[%s2636 + $0xa8] sm:$0xff]
        %v2659 = vld [vmem:[%s2636 + $0xb0] sm:$0xff]
        %v2660 = vld [vmem:[%s2636 + $0xb8] sm:$0xff]
        %v2661 = vld [vmem:[%s2636 + $0xc0] sm:$0xff]
        %v2662 = vld [vmem:[%s2636 + $0xc8] sm:$0xff]
        %v2663 = vld [vmem:[%s2636 + $0xd0] sm:$0xff]
        %v2664 = vld [vmem:[%s2636 + $0xd8] sm:$0xff]
        %v2665 = vld [vmem:[%s2636 + $0xe0] sm:$0xff]
        %v2666 = vld [vmem:[%s2636 + $0xe8] sm:$0xff]
        %v2667 = vld [vmem:[%s2636 + $0xf0] sm:$0xff]
        %v2668 = vld [vmem:[%s2636 + $0xf8] sm:$0xff]
        %v2669 = vld [vmem:[%s2636 + $0x100] sm:$0xff]
        %v2670 = vld [vmem:[%s2636 + $0x108] sm:$0xff]
        %v2671 = vld [vmem:[%s2636 + $0x110] sm:$0xff]
        %v2672 = vld [vmem:[%s2636 + $0x118] sm:$0xff]
        %v2673 = vld [vmem:[%s2636 + $0x120] sm:$0xff]
        %v2674 = vld [vmem:[%s2636 + $0x128] sm:$0xff]
        %v2675 = vld [vmem:[%s2636 + $0x130] sm:$0xff]
        %v2676 = vld [vmem:[%s2636 + $0x138] sm:$0xff]
        %v2677 = vld [vmem:[%s2636 + $0x140] sm:$0xff]
        %v2678 = vld [vmem:[%s2636 + $0x148] sm:$0xff]
        %v2679 = vld [vmem:[%s2636 + $0x150] sm:$0xff]
        %v2680 = vld [vmem:[%s2636 + $0x158] sm:$0xff]
        %v2681 = vld [vmem:[%s2636 + $0x160] sm:$0xff]
        %v2682 = vld [vmem:[%s2636 + $0x168] sm:$0xff]
        %v2683 = vld [vmem:[%s2636 + $0x170] sm:$0xff]
        %v2684 = vld [vmem:[%s2636 + $0x178] sm:$0xff]
        %v2685 = vld [vmem:[%s2636 + $0x180] sm:$0xff]
        %v2686 = vld [vmem:[%s2636 + $0x188] sm:$0xff]
        %v2687 = vld [vmem:[%s2636 + $0x190] sm:$0xff]
        %v2688 = vld [vmem:[%s2636 + $0x198] sm:$0xff]
        %v2689 = vld [vmem:[%s2636 + $0x1a0] sm:$0xff]
        %v2690 = vld [vmem:[%s2636 + $0x1a8] sm:$0xff]
        %v2691 = vld [vmem:[%s2636 + $0x1b0] sm:$0xff]
        %v2692 = vld [vmem:[%s2636 + $0x1b8] sm:$0xff]
        %v2693 = vld [vmem:[%s2636 + $0x1c0] sm:$0xff]
        %v2694 = vld [vmem:[%s2636 + $0x1c8] sm:$0xff]
        %v2695 = vld [vmem:[%s2636 + $0x1d0] sm:$0xff]
        %v2696 = vld [vmem:[%s2636 + $0x1d8] sm:$0xff]
        %v2697 = vld [vmem:[%s2636 + $0x1e0] sm:$0xff]
        %v2698 = vld [vmem:[%s2636 + $0x1e8] sm:$0xff]
        %v2699 = vld [vmem:[%s2636 + $0x1f0] sm:$0xff]
        %v2700 = vld [vmem:[%s2636 + $0x1f8] sm:$0xff]
        %2701 = vmatprep.subr.mxu0 %v2638
        %2702 = vmatpush1.msra.mxu0 %v2637
        %2703 = vmatprep.subr.mxu0 %v2640
        %2704 = vmatpush1.msra.mxu0 %v2639
        %2705 = vmatprep.subr.mxu0 %v2642
        %2706 = vmatpush1.msra.mxu0 %v2641
        %2707 = vmatprep.subr.mxu0 %v2644
        %2708 = vmatpush1.msra.mxu0 %v2643
        %2709 = vmatprep.subr.mxu0 %v2646
        %2710 = vmatpush1.msra.mxu0 %v2645
        %2711 = vmatprep.subr.mxu0 %v2648
        %2712 = vmatpush1.msra.mxu0 %v2647
        %2713 = vmatprep.subr.mxu0 %v2650
        %2714 = vmatpush1.msra.mxu0 %v2649
        %2715 = vmatprep.subr.mxu0 %v2652
        %2716 = vmatpush1.msra.mxu0 %v2651
        %2717 = vmatprep.subr.mxu0 %v2654
        %2718 = vmatpush1.msra.mxu0 %v2653
        %2719 = vmatprep.subr.mxu0 %v2656
        %2720 = vmatpush1.msra.mxu0 %v2655
        %2721 = vmatprep.subr.mxu0 %v2658
        %2722 = vmatpush1.msra.mxu0 %v2657
        %2723 = vmatprep.subr.mxu0 %v2660
        %2724 = vmatpush1.msra.mxu0 %v2659
        %2725 = vmatprep.subr.mxu0 %v2662
        %2726 = vmatpush1.msra.mxu0 %v2661
        %2727 = vmatprep.subr.mxu0 %v2664
        %2728 = vmatpush1.msra.mxu0 %v2663
        %2729 = vmatprep.subr.mxu0 %v2666
        %2730 = vmatpush1.msra.mxu0 %v2665
        %2731 = vmatprep.subr.mxu0 %v2668
        %2732 = vmatpush1.msra.mxu0 %v2667
        %2733 = vmatprep.subr.mxu0 %v2670
        %2734 = vmatpush1.msra.mxu0 %v2669
        %2735 = vmatprep.subr.mxu0 %v2672
        %2736 = vmatpush1.msra.mxu0 %v2671
        %2737 = vmatprep.subr.mxu0 %v2674
        %2738 = vmatpush1.msra.mxu0 %v2673
        %2739 = vmatprep.subr.mxu0 %v2676
        %2740 = vmatpush1.msra.mxu0 %v2675
        %2741 = vmatprep.subr.mxu0 %v2678
        %2742 = vmatpush1.msra.mxu0 %v2677
        %2743 = vmatprep.subr.mxu0 %v2680
        %2744 = vmatpush1.msra.mxu0 %v2679
        %2745 = vmatprep.subr.mxu0 %v2682
        %2746 = vmatpush1.msra.mxu0 %v2681
        %2747 = vmatprep.subr.mxu0 %v2684
        %2748 = vmatpush1.msra.mxu0 %v2683
        %2749 = vmatprep.subr.mxu0 %v2686
        %2750 = vmatpush1.msra.mxu0 %v2685
        %2751 = vmatprep.subr.mxu0 %v2688
        %2752 = vmatpush1.msra.mxu0 %v2687
        %2753 = vmatprep.subr.mxu0 %v2690
        %2754 = vmatpush1.msra.mxu0 %v2689
        %2755 = vmatprep.subr.mxu0 %v2692
        %2756 = vmatpush1.msra.mxu0 %v2691
        %2757 = vmatprep.subr.mxu0 %v2694
        %2758 = vmatpush1.msra.mxu0 %v2693
        %2759 = vmatprep.subr.mxu0 %v2696
        %2760 = vmatpush1.msra.mxu0 %v2695
        %2761 = vmatprep.subr.mxu0 %v2698
        %2762 = vmatpush1.msra.mxu0 %v2697
        %2763 = vmatprep.subr.mxu0 %v2700
        %2764 = vmatpush1.msra.mxu0 %v2699
        %2765 = vmatprep.mubr.f32.mxu0 %v2563
        %2766 = vmatmul.mubr.f32.gmra.mrb[0].mxu0 %v2562
        %v2767 = vpop.f32.mrb[0].mxu0
        %v2768 = vadd.f32 0.0, %v2767
        %v2769 = vpop.f32.mrb[0].mxu0
        %v2770 = vadd.f32 0.0, %v2769
        %2771 = vdwg.mxu0
        %2772 = vmatprep.subr.mxu0 %v2573
        %2773 = vmatpush1.msra.mxu0 %v2572
        %2774 = vmatprep.subr.mxu0 %v2575
        %2775 = vmatpush1.msra.mxu0 %v2574
        %2776 = vmatprep.subr.mxu0 %v2577
        %2777 = vmatpush1.msra.mxu0 %v2576
        %2778 = vmatprep.subr.mxu0 %v2579
        %2779 = vmatpush1.msra.mxu0 %v2578
        %2780 = vmatprep.subr.mxu0 %v2581
        %2781 = vmatpush1.msra.mxu0 %v2580
        %2782 = vmatprep.subr.mxu0 %v2583
        %2783 = vmatpush1.msra.mxu0 %v2582
        %2784 = vmatprep.subr.mxu0 %v2585
        %2785 = vmatpush1.msra.mxu0 %v2584
        %2786 = vmatprep.subr.mxu0 %v2587
        %2787 = vmatpush1.msra.mxu0 %v2586
        %2788 = vmatprep.subr.mxu0 %v2589
        %2789 = vmatpush1.msra.mxu0 %v2588
        %2790 = vmatprep.subr.mxu0 %v2591
        %2791 = vmatpush1.msra.mxu0 %v2590
        %2792 = vmatprep.subr.mxu0 %v2593
        %2793 = vmatpush1.msra.mxu0 %v2592
        %2794 = vmatprep.subr.mxu0 %v2595
        %2795 = vmatpush1.msra.mxu0 %v2594
        %2796 = vmatprep.subr.mxu0 %v2597
        %2797 = vmatpush1.msra.mxu0 %v2596
        %2798 = vmatprep.subr.mxu0 %v2599
        %2799 = vmatpush1.msra.mxu0 %v2598
        %2800 = vmatprep.subr.mxu0 %v2601
        %2801 = vmatpush1.msra.mxu0 %v2600
        %2802 = vmatprep.subr.mxu0 %v2603
        %2803 = vmatpush1.msra.mxu0 %v2602
        %2804 = vmatprep.subr.mxu0 %v2605
        %2805 = vmatpush1.msra.mxu0 %v2604
        %2806 = vmatprep.subr.mxu0 %v2607
        %2807 = vmatpush1.msra.mxu0 %v2606
        %2808 = vmatprep.subr.mxu0 %v2609
        %2809 = vmatpush1.msra.mxu0 %v2608
        %2810 = vmatprep.subr.mxu0 %v2611
        %2811 = vmatpush1.msra.mxu0 %v2610
        %2812 = vmatprep.subr.mxu0 %v2613
        %2813 = vmatpush1.msra.mxu0 %v2612
        %2814 = vmatprep.subr.mxu0 %v2615
        %2815 = vmatpush1.msra.mxu0 %v2614
        %2816 = vmatprep.subr.mxu0 %v2617
        %2817 = vmatpush1.msra.mxu0 %v2616
        %2818 = vmatprep.subr.mxu0 %v2619
        %2819 = vmatpush1.msra.mxu0 %v2618
        %2820 = vmatprep.subr.mxu0 %v2621
        %2821 = vmatpush1.msra.mxu0 %v2620
        %2822 = vmatprep.subr.mxu0 %v2623
        %2823 = vmatpush1.msra.mxu0 %v2622
        %2824 = vmatprep.subr.mxu0 %v2625
        %2825 = vmatpush1.msra.mxu0 %v2624
        %2826 = vmatprep.subr.mxu0 %v2627
        %2827 = vmatpush1.msra.mxu0 %v2626
        %2828 = vmatprep.subr.mxu0 %v2629
        %2829 = vmatpush1.msra.mxu0 %v2628
        %2830 = vmatprep.subr.mxu0 %v2631
        %2831 = vmatpush1.msra.mxu0 %v2630
        %2832 = vmatprep.subr.mxu0 %v2633
        %2833 = vmatpush1.msra.mxu0 %v2632
        %2834 = vmatprep.subr.mxu0 %v2635
        %2835 = vmatpush1.msra.mxu0 %v2634
        %2836 = vmatprep.mubr.f32.mxu0 %v2561
        %2837 = vmatmul.mubr.f32.gmra.mrb[0].mxu0 %v2560
        %v2838 = vpop.f32.mrb[0].mxu0
        %v2839 = vadd.f32 %v2768, %v2838
        %v2840 = vpop.f32.mrb[0].mxu0
        %v2841 = vadd.f32 %v2770, %v2840
        %2842 = vdwg.mxu0
        %s2843 = scalar_lea.vmem [#allocation8], 2048
        %v2844 = vld [vmem:[%s2843] sm:$0xff]
        %v2845 = vld [vmem:[%s2843 + $0x8] sm:$0xff]
        %v2846 = vld [vmem:[%s2843 + $0x10] sm:$0xff]
        %v2847 = vld [vmem:[%s2843 + $0x18] sm:$0xff]
        %v2848 = vld [vmem:[%s2843 + $0x20] sm:$0xff]
        %v2849 = vld [vmem:[%s2843 + $0x28] sm:$0xff]
        %v2850 = vld [vmem:[%s2843 + $0x30] sm:$0xff]
        %v2851 = vld [vmem:[%s2843 + $0x38] sm:$0xff]
        %v2852 = vld [vmem:[%s2843 + $0x40] sm:$0xff]
        %v2853 = vld [vmem:[%s2843 + $0x48] sm:$0xff]
        %v2854 = vld [vmem:[%s2843 + $0x50] sm:$0xff]
        %v2855 = vld [vmem:[%s2843 + $0x58] sm:$0xff]
        %v2856 = vld [vmem:[%s2843 + $0x60] sm:$0xff]
        %v2857 = vld [vmem:[%s2843 + $0x68] sm:$0xff]
        %v2858 = vld [vmem:[%s2843 + $0x70] sm:$0xff]
        %v2859 = vld [vmem:[%s2843 + $0x78] sm:$0xff]
        %v2860 = vld [vmem:[%s2843 + $0x80] sm:$0xff]
        %v2861 = vld [vmem:[%s2843 + $0x88] sm:$0xff]
        %v2862 = vld [vmem:[%s2843 + $0x90] sm:$0xff]
        %v2863 = vld [vmem:[%s2843 + $0x98] sm:$0xff]
        %v2864 = vld [vmem:[%s2843 + $0xa0] sm:$0xff]
        %v2865 = vld [vmem:[%s2843 + $0xa8] sm:$0xff]
        %v2866 = vld [vmem:[%s2843 + $0xb0] sm:$0xff]
        %v2867 = vld [vmem:[%s2843 + $0xb8] sm:$0xff]
        %v2868 = vld [vmem:[%s2843 + $0xc0] sm:$0xff]
        %v2869 = vld [vmem:[%s2843 + $0xc8] sm:$0xff]
        %v2870 = vld [vmem:[%s2843 + $0xd0] sm:$0xff]
        %v2871 = vld [vmem:[%s2843 + $0xd8] sm:$0xff]
        %v2872 = vld [vmem:[%s2843 + $0xe0] sm:$0xff]
        %v2873 = vld [vmem:[%s2843 + $0xe8] sm:$0xff]
        %v2874 = vld [vmem:[%s2843 + $0xf0] sm:$0xff]
        %v2875 = vld [vmem:[%s2843 + $0xf8] sm:$0xff]
        %v2876 = vld [vmem:[%s2843 + $0x100] sm:$0xff]
        %v2877 = vld [vmem:[%s2843 + $0x108] sm:$0xff]
        %v2878 = vld [vmem:[%s2843 + $0x110] sm:$0xff]
        %v2879 = vld [vmem:[%s2843 + $0x118] sm:$0xff]
        %v2880 = vld [vmem:[%s2843 + $0x120] sm:$0xff]
        %v2881 = vld [vmem:[%s2843 + $0x128] sm:$0xff]
        %v2882 = vld [vmem:[%s2843 + $0x130] sm:$0xff]
        %v2883 = vld [vmem:[%s2843 + $0x138] sm:$0xff]
        %v2884 = vld [vmem:[%s2843 + $0x140] sm:$0xff]
        %v2885 = vld [vmem:[%s2843 + $0x148] sm:$0xff]
        %v2886 = vld [vmem:[%s2843 + $0x150] sm:$0xff]
        %v2887 = vld [vmem:[%s2843 + $0x158] sm:$0xff]
        %v2888 = vld [vmem:[%s2843 + $0x160] sm:$0xff]
        %v2889 = vld [vmem:[%s2843 + $0x168] sm:$0xff]
        %v2890 = vld [vmem:[%s2843 + $0x170] sm:$0xff]
        %v2891 = vld [vmem:[%s2843 + $0x178] sm:$0xff]
        %v2892 = vld [vmem:[%s2843 + $0x180] sm:$0xff]
        %v2893 = vld [vmem:[%s2843 + $0x188] sm:$0xff]
        %v2894 = vld [vmem:[%s2843 + $0x190] sm:$0xff]
        %v2895 = vld [vmem:[%s2843 + $0x198] sm:$0xff]
        %v2896 = vld [vmem:[%s2843 + $0x1a0] sm:$0xff]
        %v2897 = vld [vmem:[%s2843 + $0x1a8] sm:$0xff]
        %v2898 = vld [vmem:[%s2843 + $0x1b0] sm:$0xff]
        %v2899 = vld [vmem:[%s2843 + $0x1b8] sm:$0xff]
        %v2900 = vld [vmem:[%s2843 + $0x1c0] sm:$0xff]
        %v2901 = vld [vmem:[%s2843 + $0x1c8] sm:$0xff]
        %v2902 = vld [vmem:[%s2843 + $0x1d0] sm:$0xff]
        %v2903 = vld [vmem:[%s2843 + $0x1d8] sm:$0xff]
        %v2904 = vld [vmem:[%s2843 + $0x1e0] sm:$0xff]
        %v2905 = vld [vmem:[%s2843 + $0x1e8] sm:$0xff]
        %v2906 = vld [vmem:[%s2843 + $0x1f0] sm:$0xff]
        %v2907 = vld [vmem:[%s2843 + $0x1f8] sm:$0xff]
        %vm2912 = vcmask 1046528
        %v2913 = vrot.slane %v2564, 1
        %v2914 = vrot.slane %v2566, 1
        %v2915 = vsel %vm2912, %v2913, %v2914
        %v2916 = vrot.slane %v2565, 1
        %v2917 = vrot.slane %v2567, 1
        %v2918 = vsel %vm2912, %v2916, %v2917
        %2921 = vmatprep.subr.mxu0 %v2845
        %2922 = vmatpush1.msra.mxu0 %v2844
        %2923 = vmatprep.subr.mxu0 %v2847
        %2924 = vmatpush1.msra.mxu0 %v2846
        %2925 = vmatprep.subr.mxu0 %v2849
        %2926 = vmatpush1.msra.mxu0 %v2848
        %2927 = vmatprep.subr.mxu0 %v2851
        %2928 = vmatpush1.msra.mxu0 %v2850
        %2929 = vmatprep.subr.mxu0 %v2853
        %2930 = vmatpush1.msra.mxu0 %v2852
        %2931 = vmatprep.subr.mxu0 %v2855
        %2932 = vmatpush1.msra.mxu0 %v2854
        %2933 = vmatprep.subr.mxu0 %v2857
        %2934 = vmatpush1.msra.mxu0 %v2856
        %2935 = vmatprep.subr.mxu0 %v2859
        %2936 = vmatpush1.msra.mxu0 %v2858
        %2937 = vmatprep.subr.mxu0 %v2861
        %2938 = vmatpush1.msra.mxu0 %v2860
        %2939 = vmatprep.subr.mxu0 %v2863
        %2940 = vmatpush1.msra.mxu0 %v2862
        %2941 = vmatprep.subr.mxu0 %v2865
        %2942 = vmatpush1.msra.mxu0 %v2864
        %2943 = vmatprep.subr.mxu0 %v2867
        %2944 = vmatpush1.msra.mxu0 %v2866
        %2945 = vmatprep.subr.mxu0 %v2869
        %2946 = vmatpush1.msra.mxu0 %v2868
        %2947 = vmatprep.subr.mxu0 %v2871
        %2948 = vmatpush1.msra.mxu0 %v2870
        %2949 = vmatprep.subr.mxu0 %v2873
        %2950 = vmatpush1.msra.mxu0 %v2872
        %2951 = vmatprep.subr.mxu0 %v2875
        %2952 = vmatpush1.msra.mxu0 %v2874
        %2953 = vmatprep.subr.mxu0 %v2877
        %2954 = vmatpush1.msra.mxu0 %v2876
        %2955 = vmatprep.subr.mxu0 %v2879
        %2956 = vmatpush1.msra.mxu0 %v2878
        %2957 = vmatprep.subr.mxu0 %v2881
        %2958 = vmatpush1.msra.mxu0 %v2880
        %2959 = vmatprep.subr.mxu0 %v2883
        %2960 = vmatpush1.msra.mxu0 %v2882
        %2961 = vmatprep.subr.mxu0 %v2885
        %2962 = vmatpush1.msra.mxu0 %v2884
        %2963 = vmatprep.subr.mxu0 %v2887
        %2964 = vmatpush1.msra.mxu0 %v2886
        %2965 = vmatprep.subr.mxu0 %v2889
        %2966 = vmatpush1.msra.mxu0 %v2888
        %2967 = vmatprep.subr.mxu0 %v2891
        %2968 = vmatpush1.msra.mxu0 %v2890
        %2969 = vmatprep.subr.mxu0 %v2893
        %2970 = vmatpush1.msra.mxu0 %v2892
        %2971 = vmatprep.subr.mxu0 %v2895
        %2972 = vmatpush1.msra.mxu0 %v2894
        %2973 = vmatprep.subr.mxu0 %v2897
        %2974 = vmatpush1.msra.mxu0 %v2896
        %2975 = vmatprep.subr.mxu0 %v2899
        %2976 = vmatpush1.msra.mxu0 %v2898
        %2977 = vmatprep.subr.mxu0 %v2901
        %2978 = vmatpush1.msra.mxu0 %v2900
        %2979 = vmatprep.subr.mxu0 %v2903
        %2980 = vmatpush1.msra.mxu0 %v2902
        %2981 = vmatprep.subr.mxu0 %v2905
        %2982 = vmatpush1.msra.mxu0 %v2904
        %2983 = vmatprep.subr.mxu0 %v2907
        %2984 = vmatpush1.msra.mxu0 %v2906
        %2985 = vmatprep.mubr.f32.mxu0 %v2918
        %2986 = vmatmul.mubr.f32.gmra.mrb[0].mxu0 %v2915
        %v2987 = vpop.f32.mrb[0].mxu0
        %v2988 = vadd.f32 0.0, %v2987
        %v2989 = vpop.f32.mrb[0].mxu0
        %v2990 = vadd.f32 0.0, %v2989
        %2991 = vdwg.mxu0
        %v2992 = vadd.f32 %v2839, %v2988
        %v2993 = vadd.f32 %v2841, %v2990
        %s2994 = scalar_lea.vmem [#allocation8], 512
        %v2995 = vld [vmem:[%s2994] sm:$0xff]
        %v2996 = vld [vmem:[%s2994 + $0x8] sm:$0xff]
        %v2997 = vld [vmem:[%s2994 + $0x10] sm:$0xff]
        %v2998 = vld [vmem:[%s2994 + $0x18] sm:$0xff]
        %v2999 = vld [vmem:[%s2994 + $0x20] sm:$0xff]
        %v3000 = vld [vmem:[%s2994 + $0x28] sm:$0xff]
        %v3001 = vld [vmem:[%s2994 + $0x30] sm:$0xff]
        %v3002 = vld [vmem:[%s2994 + $0x38] sm:$0xff]
        %v3003 = vld [vmem:[%s2994 + $0x40] sm:$0xff]
        %v3004 = vld [vmem:[%s2994 + $0x48] sm:$0xff]
        %v3005 = vld [vmem:[%s2994 + $0x50] sm:$0xff]
        %v3006 = vld [vmem:[%s2994 + $0x58] sm:$0xff]
        %v3007 = vld [vmem:[%s2994 + $0x60] sm:$0xff]
        %v3008 = vld [vmem:[%s2994 + $0x68] sm:$0xff]
        %v3009 = vld [vmem:[%s2994 + $0x70] sm:$0xff]
        %v3010 = vld [vmem:[%s2994 + $0x78] sm:$0xff]
        %v3011 = vld [vmem:[%s2994 + $0x80] sm:$0xff]
        %v3012 = vld [vmem:[%s2994 + $0x88] sm:$0xff]
        %v3013 = vld [vmem:[%s2994 + $0x90] sm:$0xff]
        %v3014 = vld [vmem:[%s2994 + $0x98] sm:$0xff]
        %v3015 = vld [vmem:[%s2994 + $0xa0] sm:$0xff]
        %v3016 = vld [vmem:[%s2994 + $0xa8] sm:$0xff]
        %v3017 = vld [vmem:[%s2994 + $0xb0] sm:$0xff]
        %v3018 = vld [vmem:[%s2994 + $0xb8] sm:$0xff]
        %v3019 = vld [vmem:[%s2994 + $0xc0] sm:$0xff]
        %v3020 = vld [vmem:[%s2994 + $0xc8] sm:$0xff]
        %v3021 = vld [vmem:[%s2994 + $0xd0] sm:$0xff]
        %v3022 = vld [vmem:[%s2994 + $0xd8] sm:$0xff]
        %v3023 = vld [vmem:[%s2994 + $0xe0] sm:$0xff]
        %v3024 = vld [vmem:[%s2994 + $0xe8] sm:$0xff]
        %v3025 = vld [vmem:[%s2994 + $0xf0] sm:$0xff]
        %v3026 = vld [vmem:[%s2994 + $0xf8] sm:$0xff]
        %v3027 = vld [vmem:[%s2994 + $0x100] sm:$0xff]
        %v3028 = vld [vmem:[%s2994 + $0x108] sm:$0xff]
        %v3029 = vld [vmem:[%s2994 + $0x110] sm:$0xff]
        %v3030 = vld [vmem:[%s2994 + $0x118] sm:$0xff]
        %v3031 = vld [vmem:[%s2994 + $0x120] sm:$0xff]
        %v3032 = vld [vmem:[%s2994 + $0x128] sm:$0xff]
        %v3033 = vld [vmem:[%s2994 + $0x130] sm:$0xff]
        %v3034 = vld [vmem:[%s2994 + $0x138] sm:$0xff]
        %v3035 = vld [vmem:[%s2994 + $0x140] sm:$0xff]
        %v3036 = vld [vmem:[%s2994 + $0x148] sm:$0xff]
        %v3037 = vld [vmem:[%s2994 + $0x150] sm:$0xff]
        %v3038 = vld [vmem:[%s2994 + $0x158] sm:$0xff]
        %v3039 = vld [vmem:[%s2994 + $0x160] sm:$0xff]
        %v3040 = vld [vmem:[%s2994 + $0x168] sm:$0xff]
        %v3041 = vld [vmem:[%s2994 + $0x170] sm:$0xff]
        %v3042 = vld [vmem:[%s2994 + $0x178] sm:$0xff]
        %v3043 = vld [vmem:[%s2994 + $0x180] sm:$0xff]
        %v3044 = vld [vmem:[%s2994 + $0x188] sm:$0xff]
        %v3045 = vld [vmem:[%s2994 + $0x190] sm:$0xff]
        %v3046 = vld [vmem:[%s2994 + $0x198] sm:$0xff]
        %v3047 = vld [vmem:[%s2994 + $0x1a0] sm:$0xff]
        %v3048 = vld [vmem:[%s2994 + $0x1a8] sm:$0xff]
        %v3049 = vld [vmem:[%s2994 + $0x1b0] sm:$0xff]
        %v3050 = vld [vmem:[%s2994 + $0x1b8] sm:$0xff]
        %v3051 = vld [vmem:[%s2994 + $0x1c0] sm:$0xff]
        %v3052 = vld [vmem:[%s2994 + $0x1c8] sm:$0xff]
        %v3053 = vld [vmem:[%s2994 + $0x1d0] sm:$0xff]
        %v3054 = vld [vmem:[%s2994 + $0x1d8] sm:$0xff]
        %v3055 = vld [vmem:[%s2994 + $0x1e0] sm:$0xff]
        %v3056 = vld [vmem:[%s2994 + $0x1e8] sm:$0xff]
        %v3057 = vld [vmem:[%s2994 + $0x1f0] sm:$0xff]
        %v3058 = vld [vmem:[%s2994 + $0x1f8] sm:$0xff]
        %s3059 = scalar_lea.vmem [#allocation8], 1536
        %v3060 = vld [vmem:[%s3059] sm:$0xff]
        %v3061 = vld [vmem:[%s3059 + $0x8] sm:$0xff]
        %v3062 = vld [vmem:[%s3059 + $0x10] sm:$0xff]
        %v3063 = vld [vmem:[%s3059 + $0x18] sm:$0xff]
        %v3064 = vld [vmem:[%s3059 + $0x20] sm:$0xff]
        %v3065 = vld [vmem:[%s3059 + $0x28] sm:$0xff]
        %v3066 = vld [vmem:[%s3059 + $0x30] sm:$0xff]
        %v3067 = vld [vmem:[%s3059 + $0x38] sm:$0xff]
        %v3068 = vld [vmem:[%s3059 + $0x40] sm:$0xff]
        %v3069 = vld [vmem:[%s3059 + $0x48] sm:$0xff]
        %v3070 = vld [vmem:[%s3059 + $0x50] sm:$0xff]
        %v3071 = vld [vmem:[%s3059 + $0x58] sm:$0xff]
        %v3072 = vld [vmem:[%s3059 + $0x60] sm:$0xff]
        %v3073 = vld [vmem:[%s3059 + $0x68] sm:$0xff]
        %v3074 = vld [vmem:[%s3059 + $0x70] sm:$0xff]
        %v3075 = vld [vmem:[%s3059 + $0x78] sm:$0xff]
        %v3076 = vld [vmem:[%s3059 + $0x80] sm:$0xff]
        %v3077 = vld [vmem:[%s3059 + $0x88] sm:$0xff]
        %v3078 = vld [vmem:[%s3059 + $0x90] sm:$0xff]
        %v3079 = vld [vmem:[%s3059 + $0x98] sm:$0xff]
        %v3080 = vld [vmem:[%s3059 + $0xa0] sm:$0xff]
        %v3081 = vld [vmem:[%s3059 + $0xa8] sm:$0xff]
        %v3082 = vld [vmem:[%s3059 + $0xb0] sm:$0xff]
        %v3083 = vld [vmem:[%s3059 + $0xb8] sm:$0xff]
        %v3084 = vld [vmem:[%s3059 + $0xc0] sm:$0xff]
        %v3085 = vld [vmem:[%s3059 + $0xc8] sm:$0xff]
        %v3086 = vld [vmem:[%s3059 + $0xd0] sm:$0xff]
        %v3087 = vld [vmem:[%s3059 + $0xd8] sm:$0xff]
        %v3088 = vld [vmem:[%s3059 + $0xe0] sm:$0xff]
        %v3089 = vld [vmem:[%s3059 + $0xe8] sm:$0xff]
        %v3090 = vld [vmem:[%s3059 + $0xf0] sm:$0xff]
        %v3091 = vld [vmem:[%s3059 + $0xf8] sm:$0xff]
        %v3092 = vld [vmem:[%s3059 + $0x100] sm:$0xff]
        %v3093 = vld [vmem:[%s3059 + $0x108] sm:$0xff]
        %v3094 = vld [vmem:[%s3059 + $0x110] sm:$0xff]
        %v3095 = vld [vmem:[%s3059 + $0x118] sm:$0xff]
        %v3096 = vld [vmem:[%s3059 + $0x120] sm:$0xff]
        %v3097 = vld [vmem:[%s3059 + $0x128] sm:$0xff]
        %v3098 = vld [vmem:[%s3059 + $0x130] sm:$0xff]
        %v3099 = vld [vmem:[%s3059 + $0x138] sm:$0xff]
        %v3100 = vld [vmem:[%s3059 + $0x140] sm:$0xff]
        %v3101 = vld [vmem:[%s3059 + $0x148] sm:$0xff]
        %v3102 = vld [vmem:[%s3059 + $0x150] sm:$0xff]
        %v3103 = vld [vmem:[%s3059 + $0x158] sm:$0xff]
        %v3104 = vld [vmem:[%s3059 + $0x160] sm:$0xff]
        %v3105 = vld [vmem:[%s3059 + $0x168] sm:$0xff]
        %v3106 = vld [vmem:[%s3059 + $0x170] sm:$0xff]
        %v3107 = vld [vmem:[%s3059 + $0x178] sm:$0xff]
        %v3108 = vld [vmem:[%s3059 + $0x180] sm:$0xff]
        %v3109 = vld [vmem:[%s3059 + $0x188] sm:$0xff]
        %v3110 = vld [vmem:[%s3059 + $0x190] sm:$0xff]
        %v3111 = vld [vmem:[%s3059 + $0x198] sm:$0xff]
        %v3112 = vld [vmem:[%s3059 + $0x1a0] sm:$0xff]
        %v3113 = vld [vmem:[%s3059 + $0x1a8] sm:$0xff]
        %v3114 = vld [vmem:[%s3059 + $0x1b0] sm:$0xff]
        %v3115 = vld [vmem:[%s3059 + $0x1b8] sm:$0xff]
        %v3116 = vld [vmem:[%s3059 + $0x1c0] sm:$0xff]
        %v3117 = vld [vmem:[%s3059 + $0x1c8] sm:$0xff]
        %v3118 = vld [vmem:[%s3059 + $0x1d0] sm:$0xff]
        %v3119 = vld [vmem:[%s3059 + $0x1d8] sm:$0xff]
        %v3120 = vld [vmem:[%s3059 + $0x1e0] sm:$0xff]
        %v3121 = vld [vmem:[%s3059 + $0x1e8] sm:$0xff]
        %v3122 = vld [vmem:[%s3059 + $0x1f0] sm:$0xff]
        %v3123 = vld [vmem:[%s3059 + $0x1f8] sm:$0xff]
        %3124 = vmatprep.subr.mxu0 %v3061
        %3125 = vmatpush1.msra.mxu0 %v3060
        %3126 = vmatprep.subr.mxu0 %v3063
        %3127 = vmatpush1.msra.mxu0 %v3062
        %3128 = vmatprep.subr.mxu0 %v3065
        %3129 = vmatpush1.msra.mxu0 %v3064
        %3130 = vmatprep.subr.mxu0 %v3067
        %3131 = vmatpush1.msra.mxu0 %v3066
        %3132 = vmatprep.subr.mxu0 %v3069
        %3133 = vmatpush1.msra.mxu0 %v3068
        %3134 = vmatprep.subr.mxu0 %v3071
        %3135 = vmatpush1.msra.mxu0 %v3070
        %3136 = vmatprep.subr.mxu0 %v3073
        %3137 = vmatpush1.msra.mxu0 %v3072
        %3138 = vmatprep.subr.mxu0 %v3075
        %3139 = vmatpush1.msra.mxu0 %v3074
        %3140 = vmatprep.subr.mxu0 %v3077
        %3141 = vmatpush1.msra.mxu0 %v3076
        %3142 = vmatprep.subr.mxu0 %v3079
        %3143 = vmatpush1.msra.mxu0 %v3078
        %3144 = vmatprep.subr.mxu0 %v3081
        %3145 = vmatpush1.msra.mxu0 %v3080
        %3146 = vmatprep.subr.mxu0 %v3083
        %3147 = vmatpush1.msra.mxu0 %v3082
        %3148 = vmatprep.subr.mxu0 %v3085
        %3149 = vmatpush1.msra.mxu0 %v3084
        %3150 = vmatprep.subr.mxu0 %v3087
        %3151 = vmatpush1.msra.mxu0 %v3086
        %3152 = vmatprep.subr.mxu0 %v3089
        %3153 = vmatpush1.msra.mxu0 %v3088
        %3154 = vmatprep.subr.mxu0 %v3091
        %3155 = vmatpush1.msra.mxu0 %v3090
        %3156 = vmatprep.subr.mxu0 %v3093
        %3157 = vmatpush1.msra.mxu0 %v3092
        %3158 = vmatprep.subr.mxu0 %v3095
        %3159 = vmatpush1.msra.mxu0 %v3094
        %3160 = vmatprep.subr.mxu0 %v3097
        %3161 = vmatpush1.msra.mxu0 %v3096
        %3162 = vmatprep.subr.mxu0 %v3099
        %3163 = vmatpush1.msra.mxu0 %v3098
        %3164 = vmatprep.subr.mxu0 %v3101
        %3165 = vmatpush1.msra.mxu0 %v3100
        %3166 = vmatprep.subr.mxu0 %v3103
        %3167 = vmatpush1.msra.mxu0 %v3102
        %3168 = vmatprep.subr.mxu0 %v3105
        %3169 = vmatpush1.msra.mxu0 %v3104
        %3170 = vmatprep.subr.mxu0 %v3107
        %3171 = vmatpush1.msra.mxu0 %v3106
        %3172 = vmatprep.subr.mxu0 %v3109
        %3173 = vmatpush1.msra.mxu0 %v3108
        %3174 = vmatprep.subr.mxu0 %v3111
        %3175 = vmatpush1.msra.mxu0 %v3110
        %3176 = vmatprep.subr.mxu0 %v3113
        %3177 = vmatpush1.msra.mxu0 %v3112
        %3178 = vmatprep.subr.mxu0 %v3115
        %3179 = vmatpush1.msra.mxu0 %v3114
        %3180 = vmatprep.subr.mxu0 %v3117
        %3181 = vmatpush1.msra.mxu0 %v3116
        %3182 = vmatprep.subr.mxu0 %v3119
        %3183 = vmatpush1.msra.mxu0 %v3118
        %3184 = vmatprep.subr.mxu0 %v3121
        %3185 = vmatpush1.msra.mxu0 %v3120
        %3186 = vmatprep.subr.mxu0 %v3123
        %3187 = vmatpush1.msra.mxu0 %v3122
        %3188 = vmatprep.mubr.f32.mxu0 %v2563
        %3189 = vmatmul.mubr.f32.gmra.mrb[0].mxu0 %v2562
        %v3190 = vpop.f32.mrb[0].mxu0
        %v3191 = vadd.f32 0.0, %v3190
        %v3192 = vpop.f32.mrb[0].mxu0
        %v3193 = vadd.f32 0.0, %v3192
        %3194 = vdwg.mxu0
        %3195 = vmatprep.subr.mxu0 %v2996
        %3196 = vmatpush1.msra.mxu0 %v2995
        %3197 = vmatprep.subr.mxu0 %v2998
        %3198 = vmatpush1.msra.mxu0 %v2997
        %3199 = vmatprep.subr.mxu0 %v3000
        %3200 = vmatpush1.msra.mxu0 %v2999
        %3201 = vmatprep.subr.mxu0 %v3002
        %3202 = vmatpush1.msra.mxu0 %v3001
        %3203 = vmatprep.subr.mxu0 %v3004
        %3204 = vmatpush1.msra.mxu0 %v3003
        %3205 = vmatprep.subr.mxu0 %v3006
        %3206 = vmatpush1.msra.mxu0 %v3005
        %3207 = vmatprep.subr.mxu0 %v3008
        %3208 = vmatpush1.msra.mxu0 %v3007
        %3209 = vmatprep.subr.mxu0 %v3010
        %3210 = vmatpush1.msra.mxu0 %v3009
        %3211 = vmatprep.subr.mxu0 %v3012
        %3212 = vmatpush1.msra.mxu0 %v3011
        %3213 = vmatprep.subr.mxu0 %v3014
        %3214 = vmatpush1.msra.mxu0 %v3013
        %3215 = vmatprep.subr.mxu0 %v3016
        %3216 = vmatpush1.msra.mxu0 %v3015
        %3217 = vmatprep.subr.mxu0 %v3018
        %3218 = vmatpush1.msra.mxu0 %v3017
        %3219 = vmatprep.subr.mxu0 %v3020
        %3220 = vmatpush1.msra.mxu0 %v3019
        %3221 = vmatprep.subr.mxu0 %v3022
        %3222 = vmatpush1.msra.mxu0 %v3021
        %3223 = vmatprep.subr.mxu0 %v3024
        %3224 = vmatpush1.msra.mxu0 %v3023
        %3225 = vmatprep.subr.mxu0 %v3026
        %3226 = vmatpush1.msra.mxu0 %v3025
        %3227 = vmatprep.subr.mxu0 %v3028
        %3228 = vmatpush1.msra.mxu0 %v3027
        %3229 = vmatprep.subr.mxu0 %v3030
        %3230 = vmatpush1.msra.mxu0 %v3029
        %3231 = vmatprep.subr.mxu0 %v3032
        %3232 = vmatpush1.msra.mxu0 %v3031
        %3233 = vmatprep.subr.mxu0 %v3034
        %3234 = vmatpush1.msra.mxu0 %v3033
        %3235 = vmatprep.subr.mxu0 %v3036
        %3236 = vmatpush1.msra.mxu0 %v3035
        %3237 = vmatprep.subr.mxu0 %v3038
        %3238 = vmatpush1.msra.mxu0 %v3037
        %3239 = vmatprep.subr.mxu0 %v3040
        %3240 = vmatpush1.msra.mxu0 %v3039
        %3241 = vmatprep.subr.mxu0 %v3042
        %3242 = vmatpush1.msra.mxu0 %v3041
        %3243 = vmatprep.subr.mxu0 %v3044
        %3244 = vmatpush1.msra.mxu0 %v3043
        %3245 = vmatprep.subr.mxu0 %v3046
        %3246 = vmatpush1.msra.mxu0 %v3045
        %3247 = vmatprep.subr.mxu0 %v3048
        %3248 = vmatpush1.msra.mxu0 %v3047
        %3249 = vmatprep.subr.mxu0 %v3050
        %3250 = vmatpush1.msra.mxu0 %v3049
        %3251 = vmatprep.subr.mxu0 %v3052
        %3252 = vmatpush1.msra.mxu0 %v3051
        %3253 = vmatprep.subr.mxu0 %v3054
        %3254 = vmatpush1.msra.mxu0 %v3053
        %3255 = vmatprep.subr.mxu0 %v3056
        %3256 = vmatpush1.msra.mxu0 %v3055
        %3257 = vmatprep.subr.mxu0 %v3058
        %3258 = vmatpush1.msra.mxu0 %v3057
        %3259 = vmatprep.mubr.f32.mxu0 %v2561
        %3260 = vmatmul.mubr.f32.gmra.mrb[0].mxu0 %v2560
        %v3261 = vpop.f32.mrb[0].mxu0
        %v3262 = vadd.f32 %v3191, %v3261
        %v3263 = vpop.f32.mrb[0].mxu0
        %v3264 = vadd.f32 %v3193, %v3263
        %3265 = vdwg.mxu0
        %s3266 = scalar_lea.vmem [#allocation8], 2560
        %v3267 = vld [vmem:[%s3266] sm:$0xff]
        %v3268 = vld [vmem:[%s3266 + $0x8] sm:$0xff]
        %v3269 = vld [vmem:[%s3266 + $0x10] sm:$0xff]
        %v3270 = vld [vmem:[%s3266 + $0x18] sm:$0xff]
        %v3271 = vld [vmem:[%s3266 + $0x20] sm:$0xff]
        %v3272 = vld [vmem:[%s3266 + $0x28] sm:$0xff]
        %v3273 = vld [vmem:[%s3266 + $0x30] sm:$0xff]
        %v3274 = vld [vmem:[%s3266 + $0x38] sm:$0xff]
        %v3275 = vld [vmem:[%s3266 + $0x40] sm:$0xff]
        %v3276 = vld [vmem:[%s3266 + $0x48] sm:$0xff]
        %v3277 = vld [vmem:[%s3266 + $0x50] sm:$0xff]
        %v3278 = vld [vmem:[%s3266 + $0x58] sm:$0xff]
        %v3279 = vld [vmem:[%s3266 + $0x60] sm:$0xff]
        %v3280 = vld [vmem:[%s3266 + $0x68] sm:$0xff]
        %v3281 = vld [vmem:[%s3266 + $0x70] sm:$0xff]
        %v3282 = vld [vmem:[%s3266 + $0x78] sm:$0xff]
        %v3283 = vld [vmem:[%s3266 + $0x80] sm:$0xff]
        %v3284 = vld [vmem:[%s3266 + $0x88] sm:$0xff]
        %v3285 = vld [vmem:[%s3266 + $0x90] sm:$0xff]
        %v3286 = vld [vmem:[%s3266 + $0x98] sm:$0xff]
        %v3287 = vld [vmem:[%s3266 + $0xa0] sm:$0xff]
        %v3288 = vld [vmem:[%s3266 + $0xa8] sm:$0xff]
        %v3289 = vld [vmem:[%s3266 + $0xb0] sm:$0xff]
        %v3290 = vld [vmem:[%s3266 + $0xb8] sm:$0xff]
        %v3291 = vld [vmem:[%s3266 + $0xc0] sm:$0xff]
        %v3292 = vld [vmem:[%s3266 + $0xc8] sm:$0xff]
        %v3293 = vld [vmem:[%s3266 + $0xd0] sm:$0xff]
        %v3294 = vld [vmem:[%s3266 + $0xd8] sm:$0xff]
        %v3295 = vld [vmem:[%s3266 + $0xe0] sm:$0xff]
        %v3296 = vld [vmem:[%s3266 + $0xe8] sm:$0xff]
        %v3297 = vld [vmem:[%s3266 + $0xf0] sm:$0xff]
        %v3298 = vld [vmem:[%s3266 + $0xf8] sm:$0xff]
        %v3299 = vld [vmem:[%s3266 + $0x100] sm:$0xff]
        %v3300 = vld [vmem:[%s3266 + $0x108] sm:$0xff]
        %v3301 = vld [vmem:[%s3266 + $0x110] sm:$0xff]
        %v3302 = vld [vmem:[%s3266 + $0x118] sm:$0xff]
        %v3303 = vld [vmem:[%s3266 + $0x120] sm:$0xff]
        %v3304 = vld [vmem:[%s3266 + $0x128] sm:$0xff]
        %v3305 = vld [vmem:[%s3266 + $0x130] sm:$0xff]
        %v3306 = vld [vmem:[%s3266 + $0x138] sm:$0xff]
        %v3307 = vld [vmem:[%s3266 + $0x140] sm:$0xff]
        %v3308 = vld [vmem:[%s3266 + $0x148] sm:$0xff]
        %v3309 = vld [vmem:[%s3266 + $0x150] sm:$0xff]
        %v3310 = vld [vmem:[%s3266 + $0x158] sm:$0xff]
        %v3311 = vld [vmem:[%s3266 + $0x160] sm:$0xff]
        %v3312 = vld [vmem:[%s3266 + $0x168] sm:$0xff]
        %v3313 = vld [vmem:[%s3266 + $0x170] sm:$0xff]
        %v3314 = vld [vmem:[%s3266 + $0x178] sm:$0xff]
        %v3315 = vld [vmem:[%s3266 + $0x180] sm:$0xff]
        %v3316 = vld [vmem:[%s3266 + $0x188] sm:$0xff]
        %v3317 = vld [vmem:[%s3266 + $0x190] sm:$0xff]
        %v3318 = vld [vmem:[%s3266 + $0x198] sm:$0xff]
        %v3319 = vld [vmem:[%s3266 + $0x1a0] sm:$0xff]
        %v3320 = vld [vmem:[%s3266 + $0x1a8] sm:$0xff]
        %v3321 = vld [vmem:[%s3266 + $0x1b0] sm:$0xff]
        %v3322 = vld [vmem:[%s3266 + $0x1b8] sm:$0xff]
        %v3323 = vld [vmem:[%s3266 + $0x1c0] sm:$0xff]
        %v3324 = vld [vmem:[%s3266 + $0x1c8] sm:$0xff]
        %v3325 = vld [vmem:[%s3266 + $0x1d0] sm:$0xff]
        %v3326 = vld [vmem:[%s3266 + $0x1d8] sm:$0xff]
        %v3327 = vld [vmem:[%s3266 + $0x1e0] sm:$0xff]
        %v3328 = vld [vmem:[%s3266 + $0x1e8] sm:$0xff]
        %v3329 = vld [vmem:[%s3266 + $0x1f0] sm:$0xff]
        %v3330 = vld [vmem:[%s3266 + $0x1f8] sm:$0xff]
        %3331 = vmatprep.subr.mxu0 %v3268
        %3332 = vmatpush1.msra.mxu0 %v3267
        %3333 = vmatprep.subr.mxu0 %v3270
        %3334 = vmatpush1.msra.mxu0 %v3269
        %3335 = vmatprep.subr.mxu0 %v3272
        %3336 = vmatpush1.msra.mxu0 %v3271
        %3337 = vmatprep.subr.mxu0 %v3274
        %3338 = vmatpush1.msra.mxu0 %v3273
        %3339 = vmatprep.subr.mxu0 %v3276
        %3340 = vmatpush1.msra.mxu0 %v3275
        %3341 = vmatprep.subr.mxu0 %v3278
        %3342 = vmatpush1.msra.mxu0 %v3277
        %3343 = vmatprep.subr.mxu0 %v3280
        %3344 = vmatpush1.msra.mxu0 %v3279
        %3345 = vmatprep.subr.mxu0 %v3282
        %3346 = vmatpush1.msra.mxu0 %v3281
        %3347 = vmatprep.subr.mxu0 %v3284
        %3348 = vmatpush1.msra.mxu0 %v3283
        %3349 = vmatprep.subr.mxu0 %v3286
        %3350 = vmatpush1.msra.mxu0 %v3285
        %3351 = vmatprep.subr.mxu0 %v3288
        %3352 = vmatpush1.msra.mxu0 %v3287
        %3353 = vmatprep.subr.mxu0 %v3290
        %3354 = vmatpush1.msra.mxu0 %v3289
        %3355 = vmatprep.subr.mxu0 %v3292
        %3356 = vmatpush1.msra.mxu0 %v3291
        %3357 = vmatprep.subr.mxu0 %v3294
        %3358 = vmatpush1.msra.mxu0 %v3293
        %3359 = vmatprep.subr.mxu0 %v3296
        %3360 = vmatpush1.msra.mxu0 %v3295
        %3361 = vmatprep.subr.mxu0 %v3298
        %3362 = vmatpush1.msra.mxu0 %v3297
        %3363 = vmatprep.subr.mxu0 %v3300
        %3364 = vmatpush1.msra.mxu0 %v3299
        %3365 = vmatprep.subr.mxu0 %v3302
        %3366 = vmatpush1.msra.mxu0 %v3301
        %3367 = vmatprep.subr.mxu0 %v3304
        %3368 = vmatpush1.msra.mxu0 %v3303
        %3369 = vmatprep.subr.mxu0 %v3306
        %3370 = vmatpush1.msra.mxu0 %v3305
        %3371 = vmatprep.subr.mxu0 %v3308
        %3372 = vmatpush1.msra.mxu0 %v3307
        %3373 = vmatprep.subr.mxu0 %v3310
        %3374 = vmatpush1.msra.mxu0 %v3309
        %3375 = vmatprep.subr.mxu0 %v3312
        %3376 = vmatpush1.msra.mxu0 %v3311
        %3377 = vmatprep.subr.mxu0 %v3314
        %3378 = vmatpush1.msra.mxu0 %v3313
        %3379 = vmatprep.subr.mxu0 %v3316
        %3380 = vmatpush1.msra.mxu0 %v3315
        %3381 = vmatprep.subr.mxu0 %v3318
        %3382 = vmatpush1.msra.mxu0 %v3317
        %3383 = vmatprep.subr.mxu0 %v3320
        %3384 = vmatpush1.msra.mxu0 %v3319
        %3385 = vmatprep.subr.mxu0 %v3322
        %3386 = vmatpush1.msra.mxu0 %v3321
        %3387 = vmatprep.subr.mxu0 %v3324
        %3388 = vmatpush1.msra.mxu0 %v3323
        %3389 = vmatprep.subr.mxu0 %v3326
        %3390 = vmatpush1.msra.mxu0 %v3325
        %3391 = vmatprep.subr.mxu0 %v3328
        %3392 = vmatpush1.msra.mxu0 %v3327
        %3393 = vmatprep.subr.mxu0 %v3330
        %3394 = vmatpush1.msra.mxu0 %v3329
        %3395 = vmatprep.mubr.f32.mxu0 %v2918
        %3396 = vmatmul.mubr.f32.gmra.mrb[0].mxu0 %v2915
        %v3397 = vpop.f32.mrb[0].mxu0
        %v3398 = vadd.f32 0.0, %v3397
        %v3399 = vpop.f32.mrb[0].mxu0
        %v3400 = vadd.f32 0.0, %v3399
        %3401 = vdwg.mxu0
        %v3402 = vadd.f32 %v3262, %v3398
        %v3403 = vadd.f32 %v3264, %v3400
        %v3404 = vmax.f32 %v2992, %v3402
        %v3405 = vmax.f32 %v2993, %v3403
        %3406 = vmatprep.subr.mxu0 %v2638
        %3407 = vmatpush1.msra.mxu0 %v2637
        %3408 = vmatprep.subr.mxu0 %v2640
        %3409 = vmatpush1.msra.mxu0 %v2639
        %3410 = vmatprep.subr.mxu0 %v2642
        %3411 = vmatpush1.msra.mxu0 %v2641
        %3412 = vmatprep.subr.mxu0 %v2644
        %3413 = vmatpush1.msra.mxu0 %v2643
        %3414 = vmatprep.subr.mxu0 %v2646
        %3415 = vmatpush1.msra.mxu0 %v2645
        %3416 = vmatprep.subr.mxu0 %v2648
        %3417 = vmatpush1.msra.mxu0 %v2647
        %3418 = vmatprep.subr.mxu0 %v2650
        %3419 = vmatpush1.msra.mxu0 %v2649
        %3420 = vmatprep.subr.mxu0 %v2652
        %3421 = vmatpush1.msra.mxu0 %v2651
        %3422 = vmatprep.subr.mxu0 %v2654
        %3423 = vmatpush1.msra.mxu0 %v2653
        %3424 = vmatprep.subr.mxu0 %v2656
        %3425 = vmatpush1.msra.mxu0 %v2655
        %3426 = vmatprep.subr.mxu0 %v2658
        %3427 = vmatpush1.msra.mxu0 %v2657
        %3428 = vmatprep.subr.mxu0 %v2660
        %3429 = vmatpush1.msra.mxu0 %v2659
        %3430 = vmatprep.subr.mxu0 %v2662
        %3431 = vmatpush1.msra.mxu0 %v2661
        %3432 = vmatprep.subr.mxu0 %v2664
        %3433 = vmatpush1.msra.mxu0 %v2663
        %3434 = vmatprep.subr.mxu0 %v2666
        %3435 = vmatpush1.msra.mxu0 %v2665
        %3436 = vmatprep.subr.mxu0 %v2668
        %3437 = vmatpush1.msra.mxu0 %v2667
        %3438 = vmatprep.subr.mxu0 %v2670
        %3439 = vmatpush1.msra.mxu0 %v2669
        %3440 = vmatprep.subr.mxu0 %v2672
        %3441 = vmatpush1.msra.mxu0 %v2671
        %3442 = vmatprep.subr.mxu0 %v2674
        %3443 = vmatpush1.msra.mxu0 %v2673
        %3444 = vmatprep.subr.mxu0 %v2676
        %3445 = vmatpush1.msra.mxu0 %v2675
        %3446 = vmatprep.subr.mxu0 %v2678
        %3447 = vmatpush1.msra.mxu0 %v2677
        %3448 = vmatprep.subr.mxu0 %v2680
        %3449 = vmatpush1.msra.mxu0 %v2679
        %3450 = vmatprep.subr.mxu0 %v2682
        %3451 = vmatpush1.msra.mxu0 %v2681
        %3452 = vmatprep.subr.mxu0 %v2684
        %3453 = vmatpush1.msra.mxu0 %v2683
        %3454 = vmatprep.subr.mxu0 %v2686
        %3455 = vmatpush1.msra.mxu0 %v2685
        %3456 = vmatprep.subr.mxu0 %v2688
        %3457 = vmatpush1.msra.mxu0 %v2687
        %3458 = vmatprep.subr.mxu0 %v2690
        %3459 = vmatpush1.msra.mxu0 %v2689
        %3460 = vmatprep.subr.mxu0 %v2692
        %3461 = vmatpush1.msra.mxu0 %v2691
        %3462 = vmatprep.subr.mxu0 %v2694
        %3463 = vmatpush1.msra.mxu0 %v2693
        %3464 = vmatprep.subr.mxu0 %v2696
        %3465 = vmatpush1.msra.mxu0 %v2695
        %3466 = vmatprep.subr.mxu0 %v2698
        %3467 = vmatpush1.msra.mxu0 %v2697
        %3468 = vmatprep.subr.mxu0 %v2700
        %3469 = vmatpush1.msra.mxu0 %v2699
        %3470 = vmatprep.mubr.f32.mxu0 %v2918
        %3471 = vmatmul.mubr.f32.gmra.mrb[0].mxu0 %v2915
        %v3472 = vpop.f32.mrb[0].mxu0
        %v3473 = vadd.f32 0.0, %v3472
        %v3474 = vpop.f32.mrb[0].mxu0
        %v3475 = vadd.f32 0.0, %v3474
        %3476 = vdwg.mxu0
        %3477 = vmatprep.subr.mxu0 %v2573
        %3478 = vmatpush1.msra.mxu0 %v2572
        %3479 = vmatprep.subr.mxu0 %v2575
        %3480 = vmatpush1.msra.mxu0 %v2574
        %3481 = vmatprep.subr.mxu0 %v2577
        %3482 = vmatpush1.msra.mxu0 %v2576
        %3483 = vmatprep.subr.mxu0 %v2579
        %3484 = vmatpush1.msra.mxu0 %v2578
        %3485 = vmatprep.subr.mxu0 %v2581
        %3486 = vmatpush1.msra.mxu0 %v2580
        %3487 = vmatprep.subr.mxu0 %v2583
        %3488 = vmatpush1.msra.mxu0 %v2582
        %3489 = vmatprep.subr.mxu0 %v2585
        %3490 = vmatpush1.msra.mxu0 %v2584
        %3491 = vmatprep.subr.mxu0 %v2587
        %3492 = vmatpush1.msra.mxu0 %v2586
        %3493 = vmatprep.subr.mxu0 %v2589
        %3494 = vmatpush1.msra.mxu0 %v2588
        %3495 = vmatprep.subr.mxu0 %v2591
        %3496 = vmatpush1.msra.mxu0 %v2590
        %3497 = vmatprep.subr.mxu0 %v2593
        %3498 = vmatpush1.msra.mxu0 %v2592
        %3499 = vmatprep.subr.mxu0 %v2595
        %3500 = vmatpush1.msra.mxu0 %v2594
        %3501 = vmatprep.subr.mxu0 %v2597
        %3502 = vmatpush1.msra.mxu0 %v2596
        %3503 = vmatprep.subr.mxu0 %v2599
        %3504 = vmatpush1.msra.mxu0 %v2598
        %3505 = vmatprep.subr.mxu0 %v2601
        %3506 = vmatpush1.msra.mxu0 %v2600
        %3507 = vmatprep.subr.mxu0 %v2603
        %3508 = vmatpush1.msra.mxu0 %v2602
        %3509 = vmatprep.subr.mxu0 %v2605
        %3510 = vmatpush1.msra.mxu0 %v2604
        %3511 = vmatprep.subr.mxu0 %v2607
        %3512 = vmatpush1.msra.mxu0 %v2606
        %3513 = vmatprep.subr.mxu0 %v2609
        %3514 = vmatpush1.msra.mxu0 %v2608
        %3515 = vmatprep.subr.mxu0 %v2611
        %3516 = vmatpush1.msra.mxu0 %v2610
        %3517 = vmatprep.subr.mxu0 %v2613
        %3518 = vmatpush1.msra.mxu0 %v2612
        %3519 = vmatprep.subr.mxu0 %v2615
        %3520 = vmatpush1.msra.mxu0 %v2614
        %3521 = vmatprep.subr.mxu0 %v2617
        %3522 = vmatpush1.msra.mxu0 %v2616
        %3523 = vmatprep.subr.mxu0 %v2619
        %3524 = vmatpush1.msra.mxu0 %v2618
        %3525 = vmatprep.subr.mxu0 %v2621
        %3526 = vmatpush1.msra.mxu0 %v2620
        %3527 = vmatprep.subr.mxu0 %v2623
        %3528 = vmatpush1.msra.mxu0 %v2622
        %3529 = vmatprep.subr.mxu0 %v2625
        %3530 = vmatpush1.msra.mxu0 %v2624
        %3531 = vmatprep.subr.mxu0 %v2627
        %3532 = vmatpush1.msra.mxu0 %v2626
        %3533 = vmatprep.subr.mxu0 %v2629
        %3534 = vmatpush1.msra.mxu0 %v2628
        %3535 = vmatprep.subr.mxu0 %v2631
        %3536 = vmatpush1.msra.mxu0 %v2630
        %3537 = vmatprep.subr.mxu0 %v2633
        %3538 = vmatpush1.msra.mxu0 %v2632
        %3539 = vmatprep.subr.mxu0 %v2635
        %3540 = vmatpush1.msra.mxu0 %v2634
        %3541 = vmatprep.mubr.f32.mxu0 %v2563
        %3542 = vmatmul.mubr.f32.gmra.mrb[0].mxu0 %v2562
        %v3543 = vpop.f32.mrb[0].mxu0
        %v3544 = vadd.f32 %v3473, %v3543
        %v3545 = vpop.f32.mrb[0].mxu0
        %v3546 = vadd.f32 %v3475, %v3545
        %3547 = vdwg.mxu0
        %v3552 = vrot.slane %v2568, 1
        %v3553 = vrot.slane %v2570, 1
        %v3554 = vsel %vm2912, %v3552, %v3553
        %v3555 = vrot.slane %v2569, 1
        %v3556 = vrot.slane %v2571, 1
        %v3557 = vsel %vm2912, %v3555, %v3556
        %3560 = vmatprep.subr.mxu0 %v2845
        %3561 = vmatpush1.msra.mxu0 %v2844
        %3562 = vmatprep.subr.mxu0 %v2847
        %3563 = vmatpush1.msra.mxu0 %v2846
        %3564 = vmatprep.subr.mxu0 %v2849
        %3565 = vmatpush1.msra.mxu0 %v2848
        %3566 = vmatprep.subr.mxu0 %v2851
        %3567 = vmatpush1.msra.mxu0 %v2850
        %3568 = vmatprep.subr.mxu0 %v2853
        %3569 = vmatpush1.msra.mxu0 %v2852
        %3570 = vmatprep.subr.mxu0 %v2855
        %3571 = vmatpush1.msra.mxu0 %v2854
        %3572 = vmatprep.subr.mxu0 %v2857
        %3573 = vmatpush1.msra.mxu0 %v2856
        %3574 = vmatprep.subr.mxu0 %v2859
        %3575 = vmatpush1.msra.mxu0 %v2858
        %3576 = vmatprep.subr.mxu0 %v2861
        %3577 = vmatpush1.msra.mxu0 %v2860
        %3578 = vmatprep.subr.mxu0 %v2863
        %3579 = vmatpush1.msra.mxu0 %v2862
        %3580 = vmatprep.subr.mxu0 %v2865
        %3581 = vmatpush1.msra.mxu0 %v2864
        %3582 = vmatprep.subr.mxu0 %v2867
        %3583 = vmatpush1.msra.mxu0 %v2866
        %3584 = vmatprep.subr.mxu0 %v2869
        %3585 = vmatpush1.msra.mxu0 %v2868
        %3586 = vmatprep.subr.mxu0 %v2871
        %3587 = vmatpush1.msra.mxu0 %v2870
        %3588 = vmatprep.subr.mxu0 %v2873
        %3589 = vmatpush1.msra.mxu0 %v2872
        %3590 = vmatprep.subr.mxu0 %v2875
        %3591 = vmatpush1.msra.mxu0 %v2874
        %3592 = vmatprep.subr.mxu0 %v2877
        %3593 = vmatpush1.msra.mxu0 %v2876
        %3594 = vmatprep.subr.mxu0 %v2879
        %3595 = vmatpush1.msra.mxu0 %v2878
        %3596 = vmatprep.subr.mxu0 %v2881
        %3597 = vmatpush1.msra.mxu0 %v2880
        %3598 = vmatprep.subr.mxu0 %v2883
        %3599 = vmatpush1.msra.mxu0 %v2882
        %3600 = vmatprep.subr.mxu0 %v2885
        %3601 = vmatpush1.msra.mxu0 %v2884
        %3602 = vmatprep.subr.mxu0 %v2887
        %3603 = vmatpush1.msra.mxu0 %v2886
        %3604 = vmatprep.subr.mxu0 %v2889
        %3605 = vmatpush1.msra.mxu0 %v2888
        %3606 = vmatprep.subr.mxu0 %v2891
        %3607 = vmatpush1.msra.mxu0 %v2890
        %3608 = vmatprep.subr.mxu0 %v2893
        %3609 = vmatpush1.msra.mxu0 %v2892
        %3610 = vmatprep.subr.mxu0 %v2895
        %3611 = vmatpush1.msra.mxu0 %v2894
        %3612 = vmatprep.subr.mxu0 %v2897
        %3613 = vmatpush1.msra.mxu0 %v2896
        %3614 = vmatprep.subr.mxu0 %v2899
        %3615 = vmatpush1.msra.mxu0 %v2898
        %3616 = vmatprep.subr.mxu0 %v2901
        %3617 = vmatpush1.msra.mxu0 %v2900
        %3618 = vmatprep.subr.mxu0 %v2903
        %3619 = vmatpush1.msra.mxu0 %v2902
        %3620 = vmatprep.subr.mxu0 %v2905
        %3621 = vmatpush1.msra.mxu0 %v2904
        %3622 = vmatprep.subr.mxu0 %v2907
        %3623 = vmatpush1.msra.mxu0 %v2906
        %3624 = vmatprep.mubr.f32.mxu0 %v3557
        %3625 = vmatmul.mubr.f32.gmra.mrb[0].mxu0 %v3554
        %v3626 = vpop.f32.mrb[0].mxu0
        %v3627 = vadd.f32 0.0, %v3626
        %v3628 = vpop.f32.mrb[0].mxu0
        %v3629 = vadd.f32 0.0, %v3628
        %3630 = vdwg.mxu0
        %v3631 = vadd.f32 %v3544, %v3627
        %v3632 = vadd.f32 %v3546, %v3629
        %v3633 = vmax.f32 %v3404, %v3631
        %v3634 = vmax.f32 %v3405, %v3632
        %3635 = vmatprep.subr.mxu0 %v3061
        %3636 = vmatpush1.msra.mxu0 %v3060
        %3637 = vmatprep.subr.mxu0 %v3063
        %3638 = vmatpush1.msra.mxu0 %v3062
        %3639 = vmatprep.subr.mxu0 %v3065
        %3640 = vmatpush1.msra.mxu0 %v3064
        %3641 = vmatprep.subr.mxu0 %v3067
        %3642 = vmatpush1.msra.mxu0 %v3066
        %3643 = vmatprep.subr.mxu0 %v3069
        %3644 = vmatpush1.msra.mxu0 %v3068
        %3645 = vmatprep.subr.mxu0 %v3071
        %3646 = vmatpush1.msra.mxu0 %v3070
        %3647 = vmatprep.subr.mxu0 %v3073
        %3648 = vmatpush1.msra.mxu0 %v3072
        %3649 = vmatprep.subr.mxu0 %v3075
        %3650 = vmatpush1.msra.mxu0 %v3074
        %3651 = vmatprep.subr.mxu0 %v3077
        %3652 = vmatpush1.msra.mxu0 %v3076
        %3653 = vmatprep.subr.mxu0 %v3079
        %3654 = vmatpush1.msra.mxu0 %v3078
        %3655 = vmatprep.subr.mxu0 %v3081
        %3656 = vmatpush1.msra.mxu0 %v3080
        %3657 = vmatprep.subr.mxu0 %v3083
        %3658 = vmatpush1.msra.mxu0 %v3082
        %3659 = vmatprep.subr.mxu0 %v3085
        %3660 = vmatpush1.msra.mxu0 %v3084
        %3661 = vmatprep.subr.mxu0 %v3087
        %3662 = vmatpush1.msra.mxu0 %v3086
        %3663 = vmatprep.subr.mxu0 %v3089
        %3664 = vmatpush1.msra.mxu0 %v3088
        %3665 = vmatprep.subr.mxu0 %v3091
        %3666 = vmatpush1.msra.mxu0 %v3090
        %3667 = vmatprep.subr.mxu0 %v3093
        %3668 = vmatpush1.msra.mxu0 %v3092
        %3669 = vmatprep.subr.mxu0 %v3095
        %3670 = vmatpush1.msra.mxu0 %v3094
        %3671 = vmatprep.subr.mxu0 %v3097
        %3672 = vmatpush1.msra.mxu0 %v3096
        %3673 = vmatprep.subr.mxu0 %v3099
        %3674 = vmatpush1.msra.mxu0 %v3098
        %3675 = vmatprep.subr.mxu0 %v3101
        %3676 = vmatpush1.msra.mxu0 %v3100
        %3677 = vmatprep.subr.mxu0 %v3103
        %3678 = vmatpush1.msra.mxu0 %v3102
        %3679 = vmatprep.subr.mxu0 %v3105
        %3680 = vmatpush1.msra.mxu0 %v3104
        %3681 = vmatprep.subr.mxu0 %v3107
        %3682 = vmatpush1.msra.mxu0 %v3106
        %3683 = vmatprep.subr.mxu0 %v3109
        %3684 = vmatpush1.msra.mxu0 %v3108
        %3685 = vmatprep.subr.mxu0 %v3111
        %3686 = vmatpush1.msra.mxu0 %v3110
        %3687 = vmatprep.subr.mxu0 %v3113
        %3688 = vmatpush1.msra.mxu0 %v3112
        %3689 = vmatprep.subr.mxu0 %v3115
        %3690 = vmatpush1.msra.mxu0 %v3114
        %3691 = vmatprep.subr.mxu0 %v3117
        %3692 = vmatpush1.msra.mxu0 %v3116
        %3693 = vmatprep.subr.mxu0 %v3119
        %3694 = vmatpush1.msra.mxu0 %v3118
        %3695 = vmatprep.subr.mxu0 %v3121
        %3696 = vmatpush1.msra.mxu0 %v3120
        %3697 = vmatprep.subr.mxu0 %v3123
        %3698 = vmatpush1.msra.mxu0 %v3122
        %3699 = vmatprep.mubr.f32.mxu0 %v2918
        %3700 = vmatmul.mubr.f32.gmra.mrb[0].mxu0 %v2915
        %v3701 = vpop.f32.mrb[0].mxu0
        %v3702 = vadd.f32 0.0, %v3701
        %v3703 = vpop.f32.mrb[0].mxu0
        %v3704 = vadd.f32 0.0, %v3703
        %3705 = vdwg.mxu0
        %3706 = vmatprep.subr.mxu0 %v2996
        %3707 = vmatpush1.msra.mxu0 %v2995
        %3708 = vmatprep.subr.mxu0 %v2998
        %3709 = vmatpush1.msra.mxu0 %v2997
        %3710 = vmatprep.subr.mxu0 %v3000
        %3711 = vmatpush1.msra.mxu0 %v2999
        %3712 = vmatprep.subr.mxu0 %v3002
        %3713 = vmatpush1.msra.mxu0 %v3001
        %3714 = vmatprep.subr.mxu0 %v3004
        %3715 = vmatpush1.msra.mxu0 %v3003
        %3716 = vmatprep.subr.mxu0 %v3006
        %3717 = vmatpush1.msra.mxu0 %v3005
        %3718 = vmatprep.subr.mxu0 %v3008
        %3719 = vmatpush1.msra.mxu0 %v3007
        %3720 = vmatprep.subr.mxu0 %v3010
        %3721 = vmatpush1.msra.mxu0 %v3009
        %3722 = vmatprep.subr.mxu0 %v3012
        %3723 = vmatpush1.msra.mxu0 %v3011
        %3724 = vmatprep.subr.mxu0 %v3014
        %3725 = vmatpush1.msra.mxu0 %v3013
        %3726 = vmatprep.subr.mxu0 %v3016
        %3727 = vmatpush1.msra.mxu0 %v3015
        %3728 = vmatprep.subr.mxu0 %v3018
        %3729 = vmatpush1.msra.mxu0 %v3017
        %3730 = vmatprep.subr.mxu0 %v3020
        %3731 = vmatpush1.msra.mxu0 %v3019
        %3732 = vmatprep.subr.mxu0 %v3022
        %3733 = vmatpush1.msra.mxu0 %v3021
        %3734 = vmatprep.subr.mxu0 %v3024
        %3735 = vmatpush1.msra.mxu0 %v3023
        %3736 = vmatprep.subr.mxu0 %v3026
        %3737 = vmatpush1.msra.mxu0 %v3025
        %3738 = vmatprep.subr.mxu0 %v3028
        %3739 = vmatpush1.msra.mxu0 %v3027
        %3740 = vmatprep.subr.mxu0 %v3030
        %3741 = vmatpush1.msra.mxu0 %v3029
        %3742 = vmatprep.subr.mxu0 %v3032
        %3743 = vmatpush1.msra.mxu0 %v3031
        %3744 = vmatprep.subr.mxu0 %v3034
        %3745 = vmatpush1.msra.mxu0 %v3033
        %3746 = vmatprep.subr.mxu0 %v3036
        %3747 = vmatpush1.msra.mxu0 %v3035
        %3748 = vmatprep.subr.mxu0 %v3038
        %3749 = vmatpush1.msra.mxu0 %v3037
        %3750 = vmatprep.subr.mxu0 %v3040
        %3751 = vmatpush1.msra.mxu0 %v3039
        %3752 = vmatprep.subr.mxu0 %v3042
        %3753 = vmatpush1.msra.mxu0 %v3041
        %3754 = vmatprep.subr.mxu0 %v3044
        %3755 = vmatpush1.msra.mxu0 %v3043
        %3756 = vmatprep.subr.mxu0 %v3046
        %3757 = vmatpush1.msra.mxu0 %v3045
        %3758 = vmatprep.subr.mxu0 %v3048
        %3759 = vmatpush1.msra.mxu0 %v3047
        %3760 = vmatprep.subr.mxu0 %v3050
        %3761 = vmatpush1.msra.mxu0 %v3049
        %3762 = vmatprep.subr.mxu0 %v3052
        %3763 = vmatpush1.msra.mxu0 %v3051
        %3764 = vmatprep.subr.mxu0 %v3054
        %3765 = vmatpush1.msra.mxu0 %v3053
        %3766 = vmatprep.subr.mxu0 %v3056
        %3767 = vmatpush1.msra.mxu0 %v3055
        %3768 = vmatprep.subr.mxu0 %v3058
        %3769 = vmatpush1.msra.mxu0 %v3057
        %3770 = vmatprep.mubr.f32.mxu0 %v2563
        %3771 = vmatmul.mubr.f32.gmra.mrb[0].mxu0 %v2562
        %v3772 = vpop.f32.mrb[0].mxu0
        %v3773 = vadd.f32 %v3702, %v3772
        %v3774 = vpop.f32.mrb[0].mxu0
        %v3775 = vadd.f32 %v3704, %v3774
        %3776 = vdwg.mxu0
        %3777 = vmatprep.subr.mxu0 %v3268
        %3778 = vmatpush1.msra.mxu0 %v3267
        %3779 = vmatprep.subr.mxu0 %v3270
        %3780 = vmatpush1.msra.mxu0 %v3269
        %3781 = vmatprep.subr.mxu0 %v3272
        %3782 = vmatpush1.msra.mxu0 %v3271
        %3783 = vmatprep.subr.mxu0 %v3274
        %3784 = vmatpush1.msra.mxu0 %v3273
        %3785 = vmatprep.subr.mxu0 %v3276
        %3786 = vmatpush1.msra.mxu0 %v3275
        %3787 = vmatprep.subr.mxu0 %v3278
        %3788 = vmatpush1.msra.mxu0 %v3277
        %3789 = vmatprep.subr.mxu0 %v3280
        %3790 = vmatpush1.msra.mxu0 %v3279
        %3791 = vmatprep.subr.mxu0 %v3282
        %3792 = vmatpush1.msra.mxu0 %v3281
        %3793 = vmatprep.subr.mxu0 %v3284
        %3794 = vmatpush1.msra.mxu0 %v3283
        %3795 = vmatprep.subr.mxu0 %v3286
        %3796 = vmatpush1.msra.mxu0 %v3285
        %3797 = vmatprep.subr.mxu0 %v3288
        %3798 = vmatpush1.msra.mxu0 %v3287
        %3799 = vmatprep.subr.mxu0 %v3290
        %3800 = vmatpush1.msra.mxu0 %v3289
        %3801 = vmatprep.subr.mxu0 %v3292
        %3802 = vmatpush1.msra.mxu0 %v3291
        %3803 = vmatprep.subr.mxu0 %v3294
        %3804 = vmatpush1.msra.mxu0 %v3293
        %3805 = vmatprep.subr.mxu0 %v3296
        %3806 = vmatpush1.msra.mxu0 %v3295
        %3807 = vmatprep.subr.mxu0 %v3298
        %3808 = vmatpush1.msra.mxu0 %v3297
        %3809 = vmatprep.subr.mxu0 %v3300
        %3810 = vmatpush1.msra.mxu0 %v3299
        %3811 = vmatprep.subr.mxu0 %v3302
        %3812 = vmatpush1.msra.mxu0 %v3301
        %3813 = vmatprep.subr.mxu0 %v3304
        %3814 = vmatpush1.msra.mxu0 %v3303
        %3815 = vmatprep.subr.mxu0 %v3306
        %3816 = vmatpush1.msra.mxu0 %v3305
        %3817 = vmatprep.subr.mxu0 %v3308
        %3818 = vmatpush1.msra.mxu0 %v3307
        %3819 = vmatprep.subr.mxu0 %v3310
        %3820 = vmatpush1.msra.mxu0 %v3309
        %3821 = vmatprep.subr.mxu0 %v3312
        %3822 = vmatpush1.msra.mxu0 %v3311
        %3823 = vmatprep.subr.mxu0 %v3314
        %3824 = vmatpush1.msra.mxu0 %v3313
        %3825 = vmatprep.subr.mxu0 %v3316
        %3826 = vmatpush1.msra.mxu0 %v3315
        %3827 = vmatprep.subr.mxu0 %v3318
        %3828 = vmatpush1.msra.mxu0 %v3317
        %3829 = vmatprep.subr.mxu0 %v3320
        %3830 = vmatpush1.msra.mxu0 %v3319
        %3831 = vmatprep.subr.mxu0 %v3322
        %3832 = vmatpush1.msra.mxu0 %v3321
        %3833 = vmatprep.subr.mxu0 %v3324
        %3834 = vmatpush1.msra.mxu0 %v3323
        %3835 = vmatprep.subr.mxu0 %v3326
        %3836 = vmatpush1.msra.mxu0 %v3325
        %3837 = vmatprep.subr.mxu0 %v3328
        %3838 = vmatpush1.msra.mxu0 %v3327
        %3839 = vmatprep.subr.mxu0 %v3330
        %3840 = vmatpush1.msra.mxu0 %v3329
        %3841 = vmatprep.mubr.f32.mxu0 %v3557
        %3842 = vmatmul.mubr.f32.gmra.mrb[0].mxu0 %v3554
        %v3843 = vpop.f32.mrb[0].mxu0
        %v3844 = vadd.f32 0.0, %v3843
        %v3845 = vpop.f32.mrb[0].mxu0
        %v3846 = vadd.f32 0.0, %v3845
        %3847 = vdwg.mxu0
        %v3848 = vadd.f32 %v3773, %v3844
        %v3849 = vadd.f32 %v3775, %v3846
        %v3850 = vmax.f32 %v3633, %v3848
        %v3851 = vmax.f32 %v3634, %v3849
        %v3852 = vld [vmem:[#allocation9] sm:$0x3]
        %v3854 = vlaneseq
        %v3855 = vshrl.u32 %v3854, 7
        %v3856 = vsub.s32 0, %v3855
        %v3857 = vrot.slane %v3852, %v3856
        %v3858 = vlaneseq
        %v3859 = vshrl.u32 %v3858, 7
        %v3860 = vsub.s32 1, %v3859
        %v3861 = vrot.slane %v3852, %v3860
        %v3864 = vadd.f32 %v3850, %v3857
        %v3865 = vadd.f32 %v3851, %v3861
        %3866 = vst [vmem:[%s279] sm:$0xff] %v3864
        %3867 = vst [vmem:[%s279 + $0x8] sm:$0xff] %v3865
        %p3868 = scmp.lt.s32.totalorder %s19, 1
        %s3869 = scalar_select %p3868, %s19, 1
        %s3870 = smul.addr %s3869, 2
        %s3871 = smul.addr %s3870, 8
        %s3872 = scalar_lea.vmem %s5, %s3871
        // Predicated region
        $region57: #{deep_forward.2} parent=39 // pred_check
          %p3873 = pneg %p147
        $region58: #{deep_forward.2} parent=39 // pred_check_branch
          %3875 = sbr.rel (%p3873) target = $region60
        $region59: #{deep_forward.2} parent=39 // pred_region
          _
        $region60: #{deep_forward.2} parent=39 // pred_fallthru
          _
      $region40: #{deep_forward.2} parent=5 // pred_fallthru
        _
      %p3876 = scmp.le.s32.totalorder 2, %s14
      // Predicated region
      $region61: #{deep_forward.2} parent=5 // pred_check
        %p3877 = pneg %p3876
      $region62: #{deep_forward.2} parent=5 // pred_check_branch
        %3879 = sbr.rel (%p3877) target = $region64
      $region63: #{deep_forward.2} parent=5 // pred_region
        %s3880 = ssub.s32 %s14, 2
        // Predicated region
        $region65: #{deep_forward.2} parent=63 // pred_check
          %p3881 = pneg %p153
        $region66: #{deep_forward.2} parent=63 // pred_check_branch
          %3883 = sbr.rel (%p3881) target = $region68
        $region67: #{deep_forward.2} parent=63 // pred_region
          %p3884 = scmp.lt.s32.totalorder %s20, 1
          %s3885 = scalar_select %p3884, %s20, 1
          %s3886 = smul.addr %s3885, 2
          %s3887 = smul.addr %s3886, 8
          %s3888 = scalar_lea.vmem %s5, %s3887
        $region68: #{deep_forward.2} parent=63 // pred_fallthru
          _
      $region64: #{deep_forward.2} parent=5 // pred_fallthru
        _
    $region6: #{deep_forward.2} parent=1 // loop_footer
      %s18 = sadd.s32 1, %s14
    $region7: #{deep_forward.2} parent=1 // loop_footer_branch
      %13 = sbr.rel target = $region3
    $region8: #{deep_forward.2} parent=1 // loop_exit
      _
    %3889 = vsyncpa [#allocation5], 1
    %s3890 = scalar_lea.sflag [#allocation5], 1
    %3891 = vsyncpa %s3890, 1
    %3892 = vsyncpa [#allocation7], 1
    %3893 = vsyncpa [#allocation10], 1

</llo_original>
